<compile_context>
chip_gen: v6e
topology: v6e:2x2x1
jax: 0.10.0
libtpu: 0.0.40
codegen_flags: <defaults>
</compile_context>

<pallas_src>
import math

import jax
import jax.numpy as jnp
from jax.experimental import pallas as pl
from jax.experimental.pallas import tpu as pltpu

# ---------------------------------------------------------------------------
# Config (small, synthetic — matches what the forward implies for a tiny ViT)
# ---------------------------------------------------------------------------
BATCH = 2
CHANNELS = 4
IMAGE = 16
PATCH = 4
HIDDEN = 32
HEADS = 2
HEAD_DIM = HIDDEN // HEADS
LAYERS = 2
MLP = 64
N_LABELS = 2
LN_EPS = 1e-12  # HF ViT default layer_norm_eps

NUM_PATCHES = (IMAGE // PATCH) ** 2          # 16
SEQ = NUM_PATCHES + 1                        # 17 (patches + CLS)
T_PAD = 32                                   # padded sequence (sublane aligned)
CPP = CHANNELS * PATCH * PATCH               # 64 (im2col patch width)
CLS_ROW = NUM_PATCHES                        # CLS token row in the permuted slab
BT = BATCH * T_PAD                           # stacked (batch-folded) token rows

# packed-slab layout constants
N_OUT_PAD = 128                              # lane-dense classifier output width
QKV_OFF = 0                                  # wqkv   cols [0, 3D)
FC1_OFF = 128                                # fc1_w  cols [128, 128+MLP)   (lane aligned)
WO_OFF = 256                                 # wo     cols [256, 256+D)     (lane aligned)
MATS_W = WO_OFF + HIDDEN                     # 288
VEC_W = 3 * HIDDEN                           # 96 (widest per-layer vector = bqkv)
INV_SQRT2 = 1.0 / math.sqrt(2.0)


# ---------------------------------------------------------------------------
# Fused ViT forward kernel — ONE launch, whole batch, all weights VMEM-resident
# ---------------------------------------------------------------------------
def _vit_kernel(patches_ref, slab_ref, pw_ref, mats_ref, fc2_ref, vecs_ref,
                head_ref, out_ref):
    f32 = jnp.float32

    def ln(v, g, b):
        mu = jnp.mean(v, axis=-1, keepdims=True)
        var = jnp.mean(jnp.square(v - mu), axis=-1, keepdims=True)
        return (v - mu) * jax.lax.rsqrt(var + LN_EPS) * g + b

    def gelu(v):  # exact erf GELU (matches nn.GELU used by HF ViT)
        return 0.5 * v * (1.0 + jax.lax.erf(v * INV_SQRT2))

    # ---- patch embedding for the whole batch + fused (bias+cls+pos) slab ----
    # patches_ref rows are already zero-padded to T_PAD per image, so the CLS /
    # pad rows get exactly slab_ref (cls + pos_cls / zero).
    x = (jnp.dot(patches_ref[...], pw_ref[...], preferred_element_type=f32)
         + slab_ref[...])                                          # (BT, D)

    # key-padding bias, (1, T_PAD): key columns >= SEQ are disabled
    key_idx = jax.lax.broadcasted_iota(jnp.int32, (1, T_PAD), 1)
    attn_bias = jnp.where(key_idx < SEQ, 0.0, -1e30).astype(f32)

    for l in range(LAYERS):
        # per-layer weight views (lane-aligned static slices of packed slabs)
        wqkv = mats_ref[l, :, QKV_OFF:QKV_OFF + 3 * HIDDEN]        # (D, 3D)
        fc1w = mats_ref[l, :, FC1_OFF:FC1_OFF + MLP]               # (D, MLP)
        wo = mats_ref[l, :, WO_OFF:WO_OFF + HIDDEN]                # (D, D)
        fc2w = fc2_ref[l]                                          # (MLP, D)
        vecs = vecs_ref[l]                                         # (8, VEC_W)
        ln1g, ln1b = vecs[0:1, :HIDDEN], vecs[1:2, :HIDDEN]
        bqkv = vecs[2:3, :3 * HIDDEN]
        bo = vecs[3:4, :HIDDEN]
        ln2g, ln2b = vecs[4:5, :HIDDEN], vecs[5:6, :HIDDEN]
        fc1b, fc2b = vecs[6:7, :MLP], vecs[7:8, :HIDDEN]

        # ---- pre-LN self-attention (1/sqrt(head_dim) pre-baked in wq/bq) ----
        h = ln(x, ln1g, ln1b)
        qkv = jnp.dot(h, wqkv, preferred_element_type=f32) + bqkv  # (BT, 3D)

        attn_out = None
        for hh in range(HEADS):
            ctx_rows = []
            for b in range(BATCH):
                r0 = b * T_PAD
                q = qkv[r0:r0 + T_PAD, hh * HEAD_DIM:(hh + 1) * HEAD_DIM]
                k = qkv[r0:r0 + T_PAD,
                        HIDDEN + hh * HEAD_DIM:HIDDEN + (hh + 1) * HEAD_DIM]
                v = qkv[r0:r0 + T_PAD,
                        2 * HIDDEN + hh * HEAD_DIM:2 * HIDDEN + (hh + 1) * HEAD_DIM]
                s = jax.lax.dot_general(q, k, (((1,), (1,)), ((), ())),
                                        preferred_element_type=f32) + attn_bias
                s = s - jnp.max(s, axis=-1, keepdims=True)
                p = jnp.exp(s)
                denom = jnp.sum(p, axis=-1, keepdims=True)
                c = jnp.dot(p, v, preferred_element_type=f32)
                ctx_rows.append(c * pl.reciprocal(denom, approx=True))
            ctx_h = jnp.concatenate(ctx_rows, axis=0)              # (BT, hd) sublane concat
            contrib = jnp.dot(ctx_h, wo[hh * HEAD_DIM:(hh + 1) * HEAD_DIM, :],
                              preferred_element_type=f32)          # (BT, D)
            attn_out = contrib if attn_out is None else attn_out + contrib
        x = x + attn_out + bo

        # ---- pre-LN MLP ----
        h2 = ln(x, ln2g, ln2b)
        h2 = gelu(jnp.dot(h2, fc1w, preferred_element_type=f32) + fc1b)
        x = x + jnp.dot(h2, fc2w, preferred_element_type=f32) + fc2b

    # ---- final LayerNorm on the CLS rows only + lane-dense classifier ----
    head = head_ref[...]                                           # (D+3, 128)
    clfw = head[0:HIDDEN, :]
    flng = head[HIDDEN:HIDDEN + 1, :HIDDEN]
    flnb = head[HIDDEN + 1:HIDDEN + 2, :HIDDEN]
    clfb = head[HIDDEN + 2:HIDDEN + 3, :]
    cls_rows = jnp.concatenate(
        [x[b * T_PAD + CLS_ROW:b * T_PAD + CLS_ROW + 1, :] for b in range(BATCH)],
        axis=0)                                                    # (B, D)
    cls_n = ln(cls_rows, flng, flnb)
    logits = jnp.dot(cls_n, clfw, preferred_element_type=f32) + clfb  # (B, 128)
    out_ref[...] = logits.astype(out_ref.dtype)


# ---------------------------------------------------------------------------
# Parameter initialization (deterministic, synthetic — no checkpoint load)
# ---------------------------------------------------------------------------
def init_params(key):
    # TODO(synk): ViTForImageClassification.from_pretrained loads a checkpoint;
    # no file IO here, so weights are synthetic (same forward math).
    scale = 0.02
    n_keys = 6 + LAYERS * 8
    keys = iter(jax.random.split(key, n_keys))

    def normal(shape):
        return scale * jax.random.normal(next(keys), shape, dtype=jnp.float32)

    params = {
        "patch_w": normal((CPP, HIDDEN)),
        "patch_b": jnp.zeros((HIDDEN,), jnp.float32),
        "cls_token": normal((1, 1, HIDDEN)),
        "pos_embed": normal((1, SEQ, HIDDEN)),
        "final_ln_g": jnp.ones((HIDDEN,), jnp.float32),
        "final_ln_b": jnp.zeros((HIDDEN,), jnp.float32),
        "clf_w": normal((HIDDEN, N_LABELS)),
        "clf_b": jnp.zeros((N_LABELS,), jnp.float32),
        "layers": [],
    }
    for _ in range(LAYERS):
        params["layers"].append({
            "ln1_g": jnp.ones((HIDDEN,), jnp.float32),
            "ln1_b": jnp.zeros((HIDDEN,), jnp.float32),
            "wq": normal((HIDDEN, HIDDEN)), "bq": jnp.zeros((HIDDEN,), jnp.float32),
            "wk": normal((HIDDEN, HIDDEN)), "bk": jnp.zeros((HIDDEN,), jnp.float32),
            "wv": normal((HIDDEN, HIDDEN)), "bv": jnp.zeros((HIDDEN,), jnp.float32),
            "wo": normal((HIDDEN, HIDDEN)), "bo": jnp.zeros((HIDDEN,), jnp.float32),
            "ln2_g": jnp.ones((HIDDEN,), jnp.float32),
            "ln2_b": jnp.zeros((HIDDEN,), jnp.float32),
            "w_fc1": normal((HIDDEN, MLP)), "b_fc1": jnp.zeros((MLP,), jnp.float32),
            "w_fc2": normal((MLP, HIDDEN)), "b_fc2": jnp.zeros((HIDDEN,), jnp.float32),
        })
    return params


# ---------------------------------------------------------------------------
# One-time parameter packing (run OUTSIDE the jitted per-call path)
# ---------------------------------------------------------------------------
def pack_params(params):
    scale = 1.0 / math.sqrt(HEAD_DIM)
    layers = params["layers"]

    mats = jnp.zeros((LAYERS, HIDDEN, MATS_W), jnp.float32)
    fc2 = jnp.zeros((LAYERS, MLP, HIDDEN), jnp.float32)
    vecs = jnp.zeros((LAYERS, 8, VEC_W), jnp.float32)
    for l, lp in enumerate(layers):
        # QKV fused; attention scale pre-baked into wq/bq (not applied in-kernel)
        wqkv = jnp.concatenate([lp["wq"] * scale, lp["wk"], lp["wv"]], axis=1)
        bqkv = jnp.concatenate([lp["bq"] * scale, lp["bk"], lp["bv"]])
        mats = mats.at[l, :, QKV_OFF:QKV_OFF + 3 * HIDDEN].set(wqkv)
        mats = mats.at[l, :, FC1_OFF:FC1_OFF + MLP].set(lp["w_fc1"])
        mats = mats.at[l, :, WO_OFF:WO_OFF + HIDDEN].set(lp["wo"])
        fc2 = fc2.at[l].set(lp["w_fc2"])
        vecs = vecs.at[l, 0, :HIDDEN].set(lp["ln1_g"])
        vecs = vecs.at[l, 1, :HIDDEN].set(lp["ln1_b"])
        vecs = vecs.at[l, 2, :3 * HIDDEN].set(bqkv)
        vecs = vecs.at[l, 3, :HIDDEN].set(lp["bo"])
        vecs = vecs.at[l, 4, :HIDDEN].set(lp["ln2_g"])
        vecs = vecs.at[l, 5, :HIDDEN].set(lp["ln2_b"])
        vecs = vecs.at[l, 6, :MLP].set(lp["b_fc1"])
        vecs = vecs.at[l, 7, :HIDDEN].set(lp["b_fc2"])

    # fused additive slab: rows 0..15 = patch_b + pos_patch, row 16 = cls +
    # pos_cls (NO patch_b!), rows 17..31 = 0; tiled across the folded batch.
    pos = params["pos_embed"][0]                     # (SEQ, D); row 0 = CLS pos
    slab1 = jnp.zeros((T_PAD, HIDDEN), jnp.float32)
    slab1 = slab1.at[:NUM_PATCHES, :].set(params["patch_b"][None, :] + pos[1:])
    slab1 = slab1.at[CLS_ROW, :].set(params["cls_token"].reshape(HIDDEN) + pos[0])
    slab = jnp.tile(slab1, (BATCH, 1))               # (BT, D)

    # classifier head slab, lane-dense (128 output columns)
    head = jnp.zeros((HIDDEN + 3, N_OUT_PAD), jnp.float32)
    head = head.at[:HIDDEN, :N_LABELS].set(params["clf_w"])
    head = head.at[HIDDEN, :HIDDEN].set(params["final_ln_g"])
    head = head.at[HIDDEN + 1, :HIDDEN].set(params["final_ln_b"])
    head = head.at[HIDDEN + 2, :N_LABELS].set(params["clf_b"])

    return (slab, params["patch_w"], mats, fc2, vecs, head)


# ---------------------------------------------------------------------------
# ViT forward (== ViTForImageClassification.forward -> logits)
# ---------------------------------------------------------------------------
def vit_forward(packed, pixel_values):
    B, C, H, W = pixel_values.shape
    assert B == BATCH and C == CHANNELS and H == IMAGE and W == IMAGE
    p = PATCH
    nh, nw = H // p, W // p

    # im2col for the patch-embedding conv (kernel=stride=patch), zero-padded to
    # T_PAD token rows per image and stacked across the folded batch.
    patches = (pixel_values.reshape(B, C, nh, p, nw, p)
               .transpose(0, 2, 4, 1, 3, 5)
               .reshape(B, nh * nw, C * p * p))                    # (B, NP, CPP)
    patches_pad = jnp.zeros((B, T_PAD, CPP), jnp.float32)
    patches_pad = patches_pad.at[:, :NUM_PATCHES, :].set(patches)
    patches_pad = patches_pad.reshape(B * T_PAD, CPP)              # (BT, CPP)

    vmem = pl.BlockSpec(memory_space=pltpu.MemorySpace.VMEM)
    logits_pad = pl.pallas_call(
        _vit_kernel,
        out_shape=jax.ShapeDtypeStruct((B, N_OUT_PAD), jnp.float32),
        in_specs=[vmem] * 7,
        out_specs=vmem,
    )(patches_pad, *packed)
    return logits_pad[:, :N_LABELS]


# ---------------------------------------------------------------------------
if __name__ == "__main__":
    key = jax.random.PRNGKey(0)
    k_params, k_input = jax.random.split(key)
    params = init_params(k_params)
    packed = pack_params(params)          # one-time packing, outside the jitted path
    pixel_values = jax.random.normal(
        k_input, (BATCH, CHANNELS, IMAGE, IMAGE), dtype=jnp.float32)

    fwd = jax.jit(vit_forward)
    logits = jax.block_until_ready(fwd(packed, pixel_values))
    assert logits.shape == (BATCH, N_LABELS)
    assert bool(jnp.all(jnp.isfinite(logits)))
    print("KERNEL_OK")
</pallas_src>

<mosaic_0001>
module attributes {stable_mosaic.version = 11 : i64} {
  func.func @_vit_kernel(%arg0: memref<64x64xf32, #tpu.memory_space<vmem>>, %arg1: memref<64x32xf32, #tpu.memory_space<vmem>>, %arg2: memref<64x32xf32, #tpu.memory_space<vmem>>, %arg3: memref<2x32x288xf32, #tpu.memory_space<vmem>>, %arg4: memref<2x64x32xf32, #tpu.memory_space<vmem>>, %arg5: memref<2x8x96xf32, #tpu.memory_space<vmem>>, %arg6: memref<35x128xf32, #tpu.memory_space<vmem>>, %arg7: memref<2x128xf32, #tpu.memory_space<vmem>>) attributes {dimension_semantics = [], scalar_prefetch = 0 : i64, scratch_operands = 0 : i64, tpu.core_type = #tpu.core_type<tc>} {
    %c0 = arith.constant 0 : index
    %c0_0 = arith.constant 0 : index
    %0 = vector.load %arg0[%c0, %c0_0] : memref<64x64xf32, #tpu.memory_space<vmem>>, vector<64x64xf32>
    %c0_1 = arith.constant 0 : index
    %c0_2 = arith.constant 0 : index
    %1 = vector.load %arg2[%c0_1, %c0_2] : memref<64x32xf32, #tpu.memory_space<vmem>>, vector<64x32xf32>
    %cst = arith.constant dense<0.000000e+00> : vector<64x32xf32>
    %2 = tpu.matmul %0, %1, %cst {dimension_numbers = #tpu.dot_dimension_numbers<[1], [0], [0], [1], [0, 0, 1, 1], [], []>} : vector<64x64xf32>, vector<64x32xf32>, vector<64x32xf32> -> vector<64x32xf32>
    %c0_3 = arith.constant 0 : index
    %c0_4 = arith.constant 0 : index
    %3 = vector.load %arg1[%c0_3, %c0_4] : memref<64x32xf32, #tpu.memory_space<vmem>>, vector<64x32xf32>
    %4 = arith.addf %2, %3 : vector<64x32xf32>
    %5 = tpu.iota {dimensions = array<i32: 1>} : vector<1x32xi32>
    %c17_i32 = arith.constant 17 : i32
    %6 = vector.broadcast %c17_i32 : i32 to vector<1x32xi32>
    %7 = arith.cmpi slt, %5, %6 : vector<1x32xi32>
    %cst_5 = arith.constant 0.000000e+00 : f32
    %cst_6 = arith.constant -1.000000e+30 : f32
    %8 = vector.broadcast %cst_5 : f32 to vector<1x32xf32>
    %9 = vector.broadcast %cst_6 : f32 to vector<1x32xf32>
    %10 = arith.select %7, %8, %9 : vector<1x32xi1>, vector<1x32xf32>
    %c0_7 = arith.constant 0 : index
    %c0_8 = arith.constant 0 : index
    %c0_9 = arith.constant 0 : index
    %11 = vector.load %arg3[%c0_7, %c0_8, %c0_9] : memref<2x32x288xf32, #tpu.memory_space<vmem>>, vector<1x32x96xf32>
    %12 = vector.shape_cast %11 : vector<1x32x96xf32> to vector<32x96xf32>
    %c0_10 = arith.constant 0 : index
    %c0_11 = arith.constant 0 : index
    %c128 = arith.constant 128 : index
    %13 = vector.load %arg3[%c0_10, %c0_11, %c128] : memref<2x32x288xf32, #tpu.memory_space<vmem>>, vector<1x32x64xf32>
    %14 = vector.shape_cast %13 : vector<1x32x64xf32> to vector<32x64xf32>
    %c0_12 = arith.constant 0 : index
    %c0_13 = arith.constant 0 : index
    %c256 = arith.constant 256 : index
    %15 = vector.load %arg3[%c0_12, %c0_13, %c256] : memref<2x32x288xf32, #tpu.memory_space<vmem>>, vector<1x32x32xf32>
    %16 = vector.shape_cast %15 : vector<1x32x32xf32> to vector<32x32xf32>
    %c0_14 = arith.constant 0 : index
    %c0_15 = arith.constant 0 : index
    %c0_16 = arith.constant 0 : index
    %17 = vector.load %arg4[%c0_14, %c0_15, %c0_16] : memref<2x64x32xf32, #tpu.memory_space<vmem>>, vector<1x64x32xf32>
    %18 = vector.shape_cast %17 : vector<1x64x32xf32> to vector<64x32xf32>
    %c0_17 = arith.constant 0 : index
    %c0_18 = arith.constant 0 : index
    %c0_19 = arith.constant 0 : index
    %19 = vector.load %arg5[%c0_17, %c0_18, %c0_19] : memref<2x8x96xf32, #tpu.memory_space<vmem>>, vector<1x8x96xf32>
    %20 = vector.shape_cast %19 : vector<1x8x96xf32> to vector<8x96xf32>
    %21 = vector.extract_strided_slice %20 {offsets = [0, 0], sizes = [1, 32], strides = [1, 1]} : vector<8x96xf32> to vector<1x32xf32>
    %22 = vector.extract_strided_slice %20 {offsets = [1, 0], sizes = [1, 32], strides = [1, 1]} : vector<8x96xf32> to vector<1x32xf32>
    %23 = vector.extract_strided_slice %20 {offsets = [2, 0], sizes = [1, 96], strides = [1, 1]} : vector<8x96xf32> to vector<1x96xf32>
    %24 = vector.extract_strided_slice %20 {offsets = [3, 0], sizes = [1, 32], strides = [1, 1]} : vector<8x96xf32> to vector<1x32xf32>
    %25 = vector.extract_strided_slice %20 {offsets = [4, 0], sizes = [1, 32], strides = [1, 1]} : vector<8x96xf32> to vector<1x32xf32>
    %26 = vector.extract_strided_slice %20 {offsets = [5, 0], sizes = [1, 32], strides = [1, 1]} : vector<8x96xf32> to vector<1x32xf32>
    %27 = vector.extract_strided_slice %20 {offsets = [6, 0], sizes = [1, 64], strides = [1, 1]} : vector<8x96xf32> to vector<1x64xf32>
    %28 = vector.extract_strided_slice %20 {offsets = [7, 0], sizes = [1, 32], strides = [1, 1]} : vector<8x96xf32> to vector<1x32xf32>
    %cst_20 = arith.constant dense<0.000000e+00> : vector<64xf32>
    %29 = vector.multi_reduction <add>, %4, %cst_20 [1] : vector<64x32xf32> to vector<64xf32>
    %30 = vector.shape_cast %29 : vector<64xf32> to vector<64x1xf32>
    %cst_21 = arith.constant 3.200000e+01 : f32
    %31 = vector.broadcast %cst_21 : f32 to vector<64x1xf32>
    %32 = arith.divf %30, %31 : vector<64x1xf32>
    %33 = vector.broadcast %32 : vector<64x1xf32> to vector<64x32xf32>
    %34 = arith.subf %4, %33 : vector<64x32xf32>
    %35 = arith.mulf %34, %34 : vector<64x32xf32>
    %cst_22 = arith.constant dense<0.000000e+00> : vector<64xf32>
    %36 = vector.multi_reduction <add>, %35, %cst_22 [1] : vector<64x32xf32> to vector<64xf32>
    %37 = vector.shape_cast %36 : vector<64xf32> to vector<64x1xf32>
    %cst_23 = arith.constant 3.200000e+01 : f32
    %38 = vector.broadcast %cst_23 : f32 to vector<64x1xf32>
    %39 = arith.divf %37, %38 : vector<64x1xf32>
    %40 = vector.broadcast %32 : vector<64x1xf32> to vector<64x32xf32>
    %41 = arith.subf %4, %40 : vector<64x32xf32>
    %cst_24 = arith.constant 9.99999996E-13 : f32
    %42 = vector.broadcast %cst_24 : f32 to vector<64x1xf32>
    %43 = arith.addf %39, %42 : vector<64x1xf32>
    %44 = math.rsqrt %43 : vector<64x1xf32>
    %45 = vector.broadcast %44 : vector<64x1xf32> to vector<64x32xf32>
    %46 = arith.mulf %41, %45 : vector<64x32xf32>
    %47 = vector.broadcast %21 : vector<1x32xf32> to vector<64x32xf32>
    %48 = arith.mulf %46, %47 : vector<64x32xf32>
    %49 = vector.broadcast %22 : vector<1x32xf32> to vector<64x32xf32>
    %50 = arith.addf %48, %49 : vector<64x32xf32>
    %cst_25 = arith.constant dense<0.000000e+00> : vector<64x96xf32>
    %51 = tpu.matmul %50, %12, %cst_25 {dimension_numbers = #tpu.dot_dimension_numbers<[1], [0], [0], [1], [0, 0, 1, 1], [], []>} : vector<64x32xf32>, vector<32x96xf32>, vector<64x96xf32> -> vector<64x96xf32>
    %52 = vector.broadcast %23 : vector<1x96xf32> to vector<64x96xf32>
    %53 = arith.addf %51, %52 : vector<64x96xf32>
    %54 = vector.extract_strided_slice %53 {offsets = [0, 0], sizes = [32, 16], strides = [1, 1]} : vector<64x96xf32> to vector<32x16xf32>
    %55 = vector.extract_strided_slice %53 {offsets = [0, 32], sizes = [32, 16], strides = [1, 1]} : vector<64x96xf32> to vector<32x16xf32>
    %56 = vector.extract_strided_slice %53 {offsets = [0, 64], sizes = [32, 16], strides = [1, 1]} : vector<64x96xf32> to vector<32x16xf32>
    %cst_26 = arith.constant dense<0.000000e+00> : vector<32x32xf32>
    %57 = tpu.matmul %54, %55, %cst_26 {dimension_numbers = #tpu.dot_dimension_numbers<[1], [1], [0], [0], [0, 0, 1, 0], [], []>} : vector<32x16xf32>, vector<32x16xf32>, vector<32x32xf32> -> vector<32x32xf32>
    %58 = vector.broadcast %10 : vector<1x32xf32> to vector<32x32xf32>
    %59 = arith.addf %57, %58 : vector<32x32xf32>
    %cst_27 = arith.constant dense<0xFF800000> : vector<32xf32>
    %60 = vector.multi_reduction <maximumf>, %59, %cst_27 [1] : vector<32x32xf32> to vector<32xf32>
    %61 = vector.shape_cast %60 : vector<32xf32> to vector<32x1xf32>
    %62 = vector.broadcast %61 : vector<32x1xf32> to vector<32x32xf32>
    %63 = arith.subf %59, %62 : vector<32x32xf32>
    %64 = math.exp %63 : vector<32x32xf32>
    %cst_28 = arith.constant dense<0.000000e+00> : vector<32xf32>
    %65 = vector.multi_reduction <add>, %64, %cst_28 [1] : vector<32x32xf32> to vector<32xf32>
    %66 = vector.shape_cast %65 : vector<32xf32> to vector<32x1xf32>
    %cst_29 = arith.constant dense<0.000000e+00> : vector<32x16xf32>
    %67 = tpu.matmul %64, %56, %cst_29 {dimension_numbers = #tpu.dot_dimension_numbers<[1], [0], [0], [1], [0, 0, 1, 1], [], []>} : vector<32x32xf32>, vector<32x16xf32>, vector<32x16xf32> -> vector<32x16xf32>
    %68 = tpu.reciprocal %66 {approx = true} : vector<32x1xf32> -> vector<32x1xf32>
    %69 = vector.broadcast %68 : vector<32x1xf32> to vector<32x16xf32>
    %70 = arith.mulf %67, %69 : vector<32x16xf32>
    %71 = vector.extract_strided_slice %53 {offsets = [32, 0], sizes = [32, 16], strides = [1, 1]} : vector<64x96xf32> to vector<32x16xf32>
    %72 = vector.extract_strided_slice %53 {offsets = [32, 32], sizes = [32, 16], strides = [1, 1]} : vector<64x96xf32> to vector<32x16xf32>
    %73 = vector.extract_strided_slice %53 {offsets = [32, 64], sizes = [32, 16], strides = [1, 1]} : vector<64x96xf32> to vector<32x16xf32>
    %cst_30 = arith.constant dense<0.000000e+00> : vector<32x32xf32>
    %74 = tpu.matmul %71, %72, %cst_30 {dimension_numbers = #tpu.dot_dimension_numbers<[1], [1], [0], [0], [0, 0, 1, 0], [], []>} : vector<32x16xf32>, vector<32x16xf32>, vector<32x32xf32> -> vector<32x32xf32>
    %75 = vector.broadcast %10 : vector<1x32xf32> to vector<32x32xf32>
    %76 = arith.addf %74, %75 : vector<32x32xf32>
    %cst_31 = arith.constant dense<0xFF800000> : vector<32xf32>
    %77 = vector.multi_reduction <maximumf>, %76, %cst_31 [1] : vector<32x32xf32> to vector<32xf32>
    %78 = vector.shape_cast %77 : vector<32xf32> to vector<32x1xf32>
    %79 = vector.broadcast %78 : vector<32x1xf32> to vector<32x32xf32>
    %80 = arith.subf %76, %79 : vector<32x32xf32>
    %81 = math.exp %80 : vector<32x32xf32>
    %cst_32 = arith.constant dense<0.000000e+00> : vector<32xf32>
    %82 = vector.multi_reduction <add>, %81, %cst_32 [1] : vector<32x32xf32> to vector<32xf32>
    %83 = vector.shape_cast %82 : vector<32xf32> to vector<32x1xf32>
    %cst_33 = arith.constant dense<0.000000e+00> : vector<32x16xf32>
    %84 = tpu.matmul %81, %73, %cst_33 {dimension_numbers = #tpu.dot_dimension_numbers<[1], [0], [0], [1], [0, 0, 1, 1], [], []>} : vector<32x32xf32>, vector<32x16xf32>, vector<32x16xf32> -> vector<32x16xf32>
    %85 = tpu.reciprocal %83 {approx = true} : vector<32x1xf32> -> vector<32x1xf32>
    %86 = vector.broadcast %85 : vector<32x1xf32> to vector<32x16xf32>
    %87 = arith.mulf %84, %86 : vector<32x16xf32>
    %88 = tpu.concatenate %70, %87 in 0 : vector<32x16xf32>, vector<32x16xf32> -> vector<64x16xf32>
    %89 = vector.extract_strided_slice %16 {offsets = [0, 0], sizes = [16, 32], strides = [1, 1]} : vector<32x32xf32> to vector<16x32xf32>
    %cst_34 = arith.constant dense<0.000000e+00> : vector<64x32xf32>
    %90 = tpu.matmul %88, %89, %cst_34 {dimension_numbers = #tpu.dot_dimension_numbers<[1], [0], [0], [1], [0, 0, 1, 1], [], []>} : vector<64x16xf32>, vector<16x32xf32>, vector<64x32xf32> -> vector<64x32xf32>
    %91 = vector.extract_strided_slice %53 {offsets = [0, 16], sizes = [32, 16], strides = [1, 1]} : vector<64x96xf32> to vector<32x16xf32>
    %92 = vector.extract_strided_slice %53 {offsets = [0, 48], sizes = [32, 16], strides = [1, 1]} : vector<64x96xf32> to vector<32x16xf32>
    %93 = vector.extract_strided_slice %53 {offsets = [0, 80], sizes = [32, 16], strides = [1, 1]} : vector<64x96xf32> to vector<32x16xf32>
    %cst_35 = arith.constant dense<0.000000e+00> : vector<32x32xf32>
    %94 = tpu.matmul %91, %92, %cst_35 {dimension_numbers = #tpu.dot_dimension_numbers<[1], [1], [0], [0], [0, 0, 1, 0], [], []>} : vector<32x16xf32>, vector<32x16xf32>, vector<32x32xf32> -> vector<32x32xf32>
    %95 = vector.broadcast %10 : vector<1x32xf32> to vector<32x32xf32>
    %96 = arith.addf %94, %95 : vector<32x32xf32>
    %cst_36 = arith.constant dense<0xFF800000> : vector<32xf32>
    %97 = vector.multi_reduction <maximumf>, %96, %cst_36 [1] : vector<32x32xf32> to vector<32xf32>
    %98 = vector.shape_cast %97 : vector<32xf32> to vector<32x1xf32>
    %99 = vector.broadcast %98 : vector<32x1xf32> to vector<32x32xf32>
    %100 = arith.subf %96, %99 : vector<32x32xf32>
    %101 = math.exp %100 : vector<32x32xf32>
    %cst_37 = arith.constant dense<0.000000e+00> : vector<32xf32>
    %102 = vector.multi_reduction <add>, %101, %cst_37 [1] : vector<32x32xf32> to vector<32xf32>
    %103 = vector.shape_cast %102 : vector<32xf32> to vector<32x1xf32>
    %cst_38 = arith.constant dense<0.000000e+00> : vector<32x16xf32>
    %104 = tpu.matmul %101, %93, %cst_38 {dimension_numbers = #tpu.dot_dimension_numbers<[1], [0], [0], [1], [0, 0, 1, 1], [], []>} : vector<32x32xf32>, vector<32x16xf32>, vector<32x16xf32> -> vector<32x16xf32>
    %105 = tpu.reciprocal %103 {approx = true} : vector<32x1xf32> -> vector<32x1xf32>
    %106 = vector.broadcast %105 : vector<32x1xf32> to vector<32x16xf32>
    %107 = arith.mulf %104, %106 : vector<32x16xf32>
    %108 = vector.extract_strided_slice %53 {offsets = [32, 16], sizes = [32, 16], strides = [1, 1]} : vector<64x96xf32> to vector<32x16xf32>
    %109 = vector.extract_strided_slice %53 {offsets = [32, 48], sizes = [32, 16], strides = [1, 1]} : vector<64x96xf32> to vector<32x16xf32>
    %110 = vector.extract_strided_slice %53 {offsets = [32, 80], sizes = [32, 16], strides = [1, 1]} : vector<64x96xf32> to vector<32x16xf32>
    %cst_39 = arith.constant dense<0.000000e+00> : vector<32x32xf32>
    %111 = tpu.matmul %108, %109, %cst_39 {dimension_numbers = #tpu.dot_dimension_numbers<[1], [1], [0], [0], [0, 0, 1, 0], [], []>} : vector<32x16xf32>, vector<32x16xf32>, vector<32x32xf32> -> vector<32x32xf32>
    %112 = vector.broadcast %10 : vector<1x32xf32> to vector<32x32xf32>
    %113 = arith.addf %111, %112 : vector<32x32xf32>
    %cst_40 = arith.constant dense<0xFF800000> : vector<32xf32>
    %114 = vector.multi_reduction <maximumf>, %113, %cst_40 [1] : vector<32x32xf32> to vector<32xf32>
    %115 = vector.shape_cast %114 : vector<32xf32> to vector<32x1xf32>
    %116 = vector.broadcast %115 : vector<32x1xf32> to vector<32x32xf32>
    %117 = arith.subf %113, %116 : vector<32x32xf32>
    %118 = math.exp %117 : vector<32x32xf32>
    %cst_41 = arith.constant dense<0.000000e+00> : vector<32xf32>
    %119 = vector.multi_reduction <add>, %118, %cst_41 [1] : vector<32x32xf32> to vector<32xf32>
    %120 = vector.shape_cast %119 : vector<32xf32> to vector<32x1xf32>
    %cst_42 = arith.constant dense<0.000000e+00> : vector<32x16xf32>
    %121 = tpu.matmul %118, %110, %cst_42 {dimension_numbers = #tpu.dot_dimension_numbers<[1], [0], [0], [1], [0, 0, 1, 1], [], []>} : vector<32x32xf32>, vector<32x16xf32>, vector<32x16xf32> -> vector<32x16xf32>
    %122 = tpu.reciprocal %120 {approx = true} : vector<32x1xf32> -> vector<32x1xf32>
    %123 = vector.broadcast %122 : vector<32x1xf32> to vector<32x16xf32>
    %124 = arith.mulf %121, %123 : vector<32x16xf32>
    %125 = tpu.concatenate %107, %124 in 0 : vector<32x16xf32>, vector<32x16xf32> -> vector<64x16xf32>
    %126 = vector.extract_strided_slice %16 {offsets = [16, 0], sizes = [16, 32], strides = [1, 1]} : vector<32x32xf32> to vector<16x32xf32>
    %cst_43 = arith.constant dense<0.000000e+00> : vector<64x32xf32>
    %127 = tpu.matmul %125, %126, %cst_43 {dimension_numbers = #tpu.dot_dimension_numbers<[1], [0], [0], [1], [0, 0, 1, 1], [], []>} : vector<64x16xf32>, vector<16x32xf32>, vector<64x32xf32> -> vector<64x32xf32>
    %128 = arith.addf %90, %127 : vector<64x32xf32>
    %129 = arith.addf %4, %128 : vector<64x32xf32>
    %130 = vector.broadcast %24 : vector<1x32xf32> to vector<64x32xf32>
    %131 = arith.addf %129, %130 : vector<64x32xf32>
    %cst_44 = arith.constant dense<0.000000e+00> : vector<64xf32>
    %132 = vector.multi_reduction <add>, %131, %cst_44 [1] : vector<64x32xf32> to vector<64xf32>
    %133 = vector.shape_cast %132 : vector<64xf32> to vector<64x1xf32>
    %cst_45 = arith.constant 3.200000e+01 : f32
    %134 = vector.broadcast %cst_45 : f32 to vector<64x1xf32>
    %135 = arith.divf %133, %134 : vector<64x1xf32>
    %136 = vector.broadcast %135 : vector<64x1xf32> to vector<64x32xf32>
    %137 = arith.subf %131, %136 : vector<64x32xf32>
    %138 = arith.mulf %137, %137 : vector<64x32xf32>
    %cst_46 = arith.constant dense<0.000000e+00> : vector<64xf32>
    %139 = vector.multi_reduction <add>, %138, %cst_46 [1] : vector<64x32xf32> to vector<64xf32>
    %140 = vector.shape_cast %139 : vector<64xf32> to vector<64x1xf32>
    %cst_47 = arith.constant 3.200000e+01 : f32
    %141 = vector.broadcast %cst_47 : f32 to vector<64x1xf32>
    %142 = arith.divf %140, %141 : vector<64x1xf32>
    %143 = vector.broadcast %135 : vector<64x1xf32> to vector<64x32xf32>
    %144 = arith.subf %131, %143 : vector<64x32xf32>
    %cst_48 = arith.constant 9.99999996E-13 : f32
    %145 = vector.broadcast %cst_48 : f32 to vector<64x1xf32>
    %146 = arith.addf %142, %145 : vector<64x1xf32>
    %147 = math.rsqrt %146 : vector<64x1xf32>
    %148 = vector.broadcast %147 : vector<64x1xf32> to vector<64x32xf32>
    %149 = arith.mulf %144, %148 : vector<64x32xf32>
    %150 = vector.broadcast %25 : vector<1x32xf32> to vector<64x32xf32>
    %151 = arith.mulf %149, %150 : vector<64x32xf32>
    %152 = vector.broadcast %26 : vector<1x32xf32> to vector<64x32xf32>
    %153 = arith.addf %151, %152 : vector<64x32xf32>
    %cst_49 = arith.constant dense<0.000000e+00> : vector<64x64xf32>
    %154 = tpu.matmul %153, %14, %cst_49 {dimension_numbers = #tpu.dot_dimension_numbers<[1], [0], [0], [1], [0, 0, 1, 1], [], []>} : vector<64x32xf32>, vector<32x64xf32>, vector<64x64xf32> -> vector<64x64xf32>
    %155 = vector.broadcast %27 : vector<1x64xf32> to vector<64x64xf32>
    %156 = arith.addf %154, %155 : vector<64x64xf32>
    %cst_50 = arith.constant 5.000000e-01 : f32
    %157 = vector.broadcast %cst_50 : f32 to vector<64x64xf32>
    %158 = arith.mulf %157, %156 : vector<64x64xf32>
    %cst_51 = arith.constant 0.707106769 : f32
    %159 = vector.broadcast %cst_51 : f32 to vector<64x64xf32>
    %160 = arith.mulf %156, %159 : vector<64x64xf32>
    %161 = math.erf %160 : vector<64x64xf32>
    %cst_52 = arith.constant 1.000000e+00 : f32
    %162 = vector.broadcast %cst_52 : f32 to vector<64x64xf32>
    %163 = arith.addf %162, %161 : vector<64x64xf32>
    %164 = arith.mulf %158, %163 : vector<64x64xf32>
    %cst_53 = arith.constant dense<0.000000e+00> : vector<64x32xf32>
    %165 = tpu.matmul %164, %18, %cst_53 {dimension_numbers = #tpu.dot_dimension_numbers<[1], [0], [0], [1], [0, 0, 1, 1], [], []>} : vector<64x64xf32>, vector<64x32xf32>, vector<64x32xf32> -> vector<64x32xf32>
    %166 = arith.addf %131, %165 : vector<64x32xf32>
    %167 = vector.broadcast %28 : vector<1x32xf32> to vector<64x32xf32>
    %168 = arith.addf %166, %167 : vector<64x32xf32>
    %c1 = arith.constant 1 : index
    %c0_54 = arith.constant 0 : index
    %c0_55 = arith.constant 0 : index
    %169 = vector.load %arg3[%c1, %c0_54, %c0_55] : memref<2x32x288xf32, #tpu.memory_space<vmem>>, vector<1x32x96xf32>
    %170 = vector.shape_cast %169 : vector<1x32x96xf32> to vector<32x96xf32>
    %c1_56 = arith.constant 1 : index
    %c0_57 = arith.constant 0 : index
    %c128_58 = arith.constant 128 : index
    %171 = vector.load %arg3[%c1_56, %c0_57, %c128_58] : memref<2x32x288xf32, #tpu.memory_space<vmem>>, vector<1x32x64xf32>
    %172 = vector.shape_cast %171 : vector<1x32x64xf32> to vector<32x64xf32>
    %c1_59 = arith.constant 1 : index
    %c0_60 = arith.constant 0 : index
    %c256_61 = arith.constant 256 : index
    %173 = vector.load %arg3[%c1_59, %c0_60, %c256_61] : memref<2x32x288xf32, #tpu.memory_space<vmem>>, vector<1x32x32xf32>
    %174 = vector.shape_cast %173 : vector<1x32x32xf32> to vector<32x32xf32>
    %c1_62 = arith.constant 1 : index
    %c0_63 = arith.constant 0 : index
    %c0_64 = arith.constant 0 : index
    %175 = vector.load %arg4[%c1_62, %c0_63, %c0_64] : memref<2x64x32xf32, #tpu.memory_space<vmem>>, vector<1x64x32xf32>
    %176 = vector.shape_cast %175 : vector<1x64x32xf32> to vector<64x32xf32>
    %c1_65 = arith.constant 1 : index
    %c0_66 = arith.constant 0 : index
    %c0_67 = arith.constant 0 : index
    %177 = vector.load %arg5[%c1_65, %c0_66, %c0_67] : memref<2x8x96xf32, #tpu.memory_space<vmem>>, vector<1x8x96xf32>
    %178 = vector.shape_cast %177 : vector<1x8x96xf32> to vector<8x96xf32>
    %179 = vector.extract_strided_slice %178 {offsets = [0, 0], sizes = [1, 32], strides = [1, 1]} : vector<8x96xf32> to vector<1x32xf32>
    %180 = vector.extract_strided_slice %178 {offsets = [1, 0], sizes = [1, 32], strides = [1, 1]} : vector<8x96xf32> to vector<1x32xf32>
    %181 = vector.extract_strided_slice %178 {offsets = [2, 0], sizes = [1, 96], strides = [1, 1]} : vector<8x96xf32> to vector<1x96xf32>
    %182 = vector.extract_strided_slice %178 {offsets = [3, 0], sizes = [1, 32], strides = [1, 1]} : vector<8x96xf32> to vector<1x32xf32>
    %183 = vector.extract_strided_slice %178 {offsets = [4, 0], sizes = [1, 32], strides = [1, 1]} : vector<8x96xf32> to vector<1x32xf32>
    %184 = vector.extract_strided_slice %178 {offsets = [5, 0], sizes = [1, 32], strides = [1, 1]} : vector<8x96xf32> to vector<1x32xf32>
    %185 = vector.extract_strided_slice %178 {offsets = [6, 0], sizes = [1, 64], strides = [1, 1]} : vector<8x96xf32> to vector<1x64xf32>
    %186 = vector.extract_strided_slice %178 {offsets = [7, 0], sizes = [1, 32], strides = [1, 1]} : vector<8x96xf32> to vector<1x32xf32>
    %cst_68 = arith.constant dense<0.000000e+00> : vector<64xf32>
    %187 = vector.multi_reduction <add>, %168, %cst_68 [1] : vector<64x32xf32> to vector<64xf32>
    %188 = vector.shape_cast %187 : vector<64xf32> to vector<64x1xf32>
    %cst_69 = arith.constant 3.200000e+01 : f32
    %189 = vector.broadcast %cst_69 : f32 to vector<64x1xf32>
    %190 = arith.divf %188, %189 : vector<64x1xf32>
    %191 = vector.broadcast %190 : vector<64x1xf32> to vector<64x32xf32>
    %192 = arith.subf %168, %191 : vector<64x32xf32>
    %193 = arith.mulf %192, %192 : vector<64x32xf32>
    %cst_70 = arith.constant dense<0.000000e+00> : vector<64xf32>
    %194 = vector.multi_reduction <add>, %193, %cst_70 [1] : vector<64x32xf32> to vector<64xf32>
    %195 = vector.shape_cast %194 : vector<64xf32> to vector<64x1xf32>
    %cst_71 = arith.constant 3.200000e+01 : f32
    %196 = vector.broadcast %cst_71 : f32 to vector<64x1xf32>
    %197 = arith.divf %195, %196 : vector<64x1xf32>
    %198 = vector.broadcast %190 : vector<64x1xf32> to vector<64x32xf32>
    %199 = arith.subf %168, %198 : vector<64x32xf32>
    %cst_72 = arith.constant 9.99999996E-13 : f32
    %200 = vector.broadcast %cst_72 : f32 to vector<64x1xf32>
    %201 = arith.addf %197, %200 : vector<64x1xf32>
    %202 = math.rsqrt %201 : vector<64x1xf32>
    %203 = vector.broadcast %202 : vector<64x1xf32> to vector<64x32xf32>
    %204 = arith.mulf %199, %203 : vector<64x32xf32>
    %205 = vector.broadcast %179 : vector<1x32xf32> to vector<64x32xf32>
    %206 = arith.mulf %204, %205 : vector<64x32xf32>
    %207 = vector.broadcast %180 : vector<1x32xf32> to vector<64x32xf32>
    %208 = arith.addf %206, %207 : vector<64x32xf32>
    %cst_73 = arith.constant dense<0.000000e+00> : vector<64x96xf32>
    %209 = tpu.matmul %208, %170, %cst_73 {dimension_numbers = #tpu.dot_dimension_numbers<[1], [0], [0], [1], [0, 0, 1, 1], [], []>} : vector<64x32xf32>, vector<32x96xf32>, vector<64x96xf32> -> vector<64x96xf32>
    %210 = vector.broadcast %181 : vector<1x96xf32> to vector<64x96xf32>
    %211 = arith.addf %209, %210 : vector<64x96xf32>
    %212 = vector.extract_strided_slice %211 {offsets = [0, 0], sizes = [32, 16], strides = [1, 1]} : vector<64x96xf32> to vector<32x16xf32>
    %213 = vector.extract_strided_slice %211 {offsets = [0, 32], sizes = [32, 16], strides = [1, 1]} : vector<64x96xf32> to vector<32x16xf32>
    %214 = vector.extract_strided_slice %211 {offsets = [0, 64], sizes = [32, 16], strides = [1, 1]} : vector<64x96xf32> to vector<32x16xf32>
    %cst_74 = arith.constant dense<0.000000e+00> : vector<32x32xf32>
    %215 = tpu.matmul %212, %213, %cst_74 {dimension_numbers = #tpu.dot_dimension_numbers<[1], [1], [0], [0], [0, 0, 1, 0], [], []>} : vector<32x16xf32>, vector<32x16xf32>, vector<32x32xf32> -> vector<32x32xf32>
    %216 = vector.broadcast %10 : vector<1x32xf32> to vector<32x32xf32>
    %217 = arith.addf %215, %216 : vector<32x32xf32>
    %cst_75 = arith.constant dense<0xFF800000> : vector<32xf32>
    %218 = vector.multi_reduction <maximumf>, %217, %cst_75 [1] : vector<32x32xf32> to vector<32xf32>
    %219 = vector.shape_cast %218 : vector<32xf32> to vector<32x1xf32>
    %220 = vector.broadcast %219 : vector<32x1xf32> to vector<32x32xf32>
    %221 = arith.subf %217, %220 : vector<32x32xf32>
    %222 = math.exp %221 : vector<32x32xf32>
    %cst_76 = arith.constant dense<0.000000e+00> : vector<32xf32>
    %223 = vector.multi_reduction <add>, %222, %cst_76 [1] : vector<32x32xf32> to vector<32xf32>
    %224 = vector.shape_cast %223 : vector<32xf32> to vector<32x1xf32>
    %cst_77 = arith.constant dense<0.000000e+00> : vector<32x16xf32>
    %225 = tpu.matmul %222, %214, %cst_77 {dimension_numbers = #tpu.dot_dimension_numbers<[1], [0], [0], [1], [0, 0, 1, 1], [], []>} : vector<32x32xf32>, vector<32x16xf32>, vector<32x16xf32> -> vector<32x16xf32>
    %226 = tpu.reciprocal %224 {approx = true} : vector<32x1xf32> -> vector<32x1xf32>
    %227 = vector.broadcast %226 : vector<32x1xf32> to vector<32x16xf32>
    %228 = arith.mulf %225, %227 : vector<32x16xf32>
    %229 = vector.extract_strided_slice %211 {offsets = [32, 0], sizes = [32, 16], strides = [1, 1]} : vector<64x96xf32> to vector<32x16xf32>
    %230 = vector.extract_strided_slice %211 {offsets = [32, 32], sizes = [32, 16], strides = [1, 1]} : vector<64x96xf32> to vector<32x16xf32>
    %231 = vector.extract_strided_slice %211 {offsets = [32, 64], sizes = [32, 16], strides = [1, 1]} : vector<64x96xf32> to vector<32x16xf32>
    %cst_78 = arith.constant dense<0.000000e+00> : vector<32x32xf32>
    %232 = tpu.matmul %229, %230, %cst_78 {dimension_numbers = #tpu.dot_dimension_numbers<[1], [1], [0], [0], [0, 0, 1, 0], [], []>} : vector<32x16xf32>, vector<32x16xf32>, vector<32x32xf32> -> vector<32x32xf32>
    %233 = vector.broadcast %10 : vector<1x32xf32> to vector<32x32xf32>
    %234 = arith.addf %232, %233 : vector<32x32xf32>
    %cst_79 = arith.constant dense<0xFF800000> : vector<32xf32>
    %235 = vector.multi_reduction <maximumf>, %234, %cst_79 [1] : vector<32x32xf32> to vector<32xf32>
    %236 = vector.shape_cast %235 : vector<32xf32> to vector<32x1xf32>
    %237 = vector.broadcast %236 : vector<32x1xf32> to vector<32x32xf32>
    %238 = arith.subf %234, %237 : vector<32x32xf32>
    %239 = math.exp %238 : vector<32x32xf32>
    %cst_80 = arith.constant dense<0.000000e+00> : vector<32xf32>
    %240 = vector.multi_reduction <add>, %239, %cst_80 [1] : vector<32x32xf32> to vector<32xf32>
    %241 = vector.shape_cast %240 : vector<32xf32> to vector<32x1xf32>
    %cst_81 = arith.constant dense<0.000000e+00> : vector<32x16xf32>
    %242 = tpu.matmul %239, %231, %cst_81 {dimension_numbers = #tpu.dot_dimension_numbers<[1], [0], [0], [1], [0, 0, 1, 1], [], []>} : vector<32x32xf32>, vector<32x16xf32>, vector<32x16xf32> -> vector<32x16xf32>
    %243 = tpu.reciprocal %241 {approx = true} : vector<32x1xf32> -> vector<32x1xf32>
    %244 = vector.broadcast %243 : vector<32x1xf32> to vector<32x16xf32>
    %245 = arith.mulf %242, %244 : vector<32x16xf32>
    %246 = tpu.concatenate %228, %245 in 0 : vector<32x16xf32>, vector<32x16xf32> -> vector<64x16xf32>
    %247 = vector.extract_strided_slice %174 {offsets = [0, 0], sizes = [16, 32], strides = [1, 1]} : vector<32x32xf32> to vector<16x32xf32>
    %cst_82 = arith.constant dense<0.000000e+00> : vector<64x32xf32>
    %248 = tpu.matmul %246, %247, %cst_82 {dimension_numbers = #tpu.dot_dimension_numbers<[1], [0], [0], [1], [0, 0, 1, 1], [], []>} : vector<64x16xf32>, vector<16x32xf32>, vector<64x32xf32> -> vector<64x32xf32>
    %249 = vector.extract_strided_slice %211 {offsets = [0, 16], sizes = [32, 16], strides = [1, 1]} : vector<64x96xf32> to vector<32x16xf32>
    %250 = vector.extract_strided_slice %211 {offsets = [0, 48], sizes = [32, 16], strides = [1, 1]} : vector<64x96xf32> to vector<32x16xf32>
    %251 = vector.extract_strided_slice %211 {offsets = [0, 80], sizes = [32, 16], strides = [1, 1]} : vector<64x96xf32> to vector<32x16xf32>
    %cst_83 = arith.constant dense<0.000000e+00> : vector<32x32xf32>
    %252 = tpu.matmul %249, %250, %cst_83 {dimension_numbers = #tpu.dot_dimension_numbers<[1], [1], [0], [0], [0, 0, 1, 0], [], []>} : vector<32x16xf32>, vector<32x16xf32>, vector<32x32xf32> -> vector<32x32xf32>
    %253 = vector.broadcast %10 : vector<1x32xf32> to vector<32x32xf32>
    %254 = arith.addf %252, %253 : vector<32x32xf32>
    %cst_84 = arith.constant dense<0xFF800000> : vector<32xf32>
    %255 = vector.multi_reduction <maximumf>, %254, %cst_84 [1] : vector<32x32xf32> to vector<32xf32>
    %256 = vector.shape_cast %255 : vector<32xf32> to vector<32x1xf32>
    %257 = vector.broadcast %256 : vector<32x1xf32> to vector<32x32xf32>
    %258 = arith.subf %254, %257 : vector<32x32xf32>
    %259 = math.exp %258 : vector<32x32xf32>
    %cst_85 = arith.constant dense<0.000000e+00> : vector<32xf32>
    %260 = vector.multi_reduction <add>, %259, %cst_85 [1] : vector<32x32xf32> to vector<32xf32>
    %261 = vector.shape_cast %260 : vector<32xf32> to vector<32x1xf32>
    %cst_86 = arith.constant dense<0.000000e+00> : vector<32x16xf32>
    %262 = tpu.matmul %259, %251, %cst_86 {dimension_numbers = #tpu.dot_dimension_numbers<[1], [0], [0], [1], [0, 0, 1, 1], [], []>} : vector<32x32xf32>, vector<32x16xf32>, vector<32x16xf32> -> vector<32x16xf32>
    %263 = tpu.reciprocal %261 {approx = true} : vector<32x1xf32> -> vector<32x1xf32>
    %264 = vector.broadcast %263 : vector<32x1xf32> to vector<32x16xf32>
    %265 = arith.mulf %262, %264 : vector<32x16xf32>
    %266 = vector.extract_strided_slice %211 {offsets = [32, 16], sizes = [32, 16], strides = [1, 1]} : vector<64x96xf32> to vector<32x16xf32>
    %267 = vector.extract_strided_slice %211 {offsets = [32, 48], sizes = [32, 16], strides = [1, 1]} : vector<64x96xf32> to vector<32x16xf32>
    %268 = vector.extract_strided_slice %211 {offsets = [32, 80], sizes = [32, 16], strides = [1, 1]} : vector<64x96xf32> to vector<32x16xf32>
    %cst_87 = arith.constant dense<0.000000e+00> : vector<32x32xf32>
    %269 = tpu.matmul %266, %267, %cst_87 {dimension_numbers = #tpu.dot_dimension_numbers<[1], [1], [0], [0], [0, 0, 1, 0], [], []>} : vector<32x16xf32>, vector<32x16xf32>, vector<32x32xf32> -> vector<32x32xf32>
    %270 = vector.broadcast %10 : vector<1x32xf32> to vector<32x32xf32>
    %271 = arith.addf %269, %270 : vector<32x32xf32>
    %cst_88 = arith.constant dense<0xFF800000> : vector<32xf32>
    %272 = vector.multi_reduction <maximumf>, %271, %cst_88 [1] : vector<32x32xf32> to vector<32xf32>
    %273 = vector.shape_cast %272 : vector<32xf32> to vector<32x1xf32>
    %274 = vector.broadcast %273 : vector<32x1xf32> to vector<32x32xf32>
    %275 = arith.subf %271, %274 : vector<32x32xf32>
    %276 = math.exp %275 : vector<32x32xf32>
    %cst_89 = arith.constant dense<0.000000e+00> : vector<32xf32>
    %277 = vector.multi_reduction <add>, %276, %cst_89 [1] : vector<32x32xf32> to vector<32xf32>
    %278 = vector.shape_cast %277 : vector<32xf32> to vector<32x1xf32>
    %cst_90 = arith.constant dense<0.000000e+00> : vector<32x16xf32>
    %279 = tpu.matmul %276, %268, %cst_90 {dimension_numbers = #tpu.dot_dimension_numbers<[1], [0], [0], [1], [0, 0, 1, 1], [], []>} : vector<32x32xf32>, vector<32x16xf32>, vector<32x16xf32> -> vector<32x16xf32>
    %280 = tpu.reciprocal %278 {approx = true} : vector<32x1xf32> -> vector<32x1xf32>
    %281 = vector.broadcast %280 : vector<32x1xf32> to vector<32x16xf32>
    %282 = arith.mulf %279, %281 : vector<32x16xf32>
    %283 = tpu.concatenate %265, %282 in 0 : vector<32x16xf32>, vector<32x16xf32> -> vector<64x16xf32>
    %284 = vector.extract_strided_slice %174 {offsets = [16, 0], sizes = [16, 32], strides = [1, 1]} : vector<32x32xf32> to vector<16x32xf32>
    %cst_91 = arith.constant dense<0.000000e+00> : vector<64x32xf32>
    %285 = tpu.matmul %283, %284, %cst_91 {dimension_numbers = #tpu.dot_dimension_numbers<[1], [0], [0], [1], [0, 0, 1, 1], [], []>} : vector<64x16xf32>, vector<16x32xf32>, vector<64x32xf32> -> vector<64x32xf32>
    %286 = arith.addf %248, %285 : vector<64x32xf32>
    %287 = arith.addf %168, %286 : vector<64x32xf32>
    %288 = vector.broadcast %182 : vector<1x32xf32> to vector<64x32xf32>
    %289 = arith.addf %287, %288 : vector<64x32xf32>
    %cst_92 = arith.constant dense<0.000000e+00> : vector<64xf32>
    %290 = vector.multi_reduction <add>, %289, %cst_92 [1] : vector<64x32xf32> to vector<64xf32>
    %291 = vector.shape_cast %290 : vector<64xf32> to vector<64x1xf32>
    %cst_93 = arith.constant 3.200000e+01 : f32
    %292 = vector.broadcast %cst_93 : f32 to vector<64x1xf32>
    %293 = arith.divf %291, %292 : vector<64x1xf32>
    %294 = vector.broadcast %293 : vector<64x1xf32> to vector<64x32xf32>
    %295 = arith.subf %289, %294 : vector<64x32xf32>
    %296 = arith.mulf %295, %295 : vector<64x32xf32>
    %cst_94 = arith.constant dense<0.000000e+00> : vector<64xf32>
    %297 = vector.multi_reduction <add>, %296, %cst_94 [1] : vector<64x32xf32> to vector<64xf32>
    %298 = vector.shape_cast %297 : vector<64xf32> to vector<64x1xf32>
    %cst_95 = arith.constant 3.200000e+01 : f32
    %299 = vector.broadcast %cst_95 : f32 to vector<64x1xf32>
    %300 = arith.divf %298, %299 : vector<64x1xf32>
    %301 = vector.broadcast %293 : vector<64x1xf32> to vector<64x32xf32>
    %302 = arith.subf %289, %301 : vector<64x32xf32>
    %cst_96 = arith.constant 9.99999996E-13 : f32
    %303 = vector.broadcast %cst_96 : f32 to vector<64x1xf32>
    %304 = arith.addf %300, %303 : vector<64x1xf32>
    %305 = math.rsqrt %304 : vector<64x1xf32>
    %306 = vector.broadcast %305 : vector<64x1xf32> to vector<64x32xf32>
    %307 = arith.mulf %302, %306 : vector<64x32xf32>
    %308 = vector.broadcast %183 : vector<1x32xf32> to vector<64x32xf32>
    %309 = arith.mulf %307, %308 : vector<64x32xf32>
    %310 = vector.broadcast %184 : vector<1x32xf32> to vector<64x32xf32>
    %311 = arith.addf %309, %310 : vector<64x32xf32>
    %cst_97 = arith.constant dense<0.000000e+00> : vector<64x64xf32>
    %312 = tpu.matmul %311, %172, %cst_97 {dimension_numbers = #tpu.dot_dimension_numbers<[1], [0], [0], [1], [0, 0, 1, 1], [], []>} : vector<64x32xf32>, vector<32x64xf32>, vector<64x64xf32> -> vector<64x64xf32>
    %313 = vector.broadcast %185 : vector<1x64xf32> to vector<64x64xf32>
    %314 = arith.addf %312, %313 : vector<64x64xf32>
    %cst_98 = arith.constant 5.000000e-01 : f32
    %315 = vector.broadcast %cst_98 : f32 to vector<64x64xf32>
    %316 = arith.mulf %315, %314 : vector<64x64xf32>
    %cst_99 = arith.constant 0.707106769 : f32
    %317 = vector.broadcast %cst_99 : f32 to vector<64x64xf32>
    %318 = arith.mulf %314, %317 : vector<64x64xf32>
    %319 = math.erf %318 : vector<64x64xf32>
    %cst_100 = arith.constant 1.000000e+00 : f32
    %320 = vector.broadcast %cst_100 : f32 to vector<64x64xf32>
    %321 = arith.addf %320, %319 : vector<64x64xf32>
    %322 = arith.mulf %316, %321 : vector<64x64xf32>
    %cst_101 = arith.constant dense<0.000000e+00> : vector<64x32xf32>
    %323 = tpu.matmul %322, %176, %cst_101 {dimension_numbers = #tpu.dot_dimension_numbers<[1], [0], [0], [1], [0, 0, 1, 1], [], []>} : vector<64x64xf32>, vector<64x32xf32>, vector<64x32xf32> -> vector<64x32xf32>
    %324 = arith.addf %289, %323 : vector<64x32xf32>
    %325 = vector.broadcast %186 : vector<1x32xf32> to vector<64x32xf32>
    %326 = arith.addf %324, %325 : vector<64x32xf32>
    %c0_102 = arith.constant 0 : index
    %c0_103 = arith.constant 0 : index
    %327 = vector.load %arg6[%c0_102, %c0_103] : memref<35x128xf32, #tpu.memory_space<vmem>>, vector<35x128xf32>
    %328 = vector.extract_strided_slice %327 {offsets = [0, 0], sizes = [32, 128], strides = [1, 1]} : vector<35x128xf32> to vector<32x128xf32>
    %329 = vector.extract_strided_slice %327 {offsets = [32, 0], sizes = [1, 32], strides = [1, 1]} : vector<35x128xf32> to vector<1x32xf32>
    %330 = vector.extract_strided_slice %327 {offsets = [33, 0], sizes = [1, 32], strides = [1, 1]} : vector<35x128xf32> to vector<1x32xf32>
    %331 = vector.extract_strided_slice %327 {offsets = [34, 0], sizes = [1, 128], strides = [1, 1]} : vector<35x128xf32> to vector<1x128xf32>
    %332 = vector.extract_strided_slice %326 {offsets = [16, 0], sizes = [1, 32], strides = [1, 1]} : vector<64x32xf32> to vector<1x32xf32>
    %333 = vector.extract_strided_slice %326 {offsets = [48, 0], sizes = [1, 32], strides = [1, 1]} : vector<64x32xf32> to vector<1x32xf32>
    %334 = tpu.concatenate %332, %333 in 0 : vector<1x32xf32>, vector<1x32xf32> -> vector<2x32xf32>
    %cst_104 = arith.constant dense<0.000000e+00> : vector<2xf32>
    %335 = vector.multi_reduction <add>, %334, %cst_104 [1] : vector<2x32xf32> to vector<2xf32>
    %336 = vector.shape_cast %335 : vector<2xf32> to vector<2x1xf32>
    %cst_105 = arith.constant 3.200000e+01 : f32
    %337 = vector.broadcast %cst_105 : f32 to vector<2x1xf32>
    %338 = arith.divf %336, %337 : vector<2x1xf32>
    %339 = vector.broadcast %338 : vector<2x1xf32> to vector<2x32xf32>
    %340 = arith.subf %334, %339 : vector<2x32xf32>
    %341 = arith.mulf %340, %340 : vector<2x32xf32>
    %cst_106 = arith.constant dense<0.000000e+00> : vector<2xf32>
    %342 = vector.multi_reduction <add>, %341, %cst_106 [1] : vector<2x32xf32> to vector<2xf32>
    %343 = vector.shape_cast %342 : vector<2xf32> to vector<2x1xf32>
    %cst_107 = arith.constant 3.200000e+01 : f32
    %344 = vector.broadcast %cst_107 : f32 to vector<2x1xf32>
    %345 = arith.divf %343, %344 : vector<2x1xf32>
    %346 = vector.broadcast %338 : vector<2x1xf32> to vector<2x32xf32>
    %347 = arith.subf %334, %346 : vector<2x32xf32>
    %cst_108 = arith.constant 9.99999996E-13 : f32
    %348 = vector.broadcast %cst_108 : f32 to vector<2x1xf32>
    %349 = arith.addf %345, %348 : vector<2x1xf32>
    %350 = math.rsqrt %349 : vector<2x1xf32>
    %351 = vector.broadcast %350 : vector<2x1xf32> to vector<2x32xf32>
    %352 = arith.mulf %347, %351 : vector<2x32xf32>
    %353 = vector.broadcast %329 : vector<1x32xf32> to vector<2x32xf32>
    %354 = arith.mulf %352, %353 : vector<2x32xf32>
    %355 = vector.broadcast %330 : vector<1x32xf32> to vector<2x32xf32>
    %356 = arith.addf %354, %355 : vector<2x32xf32>
    %cst_109 = arith.constant dense<0.000000e+00> : vector<2x128xf32>
    %357 = tpu.matmul %356, %328, %cst_109 {dimension_numbers = #tpu.dot_dimension_numbers<[1], [0], [0], [1], [0, 0, 1, 1], [], []>} : vector<2x32xf32>, vector<32x128xf32>, vector<2x128xf32> -> vector<2x128xf32>
    %358 = vector.broadcast %331 : vector<1x128xf32> to vector<2x128xf32>
    %359 = arith.addf %357, %358 : vector<2x128xf32>
    %c0_110 = arith.constant 0 : index
    %c0_111 = arith.constant 0 : index
    %360 = vector.load %arg7[%c0_110, %c0_111] : memref<2x128xf32, #tpu.memory_space<vmem>>, vector<2x128xf32>
    tpu.vector_store %arg7[%c0_110, %c0_111], %359 {strides = array<i32>} : memref<2x128xf32, #tpu.memory_space<vmem>>, vector<2x128xf32>,
    return
  }
}

</mosaic_0001>

<llo_original>
// kernel: vit_forward.1
$region0: #{vit_forward.1}
  #allocation0 [shape = 'u32[]', space=smem, size = 0x4, offset = 0x4, fixed_abs, tag = 'smem constant byte address 0x4 - core index']
  #allocation1 [shape = 'u32[144,128]{1,0:T(1,128)}', space=vmem, size = 0x12000, scoped, tag = 'internal scratch']
  %s0 = inlined_call_operand.vmem [shape: f32[64,64], index: 0, kind: input, shape index: {}]
  %s1 = inlined_call_operand.vmem [shape: f32[64,32], index: 1, kind: input, shape index: {}]
  %s2 = inlined_call_operand.vmem [shape: f32[64,32], index: 2, kind: input, shape index: {}]
  %s3 = inlined_call_operand.vmem [shape: f32[2,32,288], index: 3, kind: input, shape index: {}]
  %s4 = inlined_call_operand.vmem [shape: f32[2,64,32], index: 4, kind: input, shape index: {}]
  %s5 = inlined_call_operand.vmem [shape: f32[2,8,96], index: 5, kind: input, shape index: {}]
  %s6 = inlined_call_operand.vmem [shape: f32[35,128], index: 6, kind: input, shape index: {}]
  %s7 = inlined_call_operand.hbm [shape: f32[2,128], index: 7, kind: output, shape index: {}]
  %s8 = sld [smem:[#allocation0]]
  $region38: #{vit_forward.1} parent=0
    _
  %s10 = ssub.s32 1, %s8
  %s11 = scalar_select 0, %s10, %s8
  $region1: #{vit_forward.1} parent=0
    #allocation2 [shape = 'u8[1024]{0}', space=vmem, size = 0x400, scoped, tag = 'output window, operand 0, single buffered']
    #allocation3 [shape = 's32[1]{0}', space=sflag, size = 0x4, scoped, tag = 'scoped memory for vit_forward.1']
    %12 = vsyncpa [#allocation3], 0
    // Predicated region
    $region2: #{vit_forward.1} parent=1 // pred_check
      _
    $region3: #{vit_forward.1} parent=1 // pred_check_branch
      %14 = sbr.rel (0) target = $region5
    $region4: #{vit_forward.1} parent=1 // pred_region
      _
    $region5: #{vit_forward.1} parent=1 // pred_fallthru
      _
    // Predicated region
    $region6: #{vit_forward.1} parent=1 // pred_check
      _
    $region7: #{vit_forward.1} parent=1 // pred_check_branch
      %16 = sbr.rel (0) target = $region9
    $region8: #{vit_forward.1} parent=1 // pred_region
      _
    $region9: #{vit_forward.1} parent=1 // pred_fallthru
      _
    // Predicated region
    $region10: #{vit_forward.1} parent=1 // pred_check
      _
    $region11: #{vit_forward.1} parent=1 // pred_check_branch
      %18 = sbr.rel (0) target = $region13
    $region12: #{vit_forward.1} parent=1 // pred_region
      _
    $region13: #{vit_forward.1} parent=1 // pred_fallthru
      _
    // Predicated region
    $region14: #{vit_forward.1} parent=1 // pred_check
      _
    $region15: #{vit_forward.1} parent=1 // pred_check_branch
      %20 = sbr.rel (0) target = $region17
    $region16: #{vit_forward.1} parent=1 // pred_region
      _
    $region17: #{vit_forward.1} parent=1 // pred_fallthru
      _
    // Predicated region
    $region18: #{vit_forward.1} parent=1 // pred_check
      _
    $region19: #{vit_forward.1} parent=1 // pred_check_branch
      %22 = sbr.rel (0) target = $region21
    $region20: #{vit_forward.1} parent=1 // pred_region
      _
    $region21: #{vit_forward.1} parent=1 // pred_fallthru
      _
    // Predicated region
    $region22: #{vit_forward.1} parent=1 // pred_check
      _
    $region23: #{vit_forward.1} parent=1 // pred_check_branch
      %24 = sbr.rel (0) target = $region25
    $region24: #{vit_forward.1} parent=1 // pred_region
      _
    $region25: #{vit_forward.1} parent=1 // pred_fallthru
      _
    // Predicated region
    $region26: #{vit_forward.1} parent=1 // pred_check
      _
    $region27: #{vit_forward.1} parent=1 // pred_check_branch
      %26 = sbr.rel (0) target = $region29
    $region28: #{vit_forward.1} parent=1 // pred_region
      _
    $region29: #{vit_forward.1} parent=1 // pred_fallthru
      _
    %v27 = vld [vmem:[%s0] sm:$0xff]
    %v28 = vld [vmem:[%s0 + $0x8] sm:$0xff]
    %v29 = vld [vmem:[%s0 + $0x10] sm:$0xff]
    %v30 = vld [vmem:[%s0 + $0x18] sm:$0xff]
    %v31 = vld [vmem:[%s0 + $0x20] sm:$0xff]
    %v32 = vld [vmem:[%s0 + $0x28] sm:$0xff]
    %v33 = vld [vmem:[%s0 + $0x30] sm:$0xff]
    %v34 = vld [vmem:[%s0 + $0x38] sm:$0xff]
    %v35 = vld [vmem:[%s2] sm:$0xff]
    %v36 = vld [vmem:[%s2 + $0x8] sm:$0xff]
    %v37 = vld [vmem:[%s2 + $0x10] sm:$0xff]
    %v38 = vld [vmem:[%s2 + $0x18] sm:$0xff]
    %v39 = vld [vmem:[%s2 + $0x20] sm:$0xff]
    %v40 = vld [vmem:[%s2 + $0x28] sm:$0xff]
    %v41 = vld [vmem:[%s2 + $0x30] sm:$0xff]
    %v42 = vld [vmem:[%s2 + $0x38] sm:$0xff]
    %v43 = vld [vmem:[%s1] sm:$0xff]
    %v44 = vld [vmem:[%s1 + $0x8] sm:$0xff]
    %v45 = vld [vmem:[%s1 + $0x10] sm:$0xff]
    %v46 = vld [vmem:[%s1 + $0x18] sm:$0xff]
    %v47 = vld [vmem:[%s1 + $0x20] sm:$0xff]
    %v48 = vld [vmem:[%s1 + $0x28] sm:$0xff]
    %v49 = vld [vmem:[%s1 + $0x30] sm:$0xff]
    %v50 = vld [vmem:[%s1 + $0x38] sm:$0xff]
    %vm51 = vcmask 523264
    %v53 = vsel %vm51, %v27, 0
    %v56 = vsel %vm51, %v28, 0
    %v59 = vsel %vm51, %v29, 0
    %v62 = vsel %vm51, %v30, 0
    %v65 = vsel %vm51, %v31, 0
    %v68 = vsel %vm51, %v32, 0
    %v71 = vsel %vm51, %v33, 0
    %v74 = vsel %vm51, %v34, 0
    %76 = vmatprep.subr.mxu0 0.0
    %77 = vmatpush1.msra.mxu0 0.0
    %78 = vmatprep.subr.mxu0 0.0
    %79 = vmatpush1.msra.mxu0 0.0
    %80 = vmatprep.subr.mxu0 0.0
    %81 = vmatpush1.msra.mxu0 0.0
    %82 = vmatprep.subr.mxu0 0.0
    %83 = vmatpush1.msra.mxu0 0.0
    %84 = vmatprep.subr.mxu0 0.0
    %85 = vmatpush1.msra.mxu0 0.0
    %86 = vmatprep.subr.mxu0 0.0
    %87 = vmatpush1.msra.mxu0 0.0
    %88 = vmatprep.subr.mxu0 0.0
    %89 = vmatpush1.msra.mxu0 0.0
    %90 = vmatprep.subr.mxu0 0.0
    %91 = vmatpush1.msra.mxu0 0.0
    %92 = vmatprep.subr.mxu0 0.0
    %93 = vmatpush1.msra.mxu0 %v42
    %94 = vmatprep.subr.mxu0 0.0
    %95 = vmatpush1.msra.mxu0 %v41
    %96 = vmatprep.subr.mxu0 0.0
    %97 = vmatpush1.msra.mxu0 %v40
    %98 = vmatprep.subr.mxu0 0.0
    %99 = vmatpush1.msra.mxu0 %v39
    %100 = vmatprep.subr.mxu0 0.0
    %101 = vmatpush1.msra.mxu0 %v38
    %102 = vmatprep.subr.mxu0 0.0
    %103 = vmatpush1.msra.mxu0 %v37
    %104 = vmatprep.subr.mxu0 0.0
    %105 = vmatpush1.msra.mxu0 %v36
    %106 = vmatprep.subr.mxu0 0.0
    %107 = vmatpush1.msra.mxu0 %v35
    %108 = vmatprep.subr.mxu0 0.0
    %109 = vmatpush2.msra.mxu0 0.0
    %110 = vmatprep.subr.mxu0 0.0
    %111 = vmatpush2.msra.mxu0 0.0
    %112 = vmatprep.subr.mxu0 0.0
    %113 = vmatpush2.msra.mxu0 0.0
    %114 = vmatprep.subr.mxu0 0.0
    %115 = vmatpush2.msra.mxu0 0.0
    %116 = vmatprep.subr.mxu0 0.0
    %117 = vmatpush2.msra.mxu0 0.0
    %118 = vmatprep.subr.mxu0 0.0
    %119 = vmatpush2.msra.mxu0 0.0
    %120 = vmatprep.subr.mxu0 0.0
    %121 = vmatpush2.msra.mxu0 0.0
    %122 = vmatprep.subr.mxu0 0.0
    %123 = vmatpush2.msra.mxu0 0.0
    %124 = vmatprep.subr.mxu0 0.0
    %125 = vmatpush2.msra.mxu0 0.0
    %126 = vmatprep.subr.mxu0 0.0
    %127 = vmatpush2.msra.mxu0 0.0
    %128 = vmatprep.subr.mxu0 0.0
    %129 = vmatpush2.msra.mxu0 0.0
    %130 = vmatprep.subr.mxu0 0.0
    %131 = vmatpush2.msra.mxu0 0.0
    %132 = vmatprep.subr.mxu0 0.0
    %133 = vmatpush2.msra.mxu0 0.0
    %134 = vmatprep.subr.mxu0 0.0
    %135 = vmatpush2.msra.mxu0 0.0
    %136 = vmatprep.subr.mxu0 0.0
    %137 = vmatpush2.msra.mxu0 0.0
    %138 = vmatprep.subr.mxu0 0.0
    %139 = vmatpush2.msra.mxu0 0.0
    %140 = vmatprep.mubr.f32.mxu0 0.0
    %141 = vmatmul.mubr.f32.gmra.mxu0 %v53
    %v142 = vpop.f32.mrf.mxu0
    %v143 = vadd.f32 %v43, %v142
    %v144 = vpop.f32.mrf.mxu0
    %145 = vmatprep.mubr.f32.mxu0 0.0
    %146 = vmatmul.mubr.f32.gmra.mxu0 %v56
    %v147 = vpop.f32.mrf.mxu0
    %v148 = vadd.f32 %v44, %v147
    %v149 = vpop.f32.mrf.mxu0
    %150 = vmatprep.mubr.f32.mxu0 0.0
    %151 = vmatmul.mubr.f32.gmra.mxu0 %v59
    %v152 = vpop.f32.mrf.mxu0
    %v153 = vadd.f32 %v45, %v152
    %v154 = vpop.f32.mrf.mxu0
    %155 = vmatprep.mubr.f32.mxu0 0.0
    %156 = vmatmul.mubr.f32.gmra.mxu0 %v62
    %v157 = vpop.f32.mrf.mxu0
    %v158 = vadd.f32 %v46, %v157
    %v159 = vpop.f32.mrf.mxu0
    %160 = vmatprep.mubr.f32.mxu0 0.0
    %161 = vmatmul.mubr.f32.gmra.mxu0 %v65
    %v162 = vpop.f32.mrf.mxu0
    %v163 = vadd.f32 %v47, %v162
    %v164 = vpop.f32.mrf.mxu0
    %165 = vmatprep.mubr.f32.mxu0 0.0
    %166 = vmatmul.mubr.f32.gmra.mxu0 %v68
    %v167 = vpop.f32.mrf.mxu0
    %v168 = vadd.f32 %v48, %v167
    %v169 = vpop.f32.mrf.mxu0
    %170 = vmatprep.mubr.f32.mxu0 0.0
    %171 = vmatmul.mubr.f32.gmra.mxu0 %v71
    %v172 = vpop.f32.mrf.mxu0
    %v173 = vadd.f32 %v49, %v172
    %v174 = vpop.f32.mrf.mxu0
    %175 = vmatprep.mubr.f32.mxu0 0.0
    %176 = vmatmul.mubr.f32.gmra.mxu0 %v74
    %v177 = vpop.f32.mrf.mxu0
    %v178 = vadd.f32 %v50, %v177
    %v179 = vpop.f32.mrf.mxu0
    %180 = vdwg.mxu0
    %v181 = vlaneseq
    %v182 = vand.u32 %v181, 127
    %vm183 = vcmp.lt.s32.totalorder %v182, 17
    %v184 = vsel %vm183, 0.0, -1e+30
    %v185 = vld [vmem:[%s3] sm:$0xff]
    %v186 = vld [vmem:[%s3 + $0x18] sm:$0xff]
    %v187 = vld [vmem:[%s3 + $0x30] sm:$0xff]
    %v188 = vld [vmem:[%s3 + $0x48] sm:$0xff]
    %v189 = vld [vmem:[%s3 + $0x8] sm:$0xff]
    %v190 = vld [vmem:[%s3 + $0x20] sm:$0xff]
    %v191 = vld [vmem:[%s3 + $0x38] sm:$0xff]
    %v192 = vld [vmem:[%s3 + $0x50] sm:$0xff]
    %v193 = vld [vmem:[%s3 + $0x10] sm:$0xff]
    %v194 = vld [vmem:[%s3 + $0x28] sm:$0xff]
    %v195 = vld [vmem:[%s3 + $0x40] sm:$0xff]
    %v196 = vld [vmem:[%s3 + $0x58] sm:$0xff]
    %v197 = vld [vmem:[%s4] sm:$0xff]
    %v198 = vld [vmem:[%s4 + $0x8] sm:$0xff]
    %v199 = vld [vmem:[%s4 + $0x10] sm:$0xff]
    %v200 = vld [vmem:[%s4 + $0x18] sm:$0xff]
    %v201 = vld [vmem:[%s4 + $0x20] sm:$0xff]
    %v202 = vld [vmem:[%s4 + $0x28] sm:$0xff]
    %v203 = vld [vmem:[%s4 + $0x30] sm:$0xff]
    %v204 = vld [vmem:[%s4 + $0x38] sm:$0xff]
    %v205 = vld [vmem:[%s5] sm:$0xff]
    %vm206 = vcmask 261120
    %v207 = vsel %vm206, %v143, 0.0
    %208 = vadd.xlane.f32.xlu0 %v207
    %v209 = vpop.xlane.xlu0 %208
    %v210 = vsel %vm206, %v148, 0.0
    %211 = vadd.xlane.f32.xlu0 %v210
    %v212 = vpop.xlane.xlu0 %211
    %v213 = vsel %vm206, %v153, 0.0
    %214 = vadd.xlane.f32.xlu0 %v213
    %v215 = vpop.xlane.xlu0 %214
    %v216 = vsel %vm206, %v158, 0.0
    %217 = vadd.xlane.f32.xlu0 %v216
    %v218 = vpop.xlane.xlu0 %217
    %v219 = vsel %vm206, %v163, 0.0
    %220 = vadd.xlane.f32.xlu0 %v219
    %v221 = vpop.xlane.xlu0 %220
    %v222 = vsel %vm206, %v168, 0.0
    %223 = vadd.xlane.f32.xlu0 %v222
    %v224 = vpop.xlane.xlu0 %223
    %v225 = vsel %vm206, %v173, 0.0
    %226 = vadd.xlane.f32.xlu0 %v225
    %v227 = vpop.xlane.xlu0 %226
    %v228 = vsel %vm206, %v178, 0.0
    %229 = vadd.xlane.f32.xlu0 %v228
    %v230 = vpop.xlane.xlu0 %229
    %v231 = vrcp.pop 32.0
    %v232 = vmul.f32 %v209, %v231
    %v233 = vmul.f32 %v212, %v231
    %v234 = vmul.f32 %v215, %v231
    %v235 = vmul.f32 %v218, %v231
    %v236 = vmul.f32 %v221, %v231
    %v237 = vmul.f32 %v224, %v231
    %v238 = vmul.f32 %v227, %v231
    %v239 = vmul.f32 %v230, %v231
    %v240 = vsub.f32 %v143, %v232
    %v241 = vsub.f32 %v148, %v233
    %v242 = vsub.f32 %v153, %v234
    %v243 = vsub.f32 %v158, %v235
    %v244 = vsub.f32 %v163, %v236
    %v245 = vsub.f32 %v168, %v237
    %v246 = vsub.f32 %v173, %v238
    %v247 = vsub.f32 %v178, %v239
    %v248 = vmul.f32 %v240, %v240
    %v249 = vmul.f32 %v241, %v241
    %v250 = vmul.f32 %v242, %v242
    %v251 = vmul.f32 %v243, %v243
    %v252 = vmul.f32 %v244, %v244
    %v253 = vmul.f32 %v245, %v245
    %v254 = vmul.f32 %v246, %v246
    %v255 = vmul.f32 %v247, %v247
    %v256 = vsel %vm206, %v248, 0.0
    %257 = vadd.xlane.f32.xlu0 %v256
    %v258 = vpop.xlane.xlu0 %257
    %v259 = vsel %vm206, %v249, 0.0
    %260 = vadd.xlane.f32.xlu0 %v259
    %v261 = vpop.xlane.xlu0 %260
    %v262 = vsel %vm206, %v250, 0.0
    %263 = vadd.xlane.f32.xlu0 %v262
    %v264 = vpop.xlane.xlu0 %263
    %v265 = vsel %vm206, %v251, 0.0
    %266 = vadd.xlane.f32.xlu0 %v265
    %v267 = vpop.xlane.xlu0 %266
    %v268 = vsel %vm206, %v252, 0.0
    %269 = vadd.xlane.f32.xlu0 %v268
    %v270 = vpop.xlane.xlu0 %269
    %v271 = vsel %vm206, %v253, 0.0
    %272 = vadd.xlane.f32.xlu0 %v271
    %v273 = vpop.xlane.xlu0 %272
    %v274 = vsel %vm206, %v254, 0.0
    %275 = vadd.xlane.f32.xlu0 %v274
    %v276 = vpop.xlane.xlu0 %275
    %v277 = vsel %vm206, %v255, 0.0
    %278 = vadd.xlane.f32.xlu0 %v277
    %v279 = vpop.xlane.xlu0 %278
    %v280 = vmul.f32 %v258, %v231
    %v281 = vmul.f32 %v261, %v231
    %v282 = vmul.f32 %v264, %v231
    %v283 = vmul.f32 %v267, %v231
    %v284 = vmul.f32 %v270, %v231
    %v285 = vmul.f32 %v273, %v231
    %v286 = vmul.f32 %v276, %v231
    %v287 = vmul.f32 %v279, %v231
    %v288 = vadd.f32 %v280, 1e-12
    %v289 = vadd.f32 %v281, 1e-12
    %v290 = vadd.f32 %v282, 1e-12
    %v291 = vadd.f32 %v283, 1e-12
    %v292 = vadd.f32 %v284, 1e-12
    %v293 = vadd.f32 %v285, 1e-12
    %v294 = vadd.f32 %v286, 1e-12
    %v295 = vadd.f32 %v287, 1e-12
    %v296 = vrsqrt.pop %v288
    %v297 = vrsqrt.pop %v289
    %v298 = vrsqrt.pop %v290
    %v299 = vrsqrt.pop %v291
    %v300 = vrsqrt.pop %v292
    %v301 = vrsqrt.pop %v293
    %v302 = vrsqrt.pop %v294
    %v303 = vrsqrt.pop %v295
    %v304 = vmul.f32 %v240, %v296
    %v305 = vmul.f32 %v241, %v297
    %v306 = vmul.f32 %v242, %v298
    %v307 = vmul.f32 %v243, %v299
    %v308 = vmul.f32 %v244, %v300
    %v309 = vmul.f32 %v245, %v301
    %v310 = vmul.f32 %v246, %v302
    %v311 = vmul.f32 %v247, %v303
    %v312 = vlaneseq
    %v313 = vshrl.u32 %v312, 7
    %v314 = vsub.s32 0, %v313
    %v315 = vrot.slane %v205, %v314
    %v316 = vmul.f32 %v304, %v315
    %v317 = vmul.f32 %v305, %v315
    %v318 = vmul.f32 %v306, %v315
    %v319 = vmul.f32 %v307, %v315
    %v320 = vmul.f32 %v308, %v315
    %v321 = vmul.f32 %v309, %v315
    %v322 = vmul.f32 %v310, %v315
    %v323 = vmul.f32 %v311, %v315
    %v324 = vlaneseq
    %v325 = vshrl.u32 %v324, 7
    %v326 = vsub.s32 1, %v325
    %v327 = vrot.slane %v205, %v326
    %v328 = vadd.f32 %v316, %v327
    %v329 = vadd.f32 %v317, %v327
    %v330 = vadd.f32 %v318, %v327
    %v331 = vadd.f32 %v319, %v327
    %v332 = vadd.f32 %v320, %v327
    %v333 = vadd.f32 %v321, %v327
    %v334 = vadd.f32 %v322, %v327
    %v335 = vadd.f32 %v323, %v327
    %v336 = vlaneseq
    %v337 = vshrl.u32 %v336, 7
    %v338 = vsub.s32 2, %v337
    %v339 = vrot.slane %v205, %v338
    %v341 = vsel %vm206, %v328, 0
    %v344 = vsel %vm206, %v329, 0
    %v347 = vsel %vm206, %v330, 0
    %v350 = vsel %vm206, %v331, 0
    %v353 = vsel %vm206, %v332, 0
    %v356 = vsel %vm206, %v333, 0
    %v359 = vsel %vm206, %v334, 0
    %v362 = vsel %vm206, %v335, 0
    %364 = vmatprep.subr.mxu0 0.0
    %365 = vmatpush1.msra.mxu0 0.0
    %366 = vmatprep.subr.mxu0 0.0
    %367 = vmatpush1.msra.mxu0 0.0
    %368 = vmatprep.subr.mxu0 0.0
    %369 = vmatpush1.msra.mxu0 0.0
    %370 = vmatprep.subr.mxu0 0.0
    %371 = vmatpush1.msra.mxu0 0.0
    %372 = vmatprep.subr.mxu0 0.0
    %373 = vmatpush1.msra.mxu0 0.0
    %374 = vmatprep.subr.mxu0 0.0
    %375 = vmatpush1.msra.mxu0 0.0
    %376 = vmatprep.subr.mxu0 0.0
    %377 = vmatpush1.msra.mxu0 0.0
    %378 = vmatprep.subr.mxu0 0.0
    %379 = vmatpush1.msra.mxu0 0.0
    %380 = vmatprep.subr.mxu0 0.0
    %381 = vmatpush1.msra.mxu0 0.0
    %382 = vmatprep.subr.mxu0 0.0
    %383 = vmatpush1.msra.mxu0 0.0
    %384 = vmatprep.subr.mxu0 0.0
    %385 = vmatpush1.msra.mxu0 0.0
    %386 = vmatprep.subr.mxu0 0.0
    %387 = vmatpush1.msra.mxu0 0.0
    %388 = vmatprep.subr.mxu0 0.0
    %389 = vmatpush1.msra.mxu0 %v188
    %390 = vmatprep.subr.mxu0 0.0
    %391 = vmatpush1.msra.mxu0 %v187
    %392 = vmatprep.subr.mxu0 0.0
    %393 = vmatpush1.msra.mxu0 %v186
    %394 = vmatprep.subr.mxu0 0.0
    %395 = vmatpush1.msra.mxu0 %v185
    %396 = vmatprep.subr.mxu0 0.0
    %397 = vmatpush2.msra.mxu0 0.0
    %398 = vmatprep.subr.mxu0 0.0
    %399 = vmatpush2.msra.mxu0 0.0
    %400 = vmatprep.subr.mxu0 0.0
    %401 = vmatpush2.msra.mxu0 0.0
    %402 = vmatprep.subr.mxu0 0.0
    %403 = vmatpush2.msra.mxu0 0.0
    %404 = vmatprep.subr.mxu0 0.0
    %405 = vmatpush2.msra.mxu0 0.0
    %406 = vmatprep.subr.mxu0 0.0
    %407 = vmatpush2.msra.mxu0 0.0
    %408 = vmatprep.subr.mxu0 0.0
    %409 = vmatpush2.msra.mxu0 0.0
    %410 = vmatprep.subr.mxu0 0.0
    %411 = vmatpush2.msra.mxu0 0.0
    %412 = vmatprep.subr.mxu0 0.0
    %413 = vmatpush2.msra.mxu0 0.0
    %414 = vmatprep.subr.mxu0 0.0
    %415 = vmatpush2.msra.mxu0 0.0
    %416 = vmatprep.subr.mxu0 0.0
    %417 = vmatpush2.msra.mxu0 0.0
    %418 = vmatprep.subr.mxu0 0.0
    %419 = vmatpush2.msra.mxu0 0.0
    %420 = vmatprep.subr.mxu0 0.0
    %421 = vmatpush2.msra.mxu0 0.0
    %422 = vmatprep.subr.mxu0 0.0
    %423 = vmatpush2.msra.mxu0 0.0
    %424 = vmatprep.subr.mxu0 0.0
    %425 = vmatpush2.msra.mxu0 0.0
    %426 = vmatprep.subr.mxu0 0.0
    %427 = vmatpush2.msra.mxu0 0.0
    %428 = vmatprep.mubr.f32.mxu0 0.0
    %429 = vmatmul.mubr.f32.gmra.mxu0 %v341
    %v430 = vpop.f32.mrf.mxu0
    %v431 = vadd.f32 %v339, %v430
    %v432 = vpop.f32.mrf.mxu0
    %433 = vmatprep.mubr.f32.mxu0 0.0
    %434 = vmatmul.mubr.f32.gmra.mxu0 %v344
    %v435 = vpop.f32.mrf.mxu0
    %v436 = vadd.f32 %v339, %v435
    %v437 = vpop.f32.mrf.mxu0
    %438 = vmatprep.mubr.f32.mxu0 0.0
    %439 = vmatmul.mubr.f32.gmra.mxu0 %v347
    %v440 = vpop.f32.mrf.mxu0
    %v441 = vadd.f32 %v339, %v440
    %v442 = vpop.f32.mrf.mxu0
    %443 = vmatprep.mubr.f32.mxu0 0.0
    %444 = vmatmul.mubr.f32.gmra.mxu0 %v350
    %v445 = vpop.f32.mrf.mxu0
    %v446 = vadd.f32 %v339, %v445
    %v447 = vpop.f32.mrf.mxu0
    %448 = vmatprep.mubr.f32.mxu0 0.0
    %449 = vmatmul.mubr.f32.gmra.mxu0 %v353
    %v450 = vpop.f32.mrf.mxu0
    %v451 = vadd.f32 %v339, %v450
    %v452 = vpop.f32.mrf.mxu0
    %453 = vmatprep.mubr.f32.mxu0 0.0
    %454 = vmatmul.mubr.f32.gmra.mxu0 %v356
    %v455 = vpop.f32.mrf.mxu0
    %v456 = vadd.f32 %v339, %v455
    %v457 = vpop.f32.mrf.mxu0
    %458 = vmatprep.mubr.f32.mxu0 0.0
    %459 = vmatmul.mubr.f32.gmra.mxu0 %v359
    %v460 = vpop.f32.mrf.mxu0
    %v461 = vadd.f32 %v339, %v460
    %v462 = vpop.f32.mrf.mxu0
    %463 = vmatprep.mubr.f32.mxu0 0.0
    %464 = vmatmul.mubr.f32.gmra.mxu0 %v362
    %v465 = vpop.f32.mrf.mxu0
    %v466 = vadd.f32 %v339, %v465
    %v467 = vpop.f32.mrf.mxu0
    %468 = vdwg.mxu0
    %473 = vrot.lane.b32.xlu0 %v431, 96
    %v474 = vpop.permute.xlu0 %473
    %475 = vrot.lane.b32.xlu0 %v436, 96
    %v476 = vpop.permute.xlu0 %475
    %477 = vrot.lane.b32.xlu0 %v441, 96
    %v478 = vpop.permute.xlu0 %477
    %479 = vrot.lane.b32.xlu0 %v446, 96
    %v480 = vpop.permute.xlu0 %479
    %vm481 = vcmask 130048
    %v482 = vsel %vm481, %v431, 0
    %v484 = vsel %vm481, %v436, 0
    %v486 = vsel %vm481, %v441, 0
    %v488 = vsel %vm481, %v446, 0
    %v490 = vsel %vm481, %v474, 0
    %v492 = vsel %vm481, %v476, 0
    %v494 = vsel %vm481, %v478, 0
    %v496 = vsel %vm481, %v480, 0
    %498 = vmatprep.subr.mxu0 0.0
    %499 = vmatpush1.xpose.msra.mxu0 0.0
    %500 = vmatprep.subr.mxu0 0.0
    %501 = vmatpush1.xpose.msra.mxu0 0.0
    %502 = vmatprep.subr.mxu0 0.0
    %503 = vmatpush1.xpose.msra.mxu0 0.0
    %504 = vmatprep.subr.mxu0 0.0
    %505 = vmatpush1.xpose.msra.mxu0 0.0
    %506 = vmatprep.subr.mxu0 0.0
    %507 = vmatpush1.xpose.msra.mxu0 0.0
    %508 = vmatprep.subr.mxu0 0.0
    %509 = vmatpush1.xpose.msra.mxu0 0.0
    %510 = vmatprep.subr.mxu0 0.0
    %511 = vmatpush1.xpose.msra.mxu0 0.0
    %512 = vmatprep.subr.mxu0 0.0
    %513 = vmatpush1.xpose.msra.mxu0 0.0
    %514 = vmatprep.subr.mxu0 0.0
    %515 = vmatpush1.xpose.msra.mxu0 0.0
    %516 = vmatprep.subr.mxu0 0.0
    %517 = vmatpush1.xpose.msra.mxu0 0.0
    %518 = vmatprep.subr.mxu0 0.0
    %519 = vmatpush1.xpose.msra.mxu0 0.0
    %520 = vmatprep.subr.mxu0 0.0
    %521 = vmatpush1.xpose.msra.mxu0 0.0
    %522 = vmatprep.subr.mxu0 0.0
    %523 = vmatpush1.xpose.msra.mxu0 %v496
    %524 = vmatprep.subr.mxu0 0.0
    %525 = vmatpush1.xpose.msra.mxu0 %v494
    %526 = vmatprep.subr.mxu0 0.0
    %527 = vmatpush1.xpose.msra.mxu0 %v492
    %528 = vmatprep.subr.mxu0 0.0
    %529 = vmatpush1.xpose.msra.mxu0 %v490
    %530 = vmatprep.subr.mxu0 0.0
    %531 = vmatpush2.xpose.msra.mxu0 0.0
    %532 = vmatprep.subr.mxu0 0.0
    %533 = vmatpush2.xpose.msra.mxu0 0.0
    %534 = vmatprep.subr.mxu0 0.0
    %535 = vmatpush2.xpose.msra.mxu0 0.0
    %536 = vmatprep.subr.mxu0 0.0
    %537 = vmatpush2.xpose.msra.mxu0 0.0
    %538 = vmatprep.subr.mxu0 0.0
    %539 = vmatpush2.xpose.msra.mxu0 0.0
    %540 = vmatprep.subr.mxu0 0.0
    %541 = vmatpush2.xpose.msra.mxu0 0.0
    %542 = vmatprep.subr.mxu0 0.0
    %543 = vmatpush2.xpose.msra.mxu0 0.0
    %544 = vmatprep.subr.mxu0 0.0
    %545 = vmatpush2.xpose.msra.mxu0 0.0
    %546 = vmatprep.subr.mxu0 0.0
    %547 = vmatpush2.xpose.msra.mxu0 0.0
    %548 = vmatprep.subr.mxu0 0.0
    %549 = vmatpush2.xpose.msra.mxu0 0.0
    %550 = vmatprep.subr.mxu0 0.0
    %551 = vmatpush2.xpose.msra.mxu0 0.0
    %552 = vmatprep.subr.mxu0 0.0
    %553 = vmatpush2.xpose.msra.mxu0 0.0
    %554 = vmatprep.subr.mxu0 0.0
    %555 = vmatpush2.xpose.msra.mxu0 0.0
    %556 = vmatprep.subr.mxu0 0.0
    %557 = vmatpush2.xpose.msra.mxu0 0.0
    %558 = vmatprep.subr.mxu0 0.0
    %559 = vmatpush2.xpose.msra.mxu0 0.0
    %560 = vmatprep.subr.mxu0 0.0
    %561 = vmatpush2.xpose.msra.mxu0 0.0
    %562 = vmatprep.mubr.f32.mxu0 0.0
    %563 = vmatmul.mubr.f32.gmra.mxu0 %v482
    %v564 = vpop.f32.mrf.mxu0
    %v565 = vadd.f32 %v184, %v564
    %v566 = vpop.f32.mrf.mxu0
    %567 = vmatprep.mubr.f32.mxu0 0.0
    %568 = vmatmul.mubr.f32.gmra.mxu0 %v484
    %v569 = vpop.f32.mrf.mxu0
    %v570 = vadd.f32 %v184, %v569
    %v571 = vpop.f32.mrf.mxu0
    %572 = vmatprep.mubr.f32.mxu0 0.0
    %573 = vmatmul.mubr.f32.gmra.mxu0 %v486
    %v574 = vpop.f32.mrf.mxu0
    %v575 = vadd.f32 %v184, %v574
    %v576 = vpop.f32.mrf.mxu0
    %577 = vmatprep.mubr.f32.mxu0 0.0
    %578 = vmatmul.mubr.f32.gmra.mxu0 %v488
    %v579 = vpop.f32.mrf.mxu0
    %v580 = vadd.f32 %v184, %v579
    %v581 = vpop.f32.mrf.mxu0
    %582 = vdwg.mxu0
    %v583 = vsel %vm206, %v565, -inf
    %584 = vmax.xlane.f32.xlu0 %v583
    %v585 = vpop.xlane.xlu0 %584
    %v586 = vsel %vm206, %v570, -inf
    %587 = vmax.xlane.f32.xlu0 %v586
    %v588 = vpop.xlane.xlu0 %587
    %v589 = vsel %vm206, %v575, -inf
    %590 = vmax.xlane.f32.xlu0 %v589
    %v591 = vpop.xlane.xlu0 %590
    %v592 = vsel %vm206, %v580, -inf
    %593 = vmax.xlane.f32.xlu0 %v592
    %v594 = vpop.xlane.xlu0 %593
    %v595 = vsub.f32 %v565, %v585
    %v596 = vsub.f32 %v570, %v588
    %v597 = vsub.f32 %v575, %v591
    %v598 = vsub.f32 %v580, %v594
    %v599 = vmul.f32 %v595, 1.442695
    %v600 = vpow.pop %v599
    %v601 = vmul.f32 %v596, 1.442695
    %v602 = vpow.pop %v601
    %v603 = vmul.f32 %v597, 1.442695
    %v604 = vpow.pop %v603
    %v605 = vmul.f32 %v598, 1.442695
    %v606 = vpow.pop %v605
    %v607 = vsel %vm206, %v600, 0.0
    %608 = vadd.xlane.f32.xlu0 %v607
    %v609 = vpop.xlane.xlu0 %608
    %v610 = vsel %vm206, %v602, 0.0
    %611 = vadd.xlane.f32.xlu0 %v610
    %v612 = vpop.xlane.xlu0 %611
    %v613 = vsel %vm206, %v604, 0.0
    %614 = vadd.xlane.f32.xlu0 %v613
    %v615 = vpop.xlane.xlu0 %614
    %v616 = vsel %vm206, %v606, 0.0
    %617 = vadd.xlane.f32.xlu0 %v616
    %v618 = vpop.xlane.xlu0 %617
    %619 = vrot.lane.b32.xlu0 %v431, 64
    %v620 = vpop.permute.xlu0 %619
    %621 = vrot.lane.b32.xlu0 %v436, 64
    %v622 = vpop.permute.xlu0 %621
    %623 = vrot.lane.b32.xlu0 %v441, 64
    %v624 = vpop.permute.xlu0 %623
    %625 = vrot.lane.b32.xlu0 %v446, 64
    %v626 = vpop.permute.xlu0 %625
    %v632 = vsel %vm206, %v600, 0
    %v635 = vsel %vm206, %v602, 0
    %v638 = vsel %vm206, %v604, 0
    %v641 = vsel %vm206, %v606, 0
    %643 = vmatprep.subr.mxu0 0.0
    %644 = vmatpush1.msra.mxu0 0.0
    %645 = vmatprep.subr.mxu0 0.0
    %646 = vmatpush1.msra.mxu0 0.0
    %647 = vmatprep.subr.mxu0 0.0
    %648 = vmatpush1.msra.mxu0 0.0
    %649 = vmatprep.subr.mxu0 0.0
    %650 = vmatpush1.msra.mxu0 0.0
    %651 = vmatprep.subr.mxu0 0.0
    %652 = vmatpush1.msra.mxu0 0.0
    %653 = vmatprep.subr.mxu0 0.0
    %654 = vmatpush1.msra.mxu0 0.0
    %655 = vmatprep.subr.mxu0 0.0
    %656 = vmatpush1.msra.mxu0 0.0
    %657 = vmatprep.subr.mxu0 0.0
    %658 = vmatpush1.msra.mxu0 0.0
    %659 = vmatprep.subr.mxu0 0.0
    %660 = vmatpush1.msra.mxu0 0.0
    %661 = vmatprep.subr.mxu0 0.0
    %662 = vmatpush1.msra.mxu0 0.0
    %663 = vmatprep.subr.mxu0 0.0
    %664 = vmatpush1.msra.mxu0 0.0
    %665 = vmatprep.subr.mxu0 0.0
    %666 = vmatpush1.msra.mxu0 0.0
    %667 = vmatprep.subr.mxu0 0.0
    %668 = vmatpush1.msra.mxu0 %v626
    %669 = vmatprep.subr.mxu0 0.0
    %670 = vmatpush1.msra.mxu0 %v624
    %671 = vmatprep.subr.mxu0 0.0
    %672 = vmatpush1.msra.mxu0 %v622
    %673 = vmatprep.subr.mxu0 0.0
    %674 = vmatpush1.msra.mxu0 %v620
    %675 = vmatprep.subr.mxu0 0.0
    %676 = vmatpush2.msra.mxu0 0.0
    %677 = vmatprep.subr.mxu0 0.0
    %678 = vmatpush2.msra.mxu0 0.0
    %679 = vmatprep.subr.mxu0 0.0
    %680 = vmatpush2.msra.mxu0 0.0
    %681 = vmatprep.subr.mxu0 0.0
    %682 = vmatpush2.msra.mxu0 0.0
    %683 = vmatprep.subr.mxu0 0.0
    %684 = vmatpush2.msra.mxu0 0.0
    %685 = vmatprep.subr.mxu0 0.0
    %686 = vmatpush2.msra.mxu0 0.0
    %687 = vmatprep.subr.mxu0 0.0
    %688 = vmatpush2.msra.mxu0 0.0
    %689 = vmatprep.subr.mxu0 0.0
    %690 = vmatpush2.msra.mxu0 0.0
    %691 = vmatprep.subr.mxu0 0.0
    %692 = vmatpush2.msra.mxu0 0.0
    %693 = vmatprep.subr.mxu0 0.0
    %694 = vmatpush2.msra.mxu0 0.0
    %695 = vmatprep.subr.mxu0 0.0
    %696 = vmatpush2.msra.mxu0 0.0
    %697 = vmatprep.subr.mxu0 0.0
    %698 = vmatpush2.msra.mxu0 0.0
    %699 = vmatprep.subr.mxu0 0.0
    %700 = vmatpush2.msra.mxu0 0.0
    %701 = vmatprep.subr.mxu0 0.0
    %702 = vmatpush2.msra.mxu0 0.0
    %703 = vmatprep.subr.mxu0 0.0
    %704 = vmatpush2.msra.mxu0 0.0
    %705 = vmatprep.subr.mxu0 0.0
    %706 = vmatpush2.msra.mxu0 0.0
    %707 = vmatprep.mubr.f32.mxu0 0.0
    %708 = vmatmul.mubr.f32.gmra.mxu0 %v632
    %v709 = vpop.f32.mrf.mxu0
    %v710 = vadd.f32 0.0, %v709
    %v711 = vpop.f32.mrf.mxu0
    %712 = vmatprep.mubr.f32.mxu0 0.0
    %713 = vmatmul.mubr.f32.gmra.mxu0 %v635
    %v714 = vpop.f32.mrf.mxu0
    %v715 = vadd.f32 0.0, %v714
    %v716 = vpop.f32.mrf.mxu0
    %717 = vmatprep.mubr.f32.mxu0 0.0
    %718 = vmatmul.mubr.f32.gmra.mxu0 %v638
    %v719 = vpop.f32.mrf.mxu0
    %v720 = vadd.f32 0.0, %v719
    %v721 = vpop.f32.mrf.mxu0
    %722 = vmatprep.mubr.f32.mxu0 0.0
    %723 = vmatmul.mubr.f32.gmra.mxu0 %v641
    %v724 = vpop.f32.mrf.mxu0
    %v725 = vadd.f32 0.0, %v724
    %v726 = vpop.f32.mrf.mxu0
    %727 = vdwg.mxu0
    %v728 = vrcp.pop %v609
    %v729 = vrcp.pop %v612
    %v730 = vrcp.pop %v615
    %v731 = vrcp.pop %v618
    %v732 = vmul.f32 %v710, %v728
    %v733 = vmul.f32 %v715, %v729
    %v734 = vmul.f32 %v720, %v730
    %v735 = vmul.f32 %v725, %v731
    %740 = vrot.lane.b32.xlu0 %v451, 96
    %v741 = vpop.permute.xlu0 %740
    %742 = vrot.lane.b32.xlu0 %v456, 96
    %v743 = vpop.permute.xlu0 %742
    %744 = vrot.lane.b32.xlu0 %v461, 96
    %v745 = vpop.permute.xlu0 %744
    %746 = vrot.lane.b32.xlu0 %v466, 96
    %v747 = vpop.permute.xlu0 %746
    %v748 = vsel %vm481, %v451, 0
    %v750 = vsel %vm481, %v456, 0
    %v752 = vsel %vm481, %v461, 0
    %v754 = vsel %vm481, %v466, 0
    %v756 = vsel %vm481, %v741, 0
    %v758 = vsel %vm481, %v743, 0
    %v760 = vsel %vm481, %v745, 0
    %v762 = vsel %vm481, %v747, 0
    %764 = vmatprep.subr.mxu0 0.0
    %765 = vmatpush1.xpose.msra.mxu0 0.0
    %766 = vmatprep.subr.mxu0 0.0
    %767 = vmatpush1.xpose.msra.mxu0 0.0
    %768 = vmatprep.subr.mxu0 0.0
    %769 = vmatpush1.xpose.msra.mxu0 0.0
    %770 = vmatprep.subr.mxu0 0.0
    %771 = vmatpush1.xpose.msra.mxu0 0.0
    %772 = vmatprep.subr.mxu0 0.0
    %773 = vmatpush1.xpose.msra.mxu0 0.0
    %774 = vmatprep.subr.mxu0 0.0
    %775 = vmatpush1.xpose.msra.mxu0 0.0
    %776 = vmatprep.subr.mxu0 0.0
    %777 = vmatpush1.xpose.msra.mxu0 0.0
    %778 = vmatprep.subr.mxu0 0.0
    %779 = vmatpush1.xpose.msra.mxu0 0.0
    %780 = vmatprep.subr.mxu0 0.0
    %781 = vmatpush1.xpose.msra.mxu0 0.0
    %782 = vmatprep.subr.mxu0 0.0
    %783 = vmatpush1.xpose.msra.mxu0 0.0
    %784 = vmatprep.subr.mxu0 0.0
    %785 = vmatpush1.xpose.msra.mxu0 0.0
    %786 = vmatprep.subr.mxu0 0.0
    %787 = vmatpush1.xpose.msra.mxu0 0.0
    %788 = vmatprep.subr.mxu0 0.0
    %789 = vmatpush1.xpose.msra.mxu0 %v762
    %790 = vmatprep.subr.mxu0 0.0
    %791 = vmatpush1.xpose.msra.mxu0 %v760
    %792 = vmatprep.subr.mxu0 0.0
    %793 = vmatpush1.xpose.msra.mxu0 %v758
    %794 = vmatprep.subr.mxu0 0.0
    %795 = vmatpush1.xpose.msra.mxu0 %v756
    %796 = vmatprep.subr.mxu0 0.0
    %797 = vmatpush2.xpose.msra.mxu0 0.0
    %798 = vmatprep.subr.mxu0 0.0
    %799 = vmatpush2.xpose.msra.mxu0 0.0
    %800 = vmatprep.subr.mxu0 0.0
    %801 = vmatpush2.xpose.msra.mxu0 0.0
    %802 = vmatprep.subr.mxu0 0.0
    %803 = vmatpush2.xpose.msra.mxu0 0.0
    %804 = vmatprep.subr.mxu0 0.0
    %805 = vmatpush2.xpose.msra.mxu0 0.0
    %806 = vmatprep.subr.mxu0 0.0
    %807 = vmatpush2.xpose.msra.mxu0 0.0
    %808 = vmatprep.subr.mxu0 0.0
    %809 = vmatpush2.xpose.msra.mxu0 0.0
    %810 = vmatprep.subr.mxu0 0.0
    %811 = vmatpush2.xpose.msra.mxu0 0.0
    %812 = vmatprep.subr.mxu0 0.0
    %813 = vmatpush2.xpose.msra.mxu0 0.0
    %814 = vmatprep.subr.mxu0 0.0
    %815 = vmatpush2.xpose.msra.mxu0 0.0
    %816 = vmatprep.subr.mxu0 0.0
    %817 = vmatpush2.xpose.msra.mxu0 0.0
    %818 = vmatprep.subr.mxu0 0.0
    %819 = vmatpush2.xpose.msra.mxu0 0.0
    %820 = vmatprep.subr.mxu0 0.0
    %821 = vmatpush2.xpose.msra.mxu0 0.0
    %822 = vmatprep.subr.mxu0 0.0
    %823 = vmatpush2.xpose.msra.mxu0 0.0
    %824 = vmatprep.subr.mxu0 0.0
    %825 = vmatpush2.xpose.msra.mxu0 0.0
    %826 = vmatprep.subr.mxu0 0.0
    %827 = vmatpush2.xpose.msra.mxu0 0.0
    %828 = vmatprep.mubr.f32.mxu0 0.0
    %829 = vmatmul.mubr.f32.gmra.mxu0 %v748
    %v830 = vpop.f32.mrf.mxu0
    %v831 = vadd.f32 %v184, %v830
    %v832 = vpop.f32.mrf.mxu0
    %833 = vmatprep.mubr.f32.mxu0 0.0
    %834 = vmatmul.mubr.f32.gmra.mxu0 %v750
    %v835 = vpop.f32.mrf.mxu0
    %v836 = vadd.f32 %v184, %v835
    %v837 = vpop.f32.mrf.mxu0
    %838 = vmatprep.mubr.f32.mxu0 0.0
    %839 = vmatmul.mubr.f32.gmra.mxu0 %v752
    %v840 = vpop.f32.mrf.mxu0
    %v841 = vadd.f32 %v184, %v840
    %v842 = vpop.f32.mrf.mxu0
    %843 = vmatprep.mubr.f32.mxu0 0.0
    %844 = vmatmul.mubr.f32.gmra.mxu0 %v754
    %v845 = vpop.f32.mrf.mxu0
    %v846 = vadd.f32 %v184, %v845
    %v847 = vpop.f32.mrf.mxu0
    %848 = vdwg.mxu0
    %v849 = vsel %vm206, %v831, -inf
    %850 = vmax.xlane.f32.xlu0 %v849
    %v851 = vpop.xlane.xlu0 %850
    %v852 = vsel %vm206, %v836, -inf
    %853 = vmax.xlane.f32.xlu0 %v852
    %v854 = vpop.xlane.xlu0 %853
    %v855 = vsel %vm206, %v841, -inf
    %856 = vmax.xlane.f32.xlu0 %v855
    %v857 = vpop.xlane.xlu0 %856
    %v858 = vsel %vm206, %v846, -inf
    %859 = vmax.xlane.f32.xlu0 %v858
    %v860 = vpop.xlane.xlu0 %859
    %v861 = vsub.f32 %v831, %v851
    %v862 = vsub.f32 %v836, %v854
    %v863 = vsub.f32 %v841, %v857
    %v864 = vsub.f32 %v846, %v860
    %v865 = vmul.f32 %v861, 1.442695
    %v866 = vpow.pop %v865
    %v867 = vmul.f32 %v862, 1.442695
    %v868 = vpow.pop %v867
    %v869 = vmul.f32 %v863, 1.442695
    %v870 = vpow.pop %v869
    %v871 = vmul.f32 %v864, 1.442695
    %v872 = vpow.pop %v871
    %v873 = vsel %vm206, %v866, 0.0
    %874 = vadd.xlane.f32.xlu0 %v873
    %v875 = vpop.xlane.xlu0 %874
    %v876 = vsel %vm206, %v868, 0.0
    %877 = vadd.xlane.f32.xlu0 %v876
    %v878 = vpop.xlane.xlu0 %877
    %v879 = vsel %vm206, %v870, 0.0
    %880 = vadd.xlane.f32.xlu0 %v879
    %v881 = vpop.xlane.xlu0 %880
    %v882 = vsel %vm206, %v872, 0.0
    %883 = vadd.xlane.f32.xlu0 %v882
    %v884 = vpop.xlane.xlu0 %883
    %885 = vrot.lane.b32.xlu0 %v451, 64
    %v886 = vpop.permute.xlu0 %885
    %887 = vrot.lane.b32.xlu0 %v456, 64
    %v888 = vpop.permute.xlu0 %887
    %889 = vrot.lane.b32.xlu0 %v461, 64
    %v890 = vpop.permute.xlu0 %889
    %891 = vrot.lane.b32.xlu0 %v466, 64
    %v892 = vpop.permute.xlu0 %891
    %v898 = vsel %vm206, %v866, 0
    %v901 = vsel %vm206, %v868, 0
    %v904 = vsel %vm206, %v870, 0
    %v907 = vsel %vm206, %v872, 0
    %909 = vmatprep.subr.mxu0 0.0
    %910 = vmatpush1.msra.mxu0 0.0
    %911 = vmatprep.subr.mxu0 0.0
    %912 = vmatpush1.msra.mxu0 0.0
    %913 = vmatprep.subr.mxu0 0.0
    %914 = vmatpush1.msra.mxu0 0.0
    %915 = vmatprep.subr.mxu0 0.0
    %916 = vmatpush1.msra.mxu0 0.0
    %917 = vmatprep.subr.mxu0 0.0
    %918 = vmatpush1.msra.mxu0 0.0
    %919 = vmatprep.subr.mxu0 0.0
    %920 = vmatpush1.msra.mxu0 0.0
    %921 = vmatprep.subr.mxu0 0.0
    %922 = vmatpush1.msra.mxu0 0.0
    %923 = vmatprep.subr.mxu0 0.0
    %924 = vmatpush1.msra.mxu0 0.0
    %925 = vmatprep.subr.mxu0 0.0
    %926 = vmatpush1.msra.mxu0 0.0
    %927 = vmatprep.subr.mxu0 0.0
    %928 = vmatpush1.msra.mxu0 0.0
    %929 = vmatprep.subr.mxu0 0.0
    %930 = vmatpush1.msra.mxu0 0.0
    %931 = vmatprep.subr.mxu0 0.0
    %932 = vmatpush1.msra.mxu0 0.0
    %933 = vmatprep.subr.mxu0 0.0
    %934 = vmatpush1.msra.mxu0 %v892
    %935 = vmatprep.subr.mxu0 0.0
    %936 = vmatpush1.msra.mxu0 %v890
    %937 = vmatprep.subr.mxu0 0.0
    %938 = vmatpush1.msra.mxu0 %v888
    %939 = vmatprep.subr.mxu0 0.0
    %940 = vmatpush1.msra.mxu0 %v886
    %941 = vmatprep.subr.mxu0 0.0
    %942 = vmatpush2.msra.mxu0 0.0
    %943 = vmatprep.subr.mxu0 0.0
    %944 = vmatpush2.msra.mxu0 0.0
    %945 = vmatprep.subr.mxu0 0.0
    %946 = vmatpush2.msra.mxu0 0.0
    %947 = vmatprep.subr.mxu0 0.0
    %948 = vmatpush2.msra.mxu0 0.0
    %949 = vmatprep.subr.mxu0 0.0
    %950 = vmatpush2.msra.mxu0 0.0
    %951 = vmatprep.subr.mxu0 0.0
    %952 = vmatpush2.msra.mxu0 0.0
    %953 = vmatprep.subr.mxu0 0.0
    %954 = vmatpush2.msra.mxu0 0.0
    %955 = vmatprep.subr.mxu0 0.0
    %956 = vmatpush2.msra.mxu0 0.0
    %957 = vmatprep.subr.mxu0 0.0
    %958 = vmatpush2.msra.mxu0 0.0
    %959 = vmatprep.subr.mxu0 0.0
    %960 = vmatpush2.msra.mxu0 0.0
    %961 = vmatprep.subr.mxu0 0.0
    %962 = vmatpush2.msra.mxu0 0.0
    %963 = vmatprep.subr.mxu0 0.0
    %964 = vmatpush2.msra.mxu0 0.0
    %965 = vmatprep.subr.mxu0 0.0
    %966 = vmatpush2.msra.mxu0 0.0
    %967 = vmatprep.subr.mxu0 0.0
    %968 = vmatpush2.msra.mxu0 0.0
    %969 = vmatprep.subr.mxu0 0.0
    %970 = vmatpush2.msra.mxu0 0.0
    %971 = vmatprep.subr.mxu0 0.0
    %972 = vmatpush2.msra.mxu0 0.0
    %973 = vmatprep.mubr.f32.mxu0 0.0
    %974 = vmatmul.mubr.f32.gmra.mxu0 %v898
    %v975 = vpop.f32.mrf.mxu0
    %v976 = vadd.f32 0.0, %v975
    %v977 = vpop.f32.mrf.mxu0
    %978 = vmatprep.mubr.f32.mxu0 0.0
    %979 = vmatmul.mubr.f32.gmra.mxu0 %v901
    %v980 = vpop.f32.mrf.mxu0
    %v981 = vadd.f32 0.0, %v980
    %v982 = vpop.f32.mrf.mxu0
    %983 = vmatprep.mubr.f32.mxu0 0.0
    %984 = vmatmul.mubr.f32.gmra.mxu0 %v904
    %v985 = vpop.f32.mrf.mxu0
    %v986 = vadd.f32 0.0, %v985
    %v987 = vpop.f32.mrf.mxu0
    %988 = vmatprep.mubr.f32.mxu0 0.0
    %989 = vmatmul.mubr.f32.gmra.mxu0 %v907
    %v990 = vpop.f32.mrf.mxu0
    %v991 = vadd.f32 0.0, %v990
    %v992 = vpop.f32.mrf.mxu0
    %993 = vdwg.mxu0
    %v994 = vrcp.pop %v875
    %v995 = vrcp.pop %v878
    %v996 = vrcp.pop %v881
    %v997 = vrcp.pop %v884
    %v998 = vmul.f32 %v976, %v994
    %v999 = vmul.f32 %v981, %v995
    %v1000 = vmul.f32 %v986, %v996
    %v1001 = vmul.f32 %v991, %v997
    %1002 = vrot.lane.b32.xlu0 %v431, 112
    %v1003 = vpop.permute.xlu0 %1002
    %1004 = vrot.lane.b32.xlu0 %v436, 112
    %v1005 = vpop.permute.xlu0 %1004
    %1006 = vrot.lane.b32.xlu0 %v441, 112
    %v1007 = vpop.permute.xlu0 %1006
    %1008 = vrot.lane.b32.xlu0 %v446, 112
    %v1009 = vpop.permute.xlu0 %1008
    %1010 = vrot.lane.b32.xlu0 %v431, 80
    %v1011 = vpop.permute.xlu0 %1010
    %1012 = vrot.lane.b32.xlu0 %v436, 80
    %v1013 = vpop.permute.xlu0 %1012
    %1014 = vrot.lane.b32.xlu0 %v441, 80
    %v1015 = vpop.permute.xlu0 %1014
    %1016 = vrot.lane.b32.xlu0 %v446, 80
    %v1017 = vpop.permute.xlu0 %1016
    %v1018 = vsel %vm481, %v1003, 0
    %v1020 = vsel %vm481, %v1005, 0
    %v1022 = vsel %vm481, %v1007, 0
    %v1024 = vsel %vm481, %v1009, 0
    %v1026 = vsel %vm481, %v1011, 0
    %v1028 = vsel %vm481, %v1013, 0
    %v1030 = vsel %vm481, %v1015, 0
    %v1032 = vsel %vm481, %v1017, 0
    %1034 = vmatprep.subr.mxu0 0.0
    %1035 = vmatpush1.xpose.msra.mxu0 0.0
    %1036 = vmatprep.subr.mxu0 0.0
    %1037 = vmatpush1.xpose.msra.mxu0 0.0
    %1038 = vmatprep.subr.mxu0 0.0
    %1039 = vmatpush1.xpose.msra.mxu0 0.0
    %1040 = vmatprep.subr.mxu0 0.0
    %1041 = vmatpush1.xpose.msra.mxu0 0.0
    %1042 = vmatprep.subr.mxu0 0.0
    %1043 = vmatpush1.xpose.msra.mxu0 0.0
    %1044 = vmatprep.subr.mxu0 0.0
    %1045 = vmatpush1.xpose.msra.mxu0 0.0
    %1046 = vmatprep.subr.mxu0 0.0
    %1047 = vmatpush1.xpose.msra.mxu0 0.0
    %1048 = vmatprep.subr.mxu0 0.0
    %1049 = vmatpush1.xpose.msra.mxu0 0.0
    %1050 = vmatprep.subr.mxu0 0.0
    %1051 = vmatpush1.xpose.msra.mxu0 0.0
    %1052 = vmatprep.subr.mxu0 0.0
    %1053 = vmatpush1.xpose.msra.mxu0 0.0
    %1054 = vmatprep.subr.mxu0 0.0
    %1055 = vmatpush1.xpose.msra.mxu0 0.0
    %1056 = vmatprep.subr.mxu0 0.0
    %1057 = vmatpush1.xpose.msra.mxu0 0.0
    %1058 = vmatprep.subr.mxu0 0.0
    %1059 = vmatpush1.xpose.msra.mxu0 %v1032
    %1060 = vmatprep.subr.mxu0 0.0
    %1061 = vmatpush1.xpose.msra.mxu0 %v1030
    %1062 = vmatprep.subr.mxu0 0.0
    %1063 = vmatpush1.xpose.msra.mxu0 %v1028
    %1064 = vmatprep.subr.mxu0 0.0
    %1065 = vmatpush1.xpose.msra.mxu0 %v1026
    %1066 = vmatprep.subr.mxu0 0.0
    %1067 = vmatpush2.xpose.msra.mxu0 0.0
    %1068 = vmatprep.subr.mxu0 0.0
    %1069 = vmatpush2.xpose.msra.mxu0 0.0
    %1070 = vmatprep.subr.mxu0 0.0
    %1071 = vmatpush2.xpose.msra.mxu0 0.0
    %1072 = vmatprep.subr.mxu0 0.0
    %1073 = vmatpush2.xpose.msra.mxu0 0.0
    %1074 = vmatprep.subr.mxu0 0.0
    %1075 = vmatpush2.xpose.msra.mxu0 0.0
    %1076 = vmatprep.subr.mxu0 0.0
    %1077 = vmatpush2.xpose.msra.mxu0 0.0
    %1078 = vmatprep.subr.mxu0 0.0
    %1079 = vmatpush2.xpose.msra.mxu0 0.0
    %1080 = vmatprep.subr.mxu0 0.0
    %1081 = vmatpush2.xpose.msra.mxu0 0.0
    %1082 = vmatprep.subr.mxu0 0.0
    %1083 = vmatpush2.xpose.msra.mxu0 0.0
    %1084 = vmatprep.subr.mxu0 0.0
    %1085 = vmatpush2.xpose.msra.mxu0 0.0
    %1086 = vmatprep.subr.mxu0 0.0
    %1087 = vmatpush2.xpose.msra.mxu0 0.0
    %1088 = vmatprep.subr.mxu0 0.0
    %1089 = vmatpush2.xpose.msra.mxu0 0.0
    %1090 = vmatprep.subr.mxu0 0.0
    %1091 = vmatpush2.xpose.msra.mxu0 0.0
    %1092 = vmatprep.subr.mxu0 0.0
    %1093 = vmatpush2.xpose.msra.mxu0 0.0
    %1094 = vmatprep.subr.mxu0 0.0
    %1095 = vmatpush2.xpose.msra.mxu0 0.0
    %1096 = vmatprep.subr.mxu0 0.0
    %1097 = vmatpush2.xpose.msra.mxu0 0.0
    %1098 = vmatprep.mubr.f32.mxu0 0.0
    %1099 = vmatmul.mubr.f32.gmra.mxu0 %v1018
    %v1100 = vpop.f32.mrf.mxu0
    %v1101 = vadd.f32 %v184, %v1100
    %v1102 = vpop.f32.mrf.mxu0
    %1103 = vmatprep.mubr.f32.mxu0 0.0
    %1104 = vmatmul.mubr.f32.gmra.mxu0 %v1020
    %v1105 = vpop.f32.mrf.mxu0
    %v1106 = vadd.f32 %v184, %v1105
    %v1107 = vpop.f32.mrf.mxu0
    %1108 = vmatprep.mubr.f32.mxu0 0.0
    %1109 = vmatmul.mubr.f32.gmra.mxu0 %v1022
    %v1110 = vpop.f32.mrf.mxu0
    %v1111 = vadd.f32 %v184, %v1110
    %v1112 = vpop.f32.mrf.mxu0
    %1113 = vmatprep.mubr.f32.mxu0 0.0
    %1114 = vmatmul.mubr.f32.gmra.mxu0 %v1024
    %v1115 = vpop.f32.mrf.mxu0
    %v1116 = vadd.f32 %v184, %v1115
    %v1117 = vpop.f32.mrf.mxu0
    %1118 = vdwg.mxu0
    %v1119 = vsel %vm206, %v1101, -inf
    %1120 = vmax.xlane.f32.xlu0 %v1119
    %v1121 = vpop.xlane.xlu0 %1120
    %v1122 = vsel %vm206, %v1106, -inf
    %1123 = vmax.xlane.f32.xlu0 %v1122
    %v1124 = vpop.xlane.xlu0 %1123
    %v1125 = vsel %vm206, %v1111, -inf
    %1126 = vmax.xlane.f32.xlu0 %v1125
    %v1127 = vpop.xlane.xlu0 %1126
    %v1128 = vsel %vm206, %v1116, -inf
    %1129 = vmax.xlane.f32.xlu0 %v1128
    %v1130 = vpop.xlane.xlu0 %1129
    %v1131 = vsub.f32 %v1101, %v1121
    %v1132 = vsub.f32 %v1106, %v1124
    %v1133 = vsub.f32 %v1111, %v1127
    %v1134 = vsub.f32 %v1116, %v1130
    %v1135 = vmul.f32 %v1131, 1.442695
    %v1136 = vpow.pop %v1135
    %v1137 = vmul.f32 %v1132, 1.442695
    %v1138 = vpow.pop %v1137
    %v1139 = vmul.f32 %v1133, 1.442695
    %v1140 = vpow.pop %v1139
    %v1141 = vmul.f32 %v1134, 1.442695
    %v1142 = vpow.pop %v1141
    %v1143 = vsel %vm206, %v1136, 0.0
    %1144 = vadd.xlane.f32.xlu0 %v1143
    %v1145 = vpop.xlane.xlu0 %1144
    %v1146 = vsel %vm206, %v1138, 0.0
    %1147 = vadd.xlane.f32.xlu0 %v1146
    %v1148 = vpop.xlane.xlu0 %1147
    %v1149 = vsel %vm206, %v1140, 0.0
    %1150 = vadd.xlane.f32.xlu0 %v1149
    %v1151 = vpop.xlane.xlu0 %1150
    %v1152 = vsel %vm206, %v1142, 0.0
    %1153 = vadd.xlane.f32.xlu0 %v1152
    %v1154 = vpop.xlane.xlu0 %1153
    %1155 = vrot.lane.b32.xlu0 %v431, 48
    %v1156 = vpop.permute.xlu0 %1155
    %1157 = vrot.lane.b32.xlu0 %v436, 48
    %v1158 = vpop.permute.xlu0 %1157
    %1159 = vrot.lane.b32.xlu0 %v441, 48
    %v1160 = vpop.permute.xlu0 %1159
    %1161 = vrot.lane.b32.xlu0 %v446, 48
    %v1162 = vpop.permute.xlu0 %1161
    %v1168 = vsel %vm206, %v1136, 0
    %v1171 = vsel %vm206, %v1138, 0
    %v1174 = vsel %vm206, %v1140, 0
    %v1177 = vsel %vm206, %v1142, 0
    %1179 = vmatprep.subr.mxu0 0.0
    %1180 = vmatpush1.msra.mxu0 0.0
    %1181 = vmatprep.subr.mxu0 0.0
    %1182 = vmatpush1.msra.mxu0 0.0
    %1183 = vmatprep.subr.mxu0 0.0
    %1184 = vmatpush1.msra.mxu0 0.0
    %1185 = vmatprep.subr.mxu0 0.0
    %1186 = vmatpush1.msra.mxu0 0.0
    %1187 = vmatprep.subr.mxu0 0.0
    %1188 = vmatpush1.msra.mxu0 0.0
    %1189 = vmatprep.subr.mxu0 0.0
    %1190 = vmatpush1.msra.mxu0 0.0
    %1191 = vmatprep.subr.mxu0 0.0
    %1192 = vmatpush1.msra.mxu0 0.0
    %1193 = vmatprep.subr.mxu0 0.0
    %1194 = vmatpush1.msra.mxu0 0.0
    %1195 = vmatprep.subr.mxu0 0.0
    %1196 = vmatpush1.msra.mxu0 0.0
    %1197 = vmatprep.subr.mxu0 0.0
    %1198 = vmatpush1.msra.mxu0 0.0
    %1199 = vmatprep.subr.mxu0 0.0
    %1200 = vmatpush1.msra.mxu0 0.0
    %1201 = vmatprep.subr.mxu0 0.0
    %1202 = vmatpush1.msra.mxu0 0.0
    %1203 = vmatprep.subr.mxu0 0.0
    %1204 = vmatpush1.msra.mxu0 %v1162
    %1205 = vmatprep.subr.mxu0 0.0
    %1206 = vmatpush1.msra.mxu0 %v1160
    %1207 = vmatprep.subr.mxu0 0.0
    %1208 = vmatpush1.msra.mxu0 %v1158
    %1209 = vmatprep.subr.mxu0 0.0
    %1210 = vmatpush1.msra.mxu0 %v1156
    %1211 = vmatprep.subr.mxu0 0.0
    %1212 = vmatpush2.msra.mxu0 0.0
    %1213 = vmatprep.subr.mxu0 0.0
    %1214 = vmatpush2.msra.mxu0 0.0
    %1215 = vmatprep.subr.mxu0 0.0
    %1216 = vmatpush2.msra.mxu0 0.0
    %1217 = vmatprep.subr.mxu0 0.0
    %1218 = vmatpush2.msra.mxu0 0.0
    %1219 = vmatprep.subr.mxu0 0.0
    %1220 = vmatpush2.msra.mxu0 0.0
    %1221 = vmatprep.subr.mxu0 0.0
    %1222 = vmatpush2.msra.mxu0 0.0
    %1223 = vmatprep.subr.mxu0 0.0
    %1224 = vmatpush2.msra.mxu0 0.0
    %1225 = vmatprep.subr.mxu0 0.0
    %1226 = vmatpush2.msra.mxu0 0.0
    %1227 = vmatprep.subr.mxu0 0.0
    %1228 = vmatpush2.msra.mxu0 0.0
    %1229 = vmatprep.subr.mxu0 0.0
    %1230 = vmatpush2.msra.mxu0 0.0
    %1231 = vmatprep.subr.mxu0 0.0
    %1232 = vmatpush2.msra.mxu0 0.0
    %1233 = vmatprep.subr.mxu0 0.0
    %1234 = vmatpush2.msra.mxu0 0.0
    %1235 = vmatprep.subr.mxu0 0.0
    %1236 = vmatpush2.msra.mxu0 0.0
    %1237 = vmatprep.subr.mxu0 0.0
    %1238 = vmatpush2.msra.mxu0 0.0
    %1239 = vmatprep.subr.mxu0 0.0
    %1240 = vmatpush2.msra.mxu0 0.0
    %1241 = vmatprep.subr.mxu0 0.0
    %1242 = vmatpush2.msra.mxu0 0.0
    %1243 = vmatprep.mubr.f32.mxu0 0.0
    %1244 = vmatmul.mubr.f32.gmra.mxu0 %v1168
    %v1245 = vpop.f32.mrf.mxu0
    %v1246 = vadd.f32 0.0, %v1245
    %v1247 = vpop.f32.mrf.mxu0
    %1248 = vmatprep.mubr.f32.mxu0 0.0
    %1249 = vmatmul.mubr.f32.gmra.mxu0 %v1171
    %v1250 = vpop.f32.mrf.mxu0
    %v1251 = vadd.f32 0.0, %v1250
    %v1252 = vpop.f32.mrf.mxu0
    %1253 = vmatprep.mubr.f32.mxu0 0.0
    %1254 = vmatmul.mubr.f32.gmra.mxu0 %v1174
    %v1255 = vpop.f32.mrf.mxu0
    %v1256 = vadd.f32 0.0, %v1255
    %v1257 = vpop.f32.mrf.mxu0
    %1258 = vmatprep.mubr.f32.mxu0 0.0
    %1259 = vmatmul.mubr.f32.gmra.mxu0 %v1177
    %v1260 = vpop.f32.mrf.mxu0
    %v1261 = vadd.f32 0.0, %v1260
    %v1262 = vpop.f32.mrf.mxu0
    %1263 = vdwg.mxu0
    %v1264 = vrcp.pop %v1145
    %v1265 = vrcp.pop %v1148
    %v1266 = vrcp.pop %v1151
    %v1267 = vrcp.pop %v1154
    %v1268 = vmul.f32 %v1246, %v1264
    %v1269 = vmul.f32 %v1251, %v1265
    %v1270 = vmul.f32 %v1256, %v1266
    %v1271 = vmul.f32 %v1261, %v1267
    %1272 = vrot.lane.b32.xlu0 %v451, 112
    %v1273 = vpop.permute.xlu0 %1272
    %1274 = vrot.lane.b32.xlu0 %v456, 112
    %v1275 = vpop.permute.xlu0 %1274
    %1276 = vrot.lane.b32.xlu0 %v461, 112
    %v1277 = vpop.permute.xlu0 %1276
    %1278 = vrot.lane.b32.xlu0 %v466, 112
    %v1279 = vpop.permute.xlu0 %1278
    %1280 = vrot.lane.b32.xlu0 %v451, 80
    %v1281 = vpop.permute.xlu0 %1280
    %1282 = vrot.lane.b32.xlu0 %v456, 80
    %v1283 = vpop.permute.xlu0 %1282
    %1284 = vrot.lane.b32.xlu0 %v461, 80
    %v1285 = vpop.permute.xlu0 %1284
    %1286 = vrot.lane.b32.xlu0 %v466, 80
    %v1287 = vpop.permute.xlu0 %1286
    %v1288 = vsel %vm481, %v1273, 0
    %v1290 = vsel %vm481, %v1275, 0
    %v1292 = vsel %vm481, %v1277, 0
    %v1294 = vsel %vm481, %v1279, 0
    %v1296 = vsel %vm481, %v1281, 0
    %v1298 = vsel %vm481, %v1283, 0
    %v1300 = vsel %vm481, %v1285, 0
    %v1302 = vsel %vm481, %v1287, 0
    %1304 = vmatprep.subr.mxu0 0.0
    %1305 = vmatpush1.xpose.msra.mxu0 0.0
    %1306 = vmatprep.subr.mxu0 0.0
    %1307 = vmatpush1.xpose.msra.mxu0 0.0
    %1308 = vmatprep.subr.mxu0 0.0
    %1309 = vmatpush1.xpose.msra.mxu0 0.0
    %1310 = vmatprep.subr.mxu0 0.0
    %1311 = vmatpush1.xpose.msra.mxu0 0.0
    %1312 = vmatprep.subr.mxu0 0.0
    %1313 = vmatpush1.xpose.msra.mxu0 0.0
    %1314 = vmatprep.subr.mxu0 0.0
    %1315 = vmatpush1.xpose.msra.mxu0 0.0
    %1316 = vmatprep.subr.mxu0 0.0
    %1317 = vmatpush1.xpose.msra.mxu0 0.0
    %1318 = vmatprep.subr.mxu0 0.0
    %1319 = vmatpush1.xpose.msra.mxu0 0.0
    %1320 = vmatprep.subr.mxu0 0.0
    %1321 = vmatpush1.xpose.msra.mxu0 0.0
    %1322 = vmatprep.subr.mxu0 0.0
    %1323 = vmatpush1.xpose.msra.mxu0 0.0
    %1324 = vmatprep.subr.mxu0 0.0
    %1325 = vmatpush1.xpose.msra.mxu0 0.0
    %1326 = vmatprep.subr.mxu0 0.0
    %1327 = vmatpush1.xpose.msra.mxu0 0.0
    %1328 = vmatprep.subr.mxu0 0.0
    %1329 = vmatpush1.xpose.msra.mxu0 %v1302
    %1330 = vmatprep.subr.mxu0 0.0
    %1331 = vmatpush1.xpose.msra.mxu0 %v1300
    %1332 = vmatprep.subr.mxu0 0.0
    %1333 = vmatpush1.xpose.msra.mxu0 %v1298
    %1334 = vmatprep.subr.mxu0 0.0
    %1335 = vmatpush1.xpose.msra.mxu0 %v1296
    %1336 = vmatprep.subr.mxu0 0.0
    %1337 = vmatpush2.xpose.msra.mxu0 0.0
    %1338 = vmatprep.subr.mxu0 0.0
    %1339 = vmatpush2.xpose.msra.mxu0 0.0
    %1340 = vmatprep.subr.mxu0 0.0
    %1341 = vmatpush2.xpose.msra.mxu0 0.0
    %1342 = vmatprep.subr.mxu0 0.0
    %1343 = vmatpush2.xpose.msra.mxu0 0.0
    %1344 = vmatprep.subr.mxu0 0.0
    %1345 = vmatpush2.xpose.msra.mxu0 0.0
    %1346 = vmatprep.subr.mxu0 0.0
    %1347 = vmatpush2.xpose.msra.mxu0 0.0
    %1348 = vmatprep.subr.mxu0 0.0
    %1349 = vmatpush2.xpose.msra.mxu0 0.0
    %1350 = vmatprep.subr.mxu0 0.0
    %1351 = vmatpush2.xpose.msra.mxu0 0.0
    %1352 = vmatprep.subr.mxu0 0.0
    %1353 = vmatpush2.xpose.msra.mxu0 0.0
    %1354 = vmatprep.subr.mxu0 0.0
    %1355 = vmatpush2.xpose.msra.mxu0 0.0
    %1356 = vmatprep.subr.mxu0 0.0
    %1357 = vmatpush2.xpose.msra.mxu0 0.0
    %1358 = vmatprep.subr.mxu0 0.0
    %1359 = vmatpush2.xpose.msra.mxu0 0.0
    %1360 = vmatprep.subr.mxu0 0.0
    %1361 = vmatpush2.xpose.msra.mxu0 0.0
    %1362 = vmatprep.subr.mxu0 0.0
    %1363 = vmatpush2.xpose.msra.mxu0 0.0
    %1364 = vmatprep.subr.mxu0 0.0
    %1365 = vmatpush2.xpose.msra.mxu0 0.0
    %1366 = vmatprep.subr.mxu0 0.0
    %1367 = vmatpush2.xpose.msra.mxu0 0.0
    %1368 = vmatprep.mubr.f32.mxu0 0.0
    %1369 = vmatmul.mubr.f32.gmra.mxu0 %v1288
    %v1370 = vpop.f32.mrf.mxu0
    %v1371 = vadd.f32 %v184, %v1370
    %v1372 = vpop.f32.mrf.mxu0
    %1373 = vmatprep.mubr.f32.mxu0 0.0
    %1374 = vmatmul.mubr.f32.gmra.mxu0 %v1290
    %v1375 = vpop.f32.mrf.mxu0
    %v1376 = vadd.f32 %v184, %v1375
    %v1377 = vpop.f32.mrf.mxu0
    %1378 = vmatprep.mubr.f32.mxu0 0.0
    %1379 = vmatmul.mubr.f32.gmra.mxu0 %v1292
    %v1380 = vpop.f32.mrf.mxu0
    %v1381 = vadd.f32 %v184, %v1380
    %v1382 = vpop.f32.mrf.mxu0
    %1383 = vmatprep.mubr.f32.mxu0 0.0
    %1384 = vmatmul.mubr.f32.gmra.mxu0 %v1294
    %v1385 = vpop.f32.mrf.mxu0
    %v1386 = vadd.f32 %v184, %v1385
    %v1387 = vpop.f32.mrf.mxu0
    %1388 = vdwg.mxu0
    %v1389 = vsel %vm206, %v1371, -inf
    %1390 = vmax.xlane.f32.xlu0 %v1389
    %v1391 = vpop.xlane.xlu0 %1390
    %v1392 = vsel %vm206, %v1376, -inf
    %1393 = vmax.xlane.f32.xlu0 %v1392
    %v1394 = vpop.xlane.xlu0 %1393
    %v1395 = vsel %vm206, %v1381, -inf
    %1396 = vmax.xlane.f32.xlu0 %v1395
    %v1397 = vpop.xlane.xlu0 %1396
    %v1398 = vsel %vm206, %v1386, -inf
    %1399 = vmax.xlane.f32.xlu0 %v1398
    %v1400 = vpop.xlane.xlu0 %1399
    %v1401 = vsub.f32 %v1371, %v1391
    %v1402 = vsub.f32 %v1376, %v1394
    %v1403 = vsub.f32 %v1381, %v1397
    %v1404 = vsub.f32 %v1386, %v1400
    %v1405 = vmul.f32 %v1401, 1.442695
    %v1406 = vpow.pop %v1405
    %v1407 = vmul.f32 %v1402, 1.442695
    %v1408 = vpow.pop %v1407
    %v1409 = vmul.f32 %v1403, 1.442695
    %v1410 = vpow.pop %v1409
    %v1411 = vmul.f32 %v1404, 1.442695
    %v1412 = vpow.pop %v1411
    %v1413 = vsel %vm206, %v1406, 0.0
    %1414 = vadd.xlane.f32.xlu0 %v1413
    %v1415 = vpop.xlane.xlu0 %1414
    %v1416 = vsel %vm206, %v1408, 0.0
    %1417 = vadd.xlane.f32.xlu0 %v1416
    %v1418 = vpop.xlane.xlu0 %1417
    %v1419 = vsel %vm206, %v1410, 0.0
    %1420 = vadd.xlane.f32.xlu0 %v1419
    %v1421 = vpop.xlane.xlu0 %1420
    %v1422 = vsel %vm206, %v1412, 0.0
    %1423 = vadd.xlane.f32.xlu0 %v1422
    %v1424 = vpop.xlane.xlu0 %1423
    %1425 = vrot.lane.b32.xlu0 %v451, 48
    %v1426 = vpop.permute.xlu0 %1425
    %1427 = vrot.lane.b32.xlu0 %v456, 48
    %v1428 = vpop.permute.xlu0 %1427
    %1429 = vrot.lane.b32.xlu0 %v461, 48
    %v1430 = vpop.permute.xlu0 %1429
    %1431 = vrot.lane.b32.xlu0 %v466, 48
    %v1432 = vpop.permute.xlu0 %1431
    %v1438 = vsel %vm206, %v1406, 0
    %v1441 = vsel %vm206, %v1408, 0
    %v1444 = vsel %vm206, %v1410, 0
    %v1447 = vsel %vm206, %v1412, 0
    %1449 = vmatprep.subr.mxu0 0.0
    %1450 = vmatpush1.msra.mxu0 0.0
    %1451 = vmatprep.subr.mxu0 0.0
    %1452 = vmatpush1.msra.mxu0 0.0
    %1453 = vmatprep.subr.mxu0 0.0
    %1454 = vmatpush1.msra.mxu0 0.0
    %1455 = vmatprep.subr.mxu0 0.0
    %1456 = vmatpush1.msra.mxu0 0.0
    %1457 = vmatprep.subr.mxu0 0.0
    %1458 = vmatpush1.msra.mxu0 0.0
    %1459 = vmatprep.subr.mxu0 0.0
    %1460 = vmatpush1.msra.mxu0 0.0
    %1461 = vmatprep.subr.mxu0 0.0
    %1462 = vmatpush1.msra.mxu0 0.0
    %1463 = vmatprep.subr.mxu0 0.0
    %1464 = vmatpush1.msra.mxu0 0.0
    %1465 = vmatprep.subr.mxu0 0.0
    %1466 = vmatpush1.msra.mxu0 0.0
    %1467 = vmatprep.subr.mxu0 0.0
    %1468 = vmatpush1.msra.mxu0 0.0
    %1469 = vmatprep.subr.mxu0 0.0
    %1470 = vmatpush1.msra.mxu0 0.0
    %1471 = vmatprep.subr.mxu0 0.0
    %1472 = vmatpush1.msra.mxu0 0.0
    %1473 = vmatprep.subr.mxu0 0.0
    %1474 = vmatpush1.msra.mxu0 %v1432
    %1475 = vmatprep.subr.mxu0 0.0
    %1476 = vmatpush1.msra.mxu0 %v1430
    %1477 = vmatprep.subr.mxu0 0.0
    %1478 = vmatpush1.msra.mxu0 %v1428
    %1479 = vmatprep.subr.mxu0 0.0
    %1480 = vmatpush1.msra.mxu0 %v1426
    %1481 = vmatprep.subr.mxu0 0.0
    %1482 = vmatpush2.msra.mxu0 0.0
    %1483 = vmatprep.subr.mxu0 0.0
    %1484 = vmatpush2.msra.mxu0 0.0
    %1485 = vmatprep.subr.mxu0 0.0
    %1486 = vmatpush2.msra.mxu0 0.0
    %1487 = vmatprep.subr.mxu0 0.0
    %1488 = vmatpush2.msra.mxu0 0.0
    %1489 = vmatprep.subr.mxu0 0.0
    %1490 = vmatpush2.msra.mxu0 0.0
    %1491 = vmatprep.subr.mxu0 0.0
    %1492 = vmatpush2.msra.mxu0 0.0
    %1493 = vmatprep.subr.mxu0 0.0
    %1494 = vmatpush2.msra.mxu0 0.0
    %1495 = vmatprep.subr.mxu0 0.0
    %1496 = vmatpush2.msra.mxu0 0.0
    %1497 = vmatprep.subr.mxu0 0.0
    %1498 = vmatpush2.msra.mxu0 0.0
    %1499 = vmatprep.subr.mxu0 0.0
    %1500 = vmatpush2.msra.mxu0 0.0
    %1501 = vmatprep.subr.mxu0 0.0
    %1502 = vmatpush2.msra.mxu0 0.0
    %1503 = vmatprep.subr.mxu0 0.0
    %1504 = vmatpush2.msra.mxu0 0.0
    %1505 = vmatprep.subr.mxu0 0.0
    %1506 = vmatpush2.msra.mxu0 0.0
    %1507 = vmatprep.subr.mxu0 0.0
    %1508 = vmatpush2.msra.mxu0 0.0
    %1509 = vmatprep.subr.mxu0 0.0
    %1510 = vmatpush2.msra.mxu0 0.0
    %1511 = vmatprep.subr.mxu0 0.0
    %1512 = vmatpush2.msra.mxu0 0.0
    %1513 = vmatprep.mubr.f32.mxu0 0.0
    %1514 = vmatmul.mubr.f32.gmra.mxu0 %v1438
    %v1515 = vpop.f32.mrf.mxu0
    %v1516 = vadd.f32 0.0, %v1515
    %v1517 = vpop.f32.mrf.mxu0
    %1518 = vmatprep.mubr.f32.mxu0 0.0
    %1519 = vmatmul.mubr.f32.gmra.mxu0 %v1441
    %v1520 = vpop.f32.mrf.mxu0
    %v1521 = vadd.f32 0.0, %v1520
    %v1522 = vpop.f32.mrf.mxu0
    %1523 = vmatprep.mubr.f32.mxu0 0.0
    %1524 = vmatmul.mubr.f32.gmra.mxu0 %v1444
    %v1525 = vpop.f32.mrf.mxu0
    %v1526 = vadd.f32 0.0, %v1525
    %v1527 = vpop.f32.mrf.mxu0
    %1528 = vmatprep.mubr.f32.mxu0 0.0
    %1529 = vmatmul.mubr.f32.gmra.mxu0 %v1447
    %v1530 = vpop.f32.mrf.mxu0
    %v1531 = vadd.f32 0.0, %v1530
    %v1532 = vpop.f32.mrf.mxu0
    %1533 = vdwg.mxu0
    %v1534 = vrcp.pop %v1415
    %v1535 = vrcp.pop %v1418
    %v1536 = vrcp.pop %v1421
    %v1537 = vrcp.pop %v1424
    %v1538 = vmul.f32 %v1516, %v1534
    %v1539 = vmul.f32 %v1521, %v1535
    %v1540 = vmul.f32 %v1526, %v1536
    %v1541 = vmul.f32 %v1531, %v1537
    %v1543 = vsel %vm481, %v1268, 0
    %v1546 = vsel %vm481, %v1269, 0
    %v1549 = vsel %vm481, %v1270, 0
    %v1552 = vsel %vm481, %v1271, 0
    %v1555 = vsel %vm481, %v1538, 0
    %v1558 = vsel %vm481, %v1539, 0
    %v1561 = vsel %vm481, %v1540, 0
    %v1564 = vsel %vm481, %v1541, 0
    %1566 = vmatprep.subr.mxu0 0.0
    %1567 = vmatpush1.msra.mxu0 0.0
    %1568 = vmatprep.subr.mxu0 0.0
    %1569 = vmatpush1.msra.mxu0 0.0
    %1570 = vmatprep.subr.mxu0 0.0
    %1571 = vmatpush1.msra.mxu0 0.0
    %1572 = vmatprep.subr.mxu0 0.0
    %1573 = vmatpush1.msra.mxu0 0.0
    %1574 = vmatprep.subr.mxu0 0.0
    %1575 = vmatpush1.msra.mxu0 0.0
    %1576 = vmatprep.subr.mxu0 0.0
    %1577 = vmatpush1.msra.mxu0 0.0
    %1578 = vmatprep.subr.mxu0 0.0
    %1579 = vmatpush1.msra.mxu0 0.0
    %1580 = vmatprep.subr.mxu0 0.0
    %1581 = vmatpush1.msra.mxu0 0.0
    %1582 = vmatprep.subr.mxu0 0.0
    %1583 = vmatpush1.msra.mxu0 0.0
    %1584 = vmatprep.subr.mxu0 0.0
    %1585 = vmatpush1.msra.mxu0 0.0
    %1586 = vmatprep.subr.mxu0 0.0
    %1587 = vmatpush1.msra.mxu0 0.0
    %1588 = vmatprep.subr.mxu0 0.0
    %1589 = vmatpush1.msra.mxu0 0.0
    %1590 = vmatprep.subr.mxu0 0.0
    %1591 = vmatpush1.msra.mxu0 0.0
    %1592 = vmatprep.subr.mxu0 0.0
    %1593 = vmatpush1.msra.mxu0 0.0
    %1594 = vmatprep.subr.mxu0 0.0
    %1595 = vmatpush1.msra.mxu0 %v196
    %1596 = vmatprep.subr.mxu0 0.0
    %1597 = vmatpush1.msra.mxu0 %v195
    %1598 = vmatprep.subr.mxu0 0.0
    %1599 = vmatpush2.msra.mxu0 0.0
    %1600 = vmatprep.subr.mxu0 0.0
    %1601 = vmatpush2.msra.mxu0 0.0
    %1602 = vmatprep.subr.mxu0 0.0
    %1603 = vmatpush2.msra.mxu0 0.0
    %1604 = vmatprep.subr.mxu0 0.0
    %1605 = vmatpush2.msra.mxu0 0.0
    %1606 = vmatprep.subr.mxu0 0.0
    %1607 = vmatpush2.msra.mxu0 0.0
    %1608 = vmatprep.subr.mxu0 0.0
    %1609 = vmatpush2.msra.mxu0 0.0
    %1610 = vmatprep.subr.mxu0 0.0
    %1611 = vmatpush2.msra.mxu0 0.0
    %1612 = vmatprep.subr.mxu0 0.0
    %1613 = vmatpush2.msra.mxu0 0.0
    %1614 = vmatprep.subr.mxu0 0.0
    %1615 = vmatpush2.msra.mxu0 0.0
    %1616 = vmatprep.subr.mxu0 0.0
    %1617 = vmatpush2.msra.mxu0 0.0
    %1618 = vmatprep.subr.mxu0 0.0
    %1619 = vmatpush2.msra.mxu0 0.0
    %1620 = vmatprep.subr.mxu0 0.0
    %1621 = vmatpush2.msra.mxu0 0.0
    %1622 = vmatprep.subr.mxu0 0.0
    %1623 = vmatpush2.msra.mxu0 0.0
    %1624 = vmatprep.subr.mxu0 0.0
    %1625 = vmatpush2.msra.mxu0 0.0
    %1626 = vmatprep.subr.mxu0 0.0
    %1627 = vmatpush2.msra.mxu0 0.0
    %1628 = vmatprep.subr.mxu0 0.0
    %1629 = vmatpush2.msra.mxu0 0.0
    %1630 = vmatprep.mubr.f32.mxu0 0.0
    %1631 = vmatmul.mubr.f32.gmra.mxu0 %v1543
    %v1632 = vpop.f32.mrf.mxu0
    %v1633 = vadd.f32 0.0, %v1632
    %v1634 = vpop.f32.mrf.mxu0
    %1635 = vmatprep.mubr.f32.mxu0 0.0
    %1636 = vmatmul.mubr.f32.gmra.mxu0 %v1546
    %v1637 = vpop.f32.mrf.mxu0
    %v1638 = vadd.f32 0.0, %v1637
    %v1639 = vpop.f32.mrf.mxu0
    %1640 = vmatprep.mubr.f32.mxu0 0.0
    %1641 = vmatmul.mubr.f32.gmra.mxu0 %v1549
    %v1642 = vpop.f32.mrf.mxu0
    %v1643 = vadd.f32 0.0, %v1642
    %v1644 = vpop.f32.mrf.mxu0
    %1645 = vmatprep.mubr.f32.mxu0 0.0
    %1646 = vmatmul.mubr.f32.gmra.mxu0 %v1552
    %v1647 = vpop.f32.mrf.mxu0
    %v1648 = vadd.f32 0.0, %v1647
    %v1649 = vpop.f32.mrf.mxu0
    %1650 = vmatprep.mubr.f32.mxu0 0.0
    %1651 = vmatmul.mubr.f32.gmra.mxu0 %v1555
    %v1652 = vpop.f32.mrf.mxu0
    %v1653 = vadd.f32 0.0, %v1652
    %v1654 = vpop.f32.mrf.mxu0
    %1655 = vmatprep.mubr.f32.mxu0 0.0
    %1656 = vmatmul.mubr.f32.gmra.mxu0 %v1558
    %v1657 = vpop.f32.mrf.mxu0
    %v1658 = vadd.f32 0.0, %v1657
    %v1659 = vpop.f32.mrf.mxu0
    %1660 = vmatprep.mubr.f32.mxu0 0.0
    %1661 = vmatmul.mubr.f32.gmra.mxu0 %v1561
    %v1662 = vpop.f32.mrf.mxu0
    %v1663 = vadd.f32 0.0, %v1662
    %v1664 = vpop.f32.mrf.mxu0
    %1665 = vmatprep.mubr.f32.mxu0 0.0
    %1666 = vmatmul.mubr.f32.gmra.mxu0 %v1564
    %v1667 = vpop.f32.mrf.mxu0
    %v1668 = vadd.f32 0.0, %v1667
    %v1669 = vpop.f32.mrf.mxu0
    %1670 = vdwg.mxu0
    %v1672 = vsel %vm481, %v732, 0
    %v1675 = vsel %vm481, %v733, 0
    %v1678 = vsel %vm481, %v734, 0
    %v1681 = vsel %vm481, %v735, 0
    %v1684 = vsel %vm481, %v998, 0
    %v1687 = vsel %vm481, %v999, 0
    %v1690 = vsel %vm481, %v1000, 0
    %v1693 = vsel %vm481, %v1001, 0
    %1695 = vmatprep.subr.mxu0 0.0
    %1696 = vmatpush1.msra.mxu0 0.0
    %1697 = vmatprep.subr.mxu0 0.0
    %1698 = vmatpush1.msra.mxu0 0.0
    %1699 = vmatprep.subr.mxu0 0.0
    %1700 = vmatpush1.msra.mxu0 0.0
    %1701 = vmatprep.subr.mxu0 0.0
    %1702 = vmatpush1.msra.mxu0 0.0
    %1703 = vmatprep.subr.mxu0 0.0
    %1704 = vmatpush1.msra.mxu0 0.0
    %1705 = vmatprep.subr.mxu0 0.0
    %1706 = vmatpush1.msra.mxu0 0.0
    %1707 = vmatprep.subr.mxu0 0.0
    %1708 = vmatpush1.msra.mxu0 0.0
    %1709 = vmatprep.subr.mxu0 0.0
    %1710 = vmatpush1.msra.mxu0 0.0
    %1711 = vmatprep.subr.mxu0 0.0
    %1712 = vmatpush1.msra.mxu0 0.0
    %1713 = vmatprep.subr.mxu0 0.0
    %1714 = vmatpush1.msra.mxu0 0.0
    %1715 = vmatprep.subr.mxu0 0.0
    %1716 = vmatpush1.msra.mxu0 0.0
    %1717 = vmatprep.subr.mxu0 0.0
    %1718 = vmatpush1.msra.mxu0 0.0
    %1719 = vmatprep.subr.mxu0 0.0
    %1720 = vmatpush1.msra.mxu0 0.0
    %1721 = vmatprep.subr.mxu0 0.0
    %1722 = vmatpush1.msra.mxu0 0.0
    %1723 = vmatprep.subr.mxu0 0.0
    %1724 = vmatpush1.msra.mxu0 %v194
    %1725 = vmatprep.subr.mxu0 0.0
    %1726 = vmatpush1.msra.mxu0 %v193
    %1727 = vmatprep.subr.mxu0 0.0
    %1728 = vmatpush2.msra.mxu0 0.0
    %1729 = vmatprep.subr.mxu0 0.0
    %1730 = vmatpush2.msra.mxu0 0.0
    %1731 = vmatprep.subr.mxu0 0.0
    %1732 = vmatpush2.msra.mxu0 0.0
    %1733 = vmatprep.subr.mxu0 0.0
    %1734 = vmatpush2.msra.mxu0 0.0
    %1735 = vmatprep.subr.mxu0 0.0
    %1736 = vmatpush2.msra.mxu0 0.0
    %1737 = vmatprep.subr.mxu0 0.0
    %1738 = vmatpush2.msra.mxu0 0.0
    %1739 = vmatprep.subr.mxu0 0.0
    %1740 = vmatpush2.msra.mxu0 0.0
    %1741 = vmatprep.subr.mxu0 0.0
    %1742 = vmatpush2.msra.mxu0 0.0
    %1743 = vmatprep.subr.mxu0 0.0
    %1744 = vmatpush2.msra.mxu0 0.0
    %1745 = vmatprep.subr.mxu0 0.0
    %1746 = vmatpush2.msra.mxu0 0.0
    %1747 = vmatprep.subr.mxu0 0.0
    %1748 = vmatpush2.msra.mxu0 0.0
    %1749 = vmatprep.subr.mxu0 0.0
    %1750 = vmatpush2.msra.mxu0 0.0
    %1751 = vmatprep.subr.mxu0 0.0
    %1752 = vmatpush2.msra.mxu0 0.0
    %1753 = vmatprep.subr.mxu0 0.0
    %1754 = vmatpush2.msra.mxu0 0.0
    %1755 = vmatprep.subr.mxu0 0.0
    %1756 = vmatpush2.msra.mxu0 0.0
    %1757 = vmatprep.subr.mxu0 0.0
    %1758 = vmatpush2.msra.mxu0 0.0
    %1759 = vmatprep.mubr.f32.mxu0 0.0
    %1760 = vmatmul.mubr.f32.gmra.mxu0 %v1672
    %v1761 = vpop.f32.mrf.mxu0
    %v1762 = vadd.f32 %v1633, %v1761
    %v1763 = vpop.f32.mrf.mxu0
    %1764 = vmatprep.mubr.f32.mxu0 0.0
    %1765 = vmatmul.mubr.f32.gmra.mxu0 %v1675
    %v1766 = vpop.f32.mrf.mxu0
    %v1767 = vadd.f32 %v1638, %v1766
    %v1768 = vpop.f32.mrf.mxu0
    %1769 = vmatprep.mubr.f32.mxu0 0.0
    %1770 = vmatmul.mubr.f32.gmra.mxu0 %v1678
    %v1771 = vpop.f32.mrf.mxu0
    %v1772 = vadd.f32 %v1643, %v1771
    %v1773 = vpop.f32.mrf.mxu0
    %1774 = vmatprep.mubr.f32.mxu0 0.0
    %1775 = vmatmul.mubr.f32.gmra.mxu0 %v1681
    %v1776 = vpop.f32.mrf.mxu0
    %v1777 = vadd.f32 %v1648, %v1776
    %v1778 = vpop.f32.mrf.mxu0
    %1779 = vmatprep.mubr.f32.mxu0 0.0
    %1780 = vmatmul.mubr.f32.gmra.mxu0 %v1684
    %v1781 = vpop.f32.mrf.mxu0
    %v1782 = vadd.f32 %v1653, %v1781
    %v1783 = vpop.f32.mrf.mxu0
    %1784 = vmatprep.mubr.f32.mxu0 0.0
    %1785 = vmatmul.mubr.f32.gmra.mxu0 %v1687
    %v1786 = vpop.f32.mrf.mxu0
    %v1787 = vadd.f32 %v1658, %v1786
    %v1788 = vpop.f32.mrf.mxu0
    %1789 = vmatprep.mubr.f32.mxu0 0.0
    %1790 = vmatmul.mubr.f32.gmra.mxu0 %v1690
    %v1791 = vpop.f32.mrf.mxu0
    %v1792 = vadd.f32 %v1663, %v1791
    %v1793 = vpop.f32.mrf.mxu0
    %1794 = vmatprep.mubr.f32.mxu0 0.0
    %1795 = vmatmul.mubr.f32.gmra.mxu0 %v1693
    %v1796 = vpop.f32.mrf.mxu0
    %v1797 = vadd.f32 %v1668, %v1796
    %v1798 = vpop.f32.mrf.mxu0
    %1799 = vdwg.mxu0
    %v1800 = vadd.f32 %v143, %v1762
    %v1801 = vadd.f32 %v148, %v1767
    %v1802 = vadd.f32 %v153, %v1772
    %v1803 = vadd.f32 %v158, %v1777
    %v1804 = vadd.f32 %v163, %v1782
    %v1805 = vadd.f32 %v168, %v1787
    %v1806 = vadd.f32 %v173, %v1792
    %v1807 = vadd.f32 %v178, %v1797
    %v1808 = vlaneseq
    %v1809 = vshrl.u32 %v1808, 7
    %v1810 = vsub.s32 3, %v1809
    %v1811 = vrot.slane %v205, %v1810
    %v1812 = vadd.f32 %v1800, %v1811
    %v1813 = vadd.f32 %v1801, %v1811
    %v1814 = vadd.f32 %v1802, %v1811
    %v1815 = vadd.f32 %v1803, %v1811
    %v1816 = vadd.f32 %v1804, %v1811
    %v1817 = vadd.f32 %v1805, %v1811
    %v1818 = vadd.f32 %v1806, %v1811
    %v1819 = vadd.f32 %v1807, %v1811
    %v1820 = vsel %vm206, %v1812, 0.0
    %1821 = vadd.xlane.f32.xlu0 %v1820
    %v1822 = vpop.xlane.xlu0 %1821
    %v1823 = vsel %vm206, %v1813, 0.0
    %1824 = vadd.xlane.f32.xlu0 %v1823
    %v1825 = vpop.xlane.xlu0 %1824
    %v1826 = vsel %vm206, %v1814, 0.0
    %1827 = vadd.xlane.f32.xlu0 %v1826
    %v1828 = vpop.xlane.xlu0 %1827
    %v1829 = vsel %vm206, %v1815, 0.0
    %1830 = vadd.xlane.f32.xlu0 %v1829
    %v1831 = vpop.xlane.xlu0 %1830
    %v1832 = vsel %vm206, %v1816, 0.0
    %1833 = vadd.xlane.f32.xlu0 %v1832
    %v1834 = vpop.xlane.xlu0 %1833
    %v1835 = vsel %vm206, %v1817, 0.0
    %1836 = vadd.xlane.f32.xlu0 %v1835
    %v1837 = vpop.xlane.xlu0 %1836
    %v1838 = vsel %vm206, %v1818, 0.0
    %1839 = vadd.xlane.f32.xlu0 %v1838
    %v1840 = vpop.xlane.xlu0 %1839
    %v1841 = vsel %vm206, %v1819, 0.0
    %1842 = vadd.xlane.f32.xlu0 %v1841
    %v1843 = vpop.xlane.xlu0 %1842
    %v1844 = vmul.f32 %v1822, %v231
    %v1845 = vmul.f32 %v1825, %v231
    %v1846 = vmul.f32 %v1828, %v231
    %v1847 = vmul.f32 %v1831, %v231
    %v1848 = vmul.f32 %v1834, %v231
    %v1849 = vmul.f32 %v1837, %v231
    %v1850 = vmul.f32 %v1840, %v231
    %v1851 = vmul.f32 %v1843, %v231
    %v1852 = vsub.f32 %v1812, %v1844
    %v1853 = vsub.f32 %v1813, %v1845
    %v1854 = vsub.f32 %v1814, %v1846
    %v1855 = vsub.f32 %v1815, %v1847
    %v1856 = vsub.f32 %v1816, %v1848
    %v1857 = vsub.f32 %v1817, %v1849
    %v1858 = vsub.f32 %v1818, %v1850
    %v1859 = vsub.f32 %v1819, %v1851
    %v1860 = vmul.f32 %v1852, %v1852
    %v1861 = vmul.f32 %v1853, %v1853
    %v1862 = vmul.f32 %v1854, %v1854
    %v1863 = vmul.f32 %v1855, %v1855
    %v1864 = vmul.f32 %v1856, %v1856
    %v1865 = vmul.f32 %v1857, %v1857
    %v1866 = vmul.f32 %v1858, %v1858
    %v1867 = vmul.f32 %v1859, %v1859
    %v1868 = vsel %vm206, %v1860, 0.0
    %1869 = vadd.xlane.f32.xlu0 %v1868
    %v1870 = vpop.xlane.xlu0 %1869
    %v1871 = vsel %vm206, %v1861, 0.0
    %1872 = vadd.xlane.f32.xlu0 %v1871
    %v1873 = vpop.xlane.xlu0 %1872
    %v1874 = vsel %vm206, %v1862, 0.0
    %1875 = vadd.xlane.f32.xlu0 %v1874
    %v1876 = vpop.xlane.xlu0 %1875
    %v1877 = vsel %vm206, %v1863, 0.0
    %1878 = vadd.xlane.f32.xlu0 %v1877
    %v1879 = vpop.xlane.xlu0 %1878
    %v1880 = vsel %vm206, %v1864, 0.0
    %1881 = vadd.xlane.f32.xlu0 %v1880
    %v1882 = vpop.xlane.xlu0 %1881
    %v1883 = vsel %vm206, %v1865, 0.0
    %1884 = vadd.xlane.f32.xlu0 %v1883
    %v1885 = vpop.xlane.xlu0 %1884
    %v1886 = vsel %vm206, %v1866, 0.0
    %1887 = vadd.xlane.f32.xlu0 %v1886
    %v1888 = vpop.xlane.xlu0 %1887
    %v1889 = vsel %vm206, %v1867, 0.0
    %1890 = vadd.xlane.f32.xlu0 %v1889
    %v1891 = vpop.xlane.xlu0 %1890
    %v1892 = vmul.f32 %v1870, %v231
    %v1893 = vmul.f32 %v1873, %v231
    %v1894 = vmul.f32 %v1876, %v231
    %v1895 = vmul.f32 %v1879, %v231
    %v1896 = vmul.f32 %v1882, %v231
    %v1897 = vmul.f32 %v1885, %v231
    %v1898 = vmul.f32 %v1888, %v231
    %v1899 = vmul.f32 %v1891, %v231
    %v1900 = vadd.f32 %v1892, 1e-12
    %v1901 = vadd.f32 %v1893, 1e-12
    %v1902 = vadd.f32 %v1894, 1e-12
    %v1903 = vadd.f32 %v1895, 1e-12
    %v1904 = vadd.f32 %v1896, 1e-12
    %v1905 = vadd.f32 %v1897, 1e-12
    %v1906 = vadd.f32 %v1898, 1e-12
    %v1907 = vadd.f32 %v1899, 1e-12
    %v1908 = vrsqrt.pop %v1900
    %v1909 = vrsqrt.pop %v1901
    %v1910 = vrsqrt.pop %v1902
    %v1911 = vrsqrt.pop %v1903
    %v1912 = vrsqrt.pop %v1904
    %v1913 = vrsqrt.pop %v1905
    %v1914 = vrsqrt.pop %v1906
    %v1915 = vrsqrt.pop %v1907
    %v1916 = vmul.f32 %v1852, %v1908
    %v1917 = vmul.f32 %v1853, %v1909
    %v1918 = vmul.f32 %v1854, %v1910
    %v1919 = vmul.f32 %v1855, %v1911
    %v1920 = vmul.f32 %v1856, %v1912
    %v1921 = vmul.f32 %v1857, %v1913
    %v1922 = vmul.f32 %v1858, %v1914
    %v1923 = vmul.f32 %v1859, %v1915
    %v1924 = vlaneseq
    %v1925 = vshrl.u32 %v1924, 7
    %v1926 = vsub.s32 4, %v1925
    %v1927 = vrot.slane %v205, %v1926
    %v1928 = vmul.f32 %v1916, %v1927
    %v1929 = vmul.f32 %v1917, %v1927
    %v1930 = vmul.f32 %v1918, %v1927
    %v1931 = vmul.f32 %v1919, %v1927
    %v1932 = vmul.f32 %v1920, %v1927
    %v1933 = vmul.f32 %v1921, %v1927
    %v1934 = vmul.f32 %v1922, %v1927
    %v1935 = vmul.f32 %v1923, %v1927
    %v1936 = vlaneseq
    %v1937 = vshrl.u32 %v1936, 7
    %v1938 = vsub.s32 5, %v1937
    %v1939 = vrot.slane %v205, %v1938
    %v1940 = vadd.f32 %v1928, %v1939
    %v1941 = vadd.f32 %v1929, %v1939
    %v1942 = vadd.f32 %v1930, %v1939
    %v1943 = vadd.f32 %v1931, %v1939
    %v1944 = vadd.f32 %v1932, %v1939
    %v1945 = vadd.f32 %v1933, %v1939
    %v1946 = vadd.f32 %v1934, %v1939
    %v1947 = vadd.f32 %v1935, %v1939
    %v1948 = vlaneseq
    %v1949 = vshrl.u32 %v1948, 7
    %v1950 = vsub.s32 6, %v1949
    %v1951 = vrot.slane %v205, %v1950
    %v1953 = vsel %vm206, %v1940, 0
    %v1956 = vsel %vm206, %v1941, 0
    %v1959 = vsel %vm206, %v1942, 0
    %v1962 = vsel %vm206, %v1943, 0
    %v1965 = vsel %vm206, %v1944, 0
    %v1968 = vsel %vm206, %v1945, 0
    %v1971 = vsel %vm206, %v1946, 0
    %v1974 = vsel %vm206, %v1947, 0
    %1976 = vmatprep.subr.mxu0 0.0
    %1977 = vmatpush1.msra.mxu0 0.0
    %1978 = vmatprep.subr.mxu0 0.0
    %1979 = vmatpush1.msra.mxu0 0.0
    %1980 = vmatprep.subr.mxu0 0.0
    %1981 = vmatpush1.msra.mxu0 0.0
    %1982 = vmatprep.subr.mxu0 0.0
    %1983 = vmatpush1.msra.mxu0 0.0
    %1984 = vmatprep.subr.mxu0 0.0
    %1985 = vmatpush1.msra.mxu0 0.0
    %1986 = vmatprep.subr.mxu0 0.0
    %1987 = vmatpush1.msra.mxu0 0.0
    %1988 = vmatprep.subr.mxu0 0.0
    %1989 = vmatpush1.msra.mxu0 0.0
    %1990 = vmatprep.subr.mxu0 0.0
    %1991 = vmatpush1.msra.mxu0 0.0
    %1992 = vmatprep.subr.mxu0 0.0
    %1993 = vmatpush1.msra.mxu0 0.0
    %1994 = vmatprep.subr.mxu0 0.0
    %1995 = vmatpush1.msra.mxu0 0.0
    %1996 = vmatprep.subr.mxu0 0.0
    %1997 = vmatpush1.msra.mxu0 0.0
    %1998 = vmatprep.subr.mxu0 0.0
    %1999 = vmatpush1.msra.mxu0 0.0
    %2000 = vmatprep.subr.mxu0 0.0
    %2001 = vmatpush1.msra.mxu0 %v192
    %2002 = vmatprep.subr.mxu0 0.0
    %2003 = vmatpush1.msra.mxu0 %v191
    %2004 = vmatprep.subr.mxu0 0.0
    %2005 = vmatpush1.msra.mxu0 %v190
    %2006 = vmatprep.subr.mxu0 0.0
    %2007 = vmatpush1.msra.mxu0 %v189
    %2008 = vmatprep.subr.mxu0 0.0
    %2009 = vmatpush2.msra.mxu0 0.0
    %2010 = vmatprep.subr.mxu0 0.0
    %2011 = vmatpush2.msra.mxu0 0.0
    %2012 = vmatprep.subr.mxu0 0.0
    %2013 = vmatpush2.msra.mxu0 0.0
    %2014 = vmatprep.subr.mxu0 0.0
    %2015 = vmatpush2.msra.mxu0 0.0
    %2016 = vmatprep.subr.mxu0 0.0
    %2017 = vmatpush2.msra.mxu0 0.0
    %2018 = vmatprep.subr.mxu0 0.0
    %2019 = vmatpush2.msra.mxu0 0.0
    %2020 = vmatprep.subr.mxu0 0.0
    %2021 = vmatpush2.msra.mxu0 0.0
    %2022 = vmatprep.subr.mxu0 0.0
    %2023 = vmatpush2.msra.mxu0 0.0
    %2024 = vmatprep.subr.mxu0 0.0
    %2025 = vmatpush2.msra.mxu0 0.0
    %2026 = vmatprep.subr.mxu0 0.0
    %2027 = vmatpush2.msra.mxu0 0.0
    %2028 = vmatprep.subr.mxu0 0.0
    %2029 = vmatpush2.msra.mxu0 0.0
    %2030 = vmatprep.subr.mxu0 0.0
    %2031 = vmatpush2.msra.mxu0 0.0
    %2032 = vmatprep.subr.mxu0 0.0
    %2033 = vmatpush2.msra.mxu0 0.0
    %2034 = vmatprep.subr.mxu0 0.0
    %2035 = vmatpush2.msra.mxu0 0.0
    %2036 = vmatprep.subr.mxu0 0.0
    %2037 = vmatpush2.msra.mxu0 0.0
    %2038 = vmatprep.subr.mxu0 0.0
    %2039 = vmatpush2.msra.mxu0 0.0
    %2040 = vmatprep.mubr.f32.mxu0 0.0
    %2041 = vmatmul.mubr.f32.gmra.mxu0 %v1953
    %v2042 = vpop.f32.mrf.mxu0
    %v2043 = vadd.f32 %v1951, %v2042
    %v2044 = vpop.f32.mrf.mxu0
    %2045 = vmatprep.mubr.f32.mxu0 0.0
    %2046 = vmatmul.mubr.f32.gmra.mxu0 %v1956
    %v2047 = vpop.f32.mrf.mxu0
    %v2048 = vadd.f32 %v1951, %v2047
    %v2049 = vpop.f32.mrf.mxu0
    %2050 = vmatprep.mubr.f32.mxu0 0.0
    %2051 = vmatmul.mubr.f32.gmra.mxu0 %v1959
    %v2052 = vpop.f32.mrf.mxu0
    %v2053 = vadd.f32 %v1951, %v2052
    %v2054 = vpop.f32.mrf.mxu0
    %2055 = vmatprep.mubr.f32.mxu0 0.0
    %2056 = vmatmul.mubr.f32.gmra.mxu0 %v1962
    %v2057 = vpop.f32.mrf.mxu0
    %v2058 = vadd.f32 %v1951, %v2057
    %v2059 = vpop.f32.mrf.mxu0
    %2060 = vmatprep.mubr.f32.mxu0 0.0
    %2061 = vmatmul.mubr.f32.gmra.mxu0 %v1965
    %v2062 = vpop.f32.mrf.mxu0
    %v2063 = vadd.f32 %v1951, %v2062
    %v2064 = vpop.f32.mrf.mxu0
    %2065 = vmatprep.mubr.f32.mxu0 0.0
    %2066 = vmatmul.mubr.f32.gmra.mxu0 %v1968
    %v2067 = vpop.f32.mrf.mxu0
    %v2068 = vadd.f32 %v1951, %v2067
    %v2069 = vpop.f32.mrf.mxu0
    %2070 = vmatprep.mubr.f32.mxu0 0.0
    %2071 = vmatmul.mubr.f32.gmra.mxu0 %v1971
    %v2072 = vpop.f32.mrf.mxu0
    %v2073 = vadd.f32 %v1951, %v2072
    %v2074 = vpop.f32.mrf.mxu0
    %2075 = vmatprep.mubr.f32.mxu0 0.0
    %2076 = vmatmul.mubr.f32.gmra.mxu0 %v1974
    %v2077 = vpop.f32.mrf.mxu0
    %v2078 = vadd.f32 %v1951, %v2077
    %v2079 = vpop.f32.mrf.mxu0
    %2080 = vdwg.mxu0
    %v2081 = vmul.f32 %v2043, 0.5
    %v2082 = vmul.f32 %v2048, 0.5
    %v2083 = vmul.f32 %v2053, 0.5
    %v2084 = vmul.f32 %v2058, 0.5
    %v2085 = vmul.f32 %v2063, 0.5
    %v2086 = vmul.f32 %v2068, 0.5
    %v2087 = vmul.f32 %v2073, 0.5
    %v2088 = vmul.f32 %v2078, 0.5
    %v2089 = vmul.f32 %v2043, 0.70710677
    %v2090 = vmul.f32 %v2048, 0.70710677
    %v2091 = vmul.f32 %v2053, 0.70710677
    %v2092 = vmul.f32 %v2058, 0.70710677
    %v2093 = vmul.f32 %v2063, 0.70710677
    %v2094 = vmul.f32 %v2068, 0.70710677
    %v2095 = vmul.f32 %v2073, 0.70710677
    %v2096 = vmul.f32 %v2078, 0.70710677
    %v2097 = verf.f32.pop %v2089
    %v2098 = verf.f32.pop %v2090
    %v2099 = verf.f32.pop %v2091
    %v2100 = verf.f32.pop %v2092
    %v2101 = verf.f32.pop %v2093
    %v2102 = verf.f32.pop %v2094
    %v2103 = verf.f32.pop %v2095
    %v2104 = verf.f32.pop %v2096
    %v2105 = vadd.f32 %v2097, 1.0
    %v2106 = vadd.f32 %v2098, 1.0
    %v2107 = vadd.f32 %v2099, 1.0
    %v2108 = vadd.f32 %v2100, 1.0
    %v2109 = vadd.f32 %v2101, 1.0
    %v2110 = vadd.f32 %v2102, 1.0
    %v2111 = vadd.f32 %v2103, 1.0
    %v2112 = vadd.f32 %v2104, 1.0
    %v2113 = vmul.f32 %v2081, %v2105
    %v2114 = vmul.f32 %v2082, %v2106
    %v2115 = vmul.f32 %v2083, %v2107
    %v2116 = vmul.f32 %v2084, %v2108
    %v2117 = vmul.f32 %v2085, %v2109
    %v2118 = vmul.f32 %v2086, %v2110
    %v2119 = vmul.f32 %v2087, %v2111
    %v2120 = vmul.f32 %v2088, %v2112
    %v2122 = vsel %vm51, %v2113, 0
    %v2125 = vsel %vm51, %v2114, 0
    %v2128 = vsel %vm51, %v2115, 0
    %v2131 = vsel %vm51, %v2116, 0
    %v2134 = vsel %vm51, %v2117, 0
    %v2137 = vsel %vm51, %v2118, 0
    %v2140 = vsel %vm51, %v2119, 0
    %v2143 = vsel %vm51, %v2120, 0
    %2145 = vmatprep.subr.mxu0 0.0
    %2146 = vmatpush1.msra.mxu0 0.0
    %2147 = vmatprep.subr.mxu0 0.0
    %2148 = vmatpush1.msra.mxu0 0.0
    %2149 = vmatprep.subr.mxu0 0.0
    %2150 = vmatpush1.msra.mxu0 0.0
    %2151 = vmatprep.subr.mxu0 0.0
    %2152 = vmatpush1.msra.mxu0 0.0
    %2153 = vmatprep.subr.mxu0 0.0
    %2154 = vmatpush1.msra.mxu0 0.0
    %2155 = vmatprep.subr.mxu0 0.0
    %2156 = vmatpush1.msra.mxu0 0.0
    %2157 = vmatprep.subr.mxu0 0.0
    %2158 = vmatpush1.msra.mxu0 0.0
    %2159 = vmatprep.subr.mxu0 0.0
    %2160 = vmatpush1.msra.mxu0 0.0
    %2161 = vmatprep.subr.mxu0 0.0
    %2162 = vmatpush1.msra.mxu0 %v204
    %2163 = vmatprep.subr.mxu0 0.0
    %2164 = vmatpush1.msra.mxu0 %v203
    %2165 = vmatprep.subr.mxu0 0.0
    %2166 = vmatpush1.msra.mxu0 %v202
    %2167 = vmatprep.subr.mxu0 0.0
    %2168 = vmatpush1.msra.mxu0 %v201
    %2169 = vmatprep.subr.mxu0 0.0
    %2170 = vmatpush1.msra.mxu0 %v200
    %2171 = vmatprep.subr.mxu0 0.0
    %2172 = vmatpush1.msra.mxu0 %v199
    %2173 = vmatprep.subr.mxu0 0.0
    %2174 = vmatpush1.msra.mxu0 %v198
    %2175 = vmatprep.subr.mxu0 0.0
    %2176 = vmatpush1.msra.mxu0 %v197
    %2177 = vmatprep.subr.mxu0 0.0
    %2178 = vmatpush2.msra.mxu0 0.0
    %2179 = vmatprep.subr.mxu0 0.0
    %2180 = vmatpush2.msra.mxu0 0.0
    %2181 = vmatprep.subr.mxu0 0.0
    %2182 = vmatpush2.msra.mxu0 0.0
    %2183 = vmatprep.subr.mxu0 0.0
    %2184 = vmatpush2.msra.mxu0 0.0
    %2185 = vmatprep.subr.mxu0 0.0
    %2186 = vmatpush2.msra.mxu0 0.0
    %2187 = vmatprep.subr.mxu0 0.0
    %2188 = vmatpush2.msra.mxu0 0.0
    %2189 = vmatprep.subr.mxu0 0.0
    %2190 = vmatpush2.msra.mxu0 0.0
    %2191 = vmatprep.subr.mxu0 0.0
    %2192 = vmatpush2.msra.mxu0 0.0
    %2193 = vmatprep.subr.mxu0 0.0
    %2194 = vmatpush2.msra.mxu0 0.0
    %2195 = vmatprep.subr.mxu0 0.0
    %2196 = vmatpush2.msra.mxu0 0.0
    %2197 = vmatprep.subr.mxu0 0.0
    %2198 = vmatpush2.msra.mxu0 0.0
    %2199 = vmatprep.subr.mxu0 0.0
    %2200 = vmatpush2.msra.mxu0 0.0
    %2201 = vmatprep.subr.mxu0 0.0
    %2202 = vmatpush2.msra.mxu0 0.0
    %2203 = vmatprep.subr.mxu0 0.0
    %2204 = vmatpush2.msra.mxu0 0.0
    %2205 = vmatprep.subr.mxu0 0.0
    %2206 = vmatpush2.msra.mxu0 0.0
    %2207 = vmatprep.subr.mxu0 0.0
    %2208 = vmatpush2.msra.mxu0 0.0
    %2209 = vmatprep.mubr.f32.mxu0 0.0
    %2210 = vmatmul.mubr.f32.gmra.mxu0 %v2122
    %v2211 = vpop.f32.mrf.mxu0
    %v2212 = vadd.f32 0.0, %v2211
    %v2213 = vpop.f32.mrf.mxu0
    %2214 = vmatprep.mubr.f32.mxu0 0.0
    %2215 = vmatmul.mubr.f32.gmra.mxu0 %v2125
    %v2216 = vpop.f32.mrf.mxu0
    %v2217 = vadd.f32 0.0, %v2216
    %v2218 = vpop.f32.mrf.mxu0
    %2219 = vmatprep.mubr.f32.mxu0 0.0
    %2220 = vmatmul.mubr.f32.gmra.mxu0 %v2128
    %v2221 = vpop.f32.mrf.mxu0
    %v2222 = vadd.f32 0.0, %v2221
    %v2223 = vpop.f32.mrf.mxu0
    %2224 = vmatprep.mubr.f32.mxu0 0.0
    %2225 = vmatmul.mubr.f32.gmra.mxu0 %v2131
    %v2226 = vpop.f32.mrf.mxu0
    %v2227 = vadd.f32 0.0, %v2226
    %v2228 = vpop.f32.mrf.mxu0
    %2229 = vmatprep.mubr.f32.mxu0 0.0
    %2230 = vmatmul.mubr.f32.gmra.mxu0 %v2134
    %v2231 = vpop.f32.mrf.mxu0
    %v2232 = vadd.f32 0.0, %v2231
    %v2233 = vpop.f32.mrf.mxu0
    %2234 = vmatprep.mubr.f32.mxu0 0.0
    %2235 = vmatmul.mubr.f32.gmra.mxu0 %v2137
    %v2236 = vpop.f32.mrf.mxu0
    %v2237 = vadd.f32 0.0, %v2236
    %v2238 = vpop.f32.mrf.mxu0
    %2239 = vmatprep.mubr.f32.mxu0 0.0
    %2240 = vmatmul.mubr.f32.gmra.mxu0 %v2140
    %v2241 = vpop.f32.mrf.mxu0
    %v2242 = vadd.f32 0.0, %v2241
    %v2243 = vpop.f32.mrf.mxu0
    %2244 = vmatprep.mubr.f32.mxu0 0.0
    %2245 = vmatmul.mubr.f32.gmra.mxu0 %v2143
    %v2246 = vpop.f32.mrf.mxu0
    %v2247 = vadd.f32 0.0, %v2246
    %v2248 = vpop.f32.mrf.mxu0
    %2249 = vdwg.mxu0
    %v2250 = vadd.f32 %v1812, %v2212
    %v2251 = vadd.f32 %v1813, %v2217
    %v2252 = vadd.f32 %v1814, %v2222
    %v2253 = vadd.f32 %v1815, %v2227
    %v2254 = vadd.f32 %v1816, %v2232
    %v2255 = vadd.f32 %v1817, %v2237
    %v2256 = vadd.f32 %v1818, %v2242
    %v2257 = vadd.f32 %v1819, %v2247
    %v2258 = vlaneseq
    %v2259 = vshrl.u32 %v2258, 7
    %v2260 = vsub.s32 7, %v2259
    %v2261 = vrot.slane %v205, %v2260
    %v2262 = vadd.f32 %v2250, %v2261
    %v2263 = vadd.f32 %v2251, %v2261
    %v2264 = vadd.f32 %v2252, %v2261
    %v2265 = vadd.f32 %v2253, %v2261
    %v2266 = vadd.f32 %v2254, %v2261
    %v2267 = vadd.f32 %v2255, %v2261
    %v2268 = vadd.f32 %v2256, %v2261
    %v2269 = vadd.f32 %v2257, %v2261
    %s2270 = scalar_lea.vmem %s3, 96
    %v2271 = vld [vmem:[%s2270] sm:$0xff]
    %v2272 = vld [vmem:[%s2270 + $0x18] sm:$0xff]
    %v2273 = vld [vmem:[%s2270 + $0x30] sm:$0xff]
    %v2274 = vld [vmem:[%s2270 + $0x48] sm:$0xff]
    %v2275 = vld [vmem:[%s2270 + $0x8] sm:$0xff]
    %v2276 = vld [vmem:[%s2270 + $0x20] sm:$0xff]
    %v2277 = vld [vmem:[%s2270 + $0x38] sm:$0xff]
    %v2278 = vld [vmem:[%s2270 + $0x50] sm:$0xff]
    %v2279 = vld [vmem:[%s2270 + $0x10] sm:$0xff]
    %v2280 = vld [vmem:[%s2270 + $0x28] sm:$0xff]
    %v2281 = vld [vmem:[%s2270 + $0x40] sm:$0xff]
    %v2282 = vld [vmem:[%s2270 + $0x58] sm:$0xff]
    %s2283 = scalar_lea.vmem %s4, 64
    %v2284 = vld [vmem:[%s2283] sm:$0xff]
    %v2285 = vld [vmem:[%s2283 + $0x8] sm:$0xff]
    %v2286 = vld [vmem:[%s2283 + $0x10] sm:$0xff]
    %v2287 = vld [vmem:[%s2283 + $0x18] sm:$0xff]
    %v2288 = vld [vmem:[%s2283 + $0x20] sm:$0xff]
    %v2289 = vld [vmem:[%s2283 + $0x28] sm:$0xff]
    %v2290 = vld [vmem:[%s2283 + $0x30] sm:$0xff]
    %v2291 = vld [vmem:[%s2283 + $0x38] sm:$0xff]
    %s2292 = scalar_lea.vmem %s5, 8
    %v2293 = vld [vmem:[%s2292] sm:$0xff]
    %v2294 = vsel %vm206, %v2262, 0.0
    %2295 = vadd.xlane.f32.xlu0 %v2294
    %v2296 = vpop.xlane.xlu0 %2295
    %v2297 = vsel %vm206, %v2263, 0.0
    %2298 = vadd.xlane.f32.xlu0 %v2297
    %v2299 = vpop.xlane.xlu0 %2298
    %v2300 = vsel %vm206, %v2264, 0.0
    %2301 = vadd.xlane.f32.xlu0 %v2300
    %v2302 = vpop.xlane.xlu0 %2301
    %v2303 = vsel %vm206, %v2265, 0.0
    %2304 = vadd.xlane.f32.xlu0 %v2303
    %v2305 = vpop.xlane.xlu0 %2304
    %v2306 = vsel %vm206, %v2266, 0.0
    %2307 = vadd.xlane.f32.xlu0 %v2306
    %v2308 = vpop.xlane.xlu0 %2307
    %v2309 = vsel %vm206, %v2267, 0.0
    %2310 = vadd.xlane.f32.xlu0 %v2309
    %v2311 = vpop.xlane.xlu0 %2310
    %v2312 = vsel %vm206, %v2268, 0.0
    %2313 = vadd.xlane.f32.xlu0 %v2312
    %v2314 = vpop.xlane.xlu0 %2313
    %v2315 = vsel %vm206, %v2269, 0.0
    %2316 = vadd.xlane.f32.xlu0 %v2315
    %v2317 = vpop.xlane.xlu0 %2316
    %v2318 = vmul.f32 %v2296, %v231
    %v2319 = vmul.f32 %v2299, %v231
    %v2320 = vmul.f32 %v2302, %v231
    %v2321 = vmul.f32 %v2305, %v231
    %v2322 = vmul.f32 %v2308, %v231
    %v2323 = vmul.f32 %v2311, %v231
    %v2324 = vmul.f32 %v2314, %v231
    %v2325 = vmul.f32 %v2317, %v231
    %v2326 = vsub.f32 %v2262, %v2318
    %v2327 = vsub.f32 %v2263, %v2319
    %v2328 = vsub.f32 %v2264, %v2320
    %v2329 = vsub.f32 %v2265, %v2321
    %v2330 = vsub.f32 %v2266, %v2322
    %v2331 = vsub.f32 %v2267, %v2323
    %v2332 = vsub.f32 %v2268, %v2324
    %v2333 = vsub.f32 %v2269, %v2325
    %v2334 = vmul.f32 %v2326, %v2326
    %v2335 = vmul.f32 %v2327, %v2327
    %v2336 = vmul.f32 %v2328, %v2328
    %v2337 = vmul.f32 %v2329, %v2329
    %v2338 = vmul.f32 %v2330, %v2330
    %v2339 = vmul.f32 %v2331, %v2331
    %v2340 = vmul.f32 %v2332, %v2332
    %v2341 = vmul.f32 %v2333, %v2333
    %v2342 = vsel %vm206, %v2334, 0.0
    %2343 = vadd.xlane.f32.xlu0 %v2342
    %v2344 = vpop.xlane.xlu0 %2343
    %v2345 = vsel %vm206, %v2335, 0.0
    %2346 = vadd.xlane.f32.xlu0 %v2345
    %v2347 = vpop.xlane.xlu0 %2346
    %v2348 = vsel %vm206, %v2336, 0.0
    %2349 = vadd.xlane.f32.xlu0 %v2348
    %v2350 = vpop.xlane.xlu0 %2349
    %v2351 = vsel %vm206, %v2337, 0.0
    %2352 = vadd.xlane.f32.xlu0 %v2351
    %v2353 = vpop.xlane.xlu0 %2352
    %v2354 = vsel %vm206, %v2338, 0.0
    %2355 = vadd.xlane.f32.xlu0 %v2354
    %v2356 = vpop.xlane.xlu0 %2355
    %v2357 = vsel %vm206, %v2339, 0.0
    %2358 = vadd.xlane.f32.xlu0 %v2357
    %v2359 = vpop.xlane.xlu0 %2358
    %v2360 = vsel %vm206, %v2340, 0.0
    %2361 = vadd.xlane.f32.xlu0 %v2360
    %v2362 = vpop.xlane.xlu0 %2361
    %v2363 = vsel %vm206, %v2341, 0.0
    %2364 = vadd.xlane.f32.xlu0 %v2363
    %v2365 = vpop.xlane.xlu0 %2364
    %v2366 = vmul.f32 %v2344, %v231
    %v2367 = vmul.f32 %v2347, %v231
    %v2368 = vmul.f32 %v2350, %v231
    %v2369 = vmul.f32 %v2353, %v231
    %v2370 = vmul.f32 %v2356, %v231
    %v2371 = vmul.f32 %v2359, %v231
    %v2372 = vmul.f32 %v2362, %v231
    %v2373 = vmul.f32 %v2365, %v231
    %v2374 = vadd.f32 %v2366, 1e-12
    %v2375 = vadd.f32 %v2367, 1e-12
    %v2376 = vadd.f32 %v2368, 1e-12
    %v2377 = vadd.f32 %v2369, 1e-12
    %v2378 = vadd.f32 %v2370, 1e-12
    %v2379 = vadd.f32 %v2371, 1e-12
    %v2380 = vadd.f32 %v2372, 1e-12
    %v2381 = vadd.f32 %v2373, 1e-12
    %v2382 = vrsqrt.pop %v2374
    %v2383 = vrsqrt.pop %v2375
    %v2384 = vrsqrt.pop %v2376
    %v2385 = vrsqrt.pop %v2377
    %v2386 = vrsqrt.pop %v2378
    %v2387 = vrsqrt.pop %v2379
    %v2388 = vrsqrt.pop %v2380
    %v2389 = vrsqrt.pop %v2381
    %v2390 = vmul.f32 %v2326, %v2382
    %v2391 = vmul.f32 %v2327, %v2383
    %v2392 = vmul.f32 %v2328, %v2384
    %v2393 = vmul.f32 %v2329, %v2385
    %v2394 = vmul.f32 %v2330, %v2386
    %v2395 = vmul.f32 %v2331, %v2387
    %v2396 = vmul.f32 %v2332, %v2388
    %v2397 = vmul.f32 %v2333, %v2389
    %v2398 = vlaneseq
    %v2399 = vshrl.u32 %v2398, 7
    %v2400 = vsub.s32 0, %v2399
    %v2401 = vrot.slane %v2293, %v2400
    %v2402 = vmul.f32 %v2390, %v2401
    %v2403 = vmul.f32 %v2391, %v2401
    %v2404 = vmul.f32 %v2392, %v2401
    %v2405 = vmul.f32 %v2393, %v2401
    %v2406 = vmul.f32 %v2394, %v2401
    %v2407 = vmul.f32 %v2395, %v2401
    %v2408 = vmul.f32 %v2396, %v2401
    %v2409 = vmul.f32 %v2397, %v2401
    %v2410 = vlaneseq
    %v2411 = vshrl.u32 %v2410, 7
    %v2412 = vsub.s32 1, %v2411
    %v2413 = vrot.slane %v2293, %v2412
    %v2414 = vadd.f32 %v2402, %v2413
    %v2415 = vadd.f32 %v2403, %v2413
    %v2416 = vadd.f32 %v2404, %v2413
    %v2417 = vadd.f32 %v2405, %v2413
    %v2418 = vadd.f32 %v2406, %v2413
    %v2419 = vadd.f32 %v2407, %v2413
    %v2420 = vadd.f32 %v2408, %v2413
    %v2421 = vadd.f32 %v2409, %v2413
    %v2422 = vlaneseq
    %v2423 = vshrl.u32 %v2422, 7
    %v2424 = vsub.s32 2, %v2423
    %v2425 = vrot.slane %v2293, %v2424
    %v2427 = vsel %vm206, %v2414, 0
    %v2430 = vsel %vm206, %v2415, 0
    %v2433 = vsel %vm206, %v2416, 0
    %v2436 = vsel %vm206, %v2417, 0
    %v2439 = vsel %vm206, %v2418, 0
    %v2442 = vsel %vm206, %v2419, 0
    %v2445 = vsel %vm206, %v2420, 0
    %v2448 = vsel %vm206, %v2421, 0
    %2450 = vmatprep.subr.mxu0 0.0
    %2451 = vmatpush1.msra.mxu0 0.0
    %2452 = vmatprep.subr.mxu0 0.0
    %2453 = vmatpush1.msra.mxu0 0.0
    %2454 = vmatprep.subr.mxu0 0.0
    %2455 = vmatpush1.msra.mxu0 0.0
    %2456 = vmatprep.subr.mxu0 0.0
    %2457 = vmatpush1.msra.mxu0 0.0
    %2458 = vmatprep.subr.mxu0 0.0
    %2459 = vmatpush1.msra.mxu0 0.0
    %2460 = vmatprep.subr.mxu0 0.0
    %2461 = vmatpush1.msra.mxu0 0.0
    %2462 = vmatprep.subr.mxu0 0.0
    %2463 = vmatpush1.msra.mxu0 0.0
    %2464 = vmatprep.subr.mxu0 0.0
    %2465 = vmatpush1.msra.mxu0 0.0
    %2466 = vmatprep.subr.mxu0 0.0
    %2467 = vmatpush1.msra.mxu0 0.0
    %2468 = vmatprep.subr.mxu0 0.0
    %2469 = vmatpush1.msra.mxu0 0.0
    %2470 = vmatprep.subr.mxu0 0.0
    %2471 = vmatpush1.msra.mxu0 0.0
    %2472 = vmatprep.subr.mxu0 0.0
    %2473 = vmatpush1.msra.mxu0 0.0
    %2474 = vmatprep.subr.mxu0 0.0
    %2475 = vmatpush1.msra.mxu0 %v2274
    %2476 = vmatprep.subr.mxu0 0.0
    %2477 = vmatpush1.msra.mxu0 %v2273
    %2478 = vmatprep.subr.mxu0 0.0
    %2479 = vmatpush1.msra.mxu0 %v2272
    %2480 = vmatprep.subr.mxu0 0.0
    %2481 = vmatpush1.msra.mxu0 %v2271
    %2482 = vmatprep.subr.mxu0 0.0
    %2483 = vmatpush2.msra.mxu0 0.0
    %2484 = vmatprep.subr.mxu0 0.0
    %2485 = vmatpush2.msra.mxu0 0.0
    %2486 = vmatprep.subr.mxu0 0.0
    %2487 = vmatpush2.msra.mxu0 0.0
    %2488 = vmatprep.subr.mxu0 0.0
    %2489 = vmatpush2.msra.mxu0 0.0
    %2490 = vmatprep.subr.mxu0 0.0
    %2491 = vmatpush2.msra.mxu0 0.0
    %2492 = vmatprep.subr.mxu0 0.0
    %2493 = vmatpush2.msra.mxu0 0.0
    %2494 = vmatprep.subr.mxu0 0.0
    %2495 = vmatpush2.msra.mxu0 0.0
    %2496 = vmatprep.subr.mxu0 0.0
    %2497 = vmatpush2.msra.mxu0 0.0
    %2498 = vmatprep.subr.mxu0 0.0
    %2499 = vmatpush2.msra.mxu0 0.0
    %2500 = vmatprep.subr.mxu0 0.0
    %2501 = vmatpush2.msra.mxu0 0.0
    %2502 = vmatprep.subr.mxu0 0.0
    %2503 = vmatpush2.msra.mxu0 0.0
    %2504 = vmatprep.subr.mxu0 0.0
    %2505 = vmatpush2.msra.mxu0 0.0
    %2506 = vmatprep.subr.mxu0 0.0
    %2507 = vmatpush2.msra.mxu0 0.0
    %2508 = vmatprep.subr.mxu0 0.0
    %2509 = vmatpush2.msra.mxu0 0.0
    %2510 = vmatprep.subr.mxu0 0.0
    %2511 = vmatpush2.msra.mxu0 0.0
    %2512 = vmatprep.subr.mxu0 0.0
    %2513 = vmatpush2.msra.mxu0 0.0
    %2514 = vmatprep.mubr.f32.mxu0 0.0
    %2515 = vmatmul.mubr.f32.gmra.mxu0 %v2427
    %v2516 = vpop.f32.mrf.mxu0
    %v2517 = vadd.f32 %v2425, %v2516
    %v2518 = vpop.f32.mrf.mxu0
    %2519 = vmatprep.mubr.f32.mxu0 0.0
    %2520 = vmatmul.mubr.f32.gmra.mxu0 %v2430
    %v2521 = vpop.f32.mrf.mxu0
    %v2522 = vadd.f32 %v2425, %v2521
    %v2523 = vpop.f32.mrf.mxu0
    %2524 = vmatprep.mubr.f32.mxu0 0.0
    %2525 = vmatmul.mubr.f32.gmra.mxu0 %v2433
    %v2526 = vpop.f32.mrf.mxu0
    %v2527 = vadd.f32 %v2425, %v2526
    %v2528 = vpop.f32.mrf.mxu0
    %2529 = vmatprep.mubr.f32.mxu0 0.0
    %2530 = vmatmul.mubr.f32.gmra.mxu0 %v2436
    %v2531 = vpop.f32.mrf.mxu0
    %v2532 = vadd.f32 %v2425, %v2531
    %v2533 = vpop.f32.mrf.mxu0
    %2534 = vmatprep.mubr.f32.mxu0 0.0
    %2535 = vmatmul.mubr.f32.gmra.mxu0 %v2439
    %v2536 = vpop.f32.mrf.mxu0
    %v2537 = vadd.f32 %v2425, %v2536
    %v2538 = vpop.f32.mrf.mxu0
    %2539 = vmatprep.mubr.f32.mxu0 0.0
    %2540 = vmatmul.mubr.f32.gmra.mxu0 %v2442
    %v2541 = vpop.f32.mrf.mxu0
    %v2542 = vadd.f32 %v2425, %v2541
    %v2543 = vpop.f32.mrf.mxu0
    %2544 = vmatprep.mubr.f32.mxu0 0.0
    %2545 = vmatmul.mubr.f32.gmra.mxu0 %v2445
    %v2546 = vpop.f32.mrf.mxu0
    %v2547 = vadd.f32 %v2425, %v2546
    %v2548 = vpop.f32.mrf.mxu0
    %2549 = vmatprep.mubr.f32.mxu0 0.0
    %2550 = vmatmul.mubr.f32.gmra.mxu0 %v2448
    %v2551 = vpop.f32.mrf.mxu0
    %v2552 = vadd.f32 %v2425, %v2551
    %v2553 = vpop.f32.mrf.mxu0
    %2554 = vdwg.mxu0
    %2559 = vrot.lane.b32.xlu0 %v2517, 96
    %v2560 = vpop.permute.xlu0 %2559
    %2561 = vrot.lane.b32.xlu0 %v2522, 96
    %v2562 = vpop.permute.xlu0 %2561
    %2563 = vrot.lane.b32.xlu0 %v2527, 96
    %v2564 = vpop.permute.xlu0 %2563
    %2565 = vrot.lane.b32.xlu0 %v2532, 96
    %v2566 = vpop.permute.xlu0 %2565
    %v2567 = vsel %vm481, %v2517, 0
    %v2569 = vsel %vm481, %v2522, 0
    %v2571 = vsel %vm481, %v2527, 0
    %v2573 = vsel %vm481, %v2532, 0
    %v2575 = vsel %vm481, %v2560, 0
    %v2577 = vsel %vm481, %v2562, 0
    %v2579 = vsel %vm481, %v2564, 0
    %v2581 = vsel %vm481, %v2566, 0
    %2583 = vmatprep.subr.mxu0 0.0
    %2584 = vmatpush1.xpose.msra.mxu0 0.0
    %2585 = vmatprep.subr.mxu0 0.0
    %2586 = vmatpush1.xpose.msra.mxu0 0.0
    %2587 = vmatprep.subr.mxu0 0.0
    %2588 = vmatpush1.xpose.msra.mxu0 0.0
    %2589 = vmatprep.subr.mxu0 0.0
    %2590 = vmatpush1.xpose.msra.mxu0 0.0
    %2591 = vmatprep.subr.mxu0 0.0
    %2592 = vmatpush1.xpose.msra.mxu0 0.0
    %2593 = vmatprep.subr.mxu0 0.0
    %2594 = vmatpush1.xpose.msra.mxu0 0.0
    %2595 = vmatprep.subr.mxu0 0.0
    %2596 = vmatpush1.xpose.msra.mxu0 0.0
    %2597 = vmatprep.subr.mxu0 0.0
    %2598 = vmatpush1.xpose.msra.mxu0 0.0
    %2599 = vmatprep.subr.mxu0 0.0
    %2600 = vmatpush1.xpose.msra.mxu0 0.0
    %2601 = vmatprep.subr.mxu0 0.0
    %2602 = vmatpush1.xpose.msra.mxu0 0.0
    %2603 = vmatprep.subr.mxu0 0.0
    %2604 = vmatpush1.xpose.msra.mxu0 0.0
    %2605 = vmatprep.subr.mxu0 0.0
    %2606 = vmatpush1.xpose.msra.mxu0 0.0
    %2607 = vmatprep.subr.mxu0 0.0
    %2608 = vmatpush1.xpose.msra.mxu0 %v2581
    %2609 = vmatprep.subr.mxu0 0.0
    %2610 = vmatpush1.xpose.msra.mxu0 %v2579
    %2611 = vmatprep.subr.mxu0 0.0
    %2612 = vmatpush1.xpose.msra.mxu0 %v2577
    %2613 = vmatprep.subr.mxu0 0.0
    %2614 = vmatpush1.xpose.msra.mxu0 %v2575
    %2615 = vmatprep.subr.mxu0 0.0
    %2616 = vmatpush2.xpose.msra.mxu0 0.0
    %2617 = vmatprep.subr.mxu0 0.0
    %2618 = vmatpush2.xpose.msra.mxu0 0.0
    %2619 = vmatprep.subr.mxu0 0.0
    %2620 = vmatpush2.xpose.msra.mxu0 0.0
    %2621 = vmatprep.subr.mxu0 0.0
    %2622 = vmatpush2.xpose.msra.mxu0 0.0
    %2623 = vmatprep.subr.mxu0 0.0
    %2624 = vmatpush2.xpose.msra.mxu0 0.0
    %2625 = vmatprep.subr.mxu0 0.0
    %2626 = vmatpush2.xpose.msra.mxu0 0.0
    %2627 = vmatprep.subr.mxu0 0.0
    %2628 = vmatpush2.xpose.msra.mxu0 0.0
    %2629 = vmatprep.subr.mxu0 0.0
    %2630 = vmatpush2.xpose.msra.mxu0 0.0
    %2631 = vmatprep.subr.mxu0 0.0
    %2632 = vmatpush2.xpose.msra.mxu0 0.0
    %2633 = vmatprep.subr.mxu0 0.0
    %2634 = vmatpush2.xpose.msra.mxu0 0.0
    %2635 = vmatprep.subr.mxu0 0.0
    %2636 = vmatpush2.xpose.msra.mxu0 0.0
    %2637 = vmatprep.subr.mxu0 0.0
    %2638 = vmatpush2.xpose.msra.mxu0 0.0
    %2639 = vmatprep.subr.mxu0 0.0
    %2640 = vmatpush2.xpose.msra.mxu0 0.0
    %2641 = vmatprep.subr.mxu0 0.0
    %2642 = vmatpush2.xpose.msra.mxu0 0.0
    %2643 = vmatprep.subr.mxu0 0.0
    %2644 = vmatpush2.xpose.msra.mxu0 0.0
    %2645 = vmatprep.subr.mxu0 0.0
    %2646 = vmatpush2.xpose.msra.mxu0 0.0
    %2647 = vmatprep.mubr.f32.mxu0 0.0
    %2648 = vmatmul.mubr.f32.gmra.mxu0 %v2567
    %v2649 = vpop.f32.mrf.mxu0
    %v2650 = vadd.f32 %v184, %v2649
    %v2651 = vpop.f32.mrf.mxu0
    %2652 = vmatprep.mubr.f32.mxu0 0.0
    %2653 = vmatmul.mubr.f32.gmra.mxu0 %v2569
    %v2654 = vpop.f32.mrf.mxu0
    %v2655 = vadd.f32 %v184, %v2654
    %v2656 = vpop.f32.mrf.mxu0
    %2657 = vmatprep.mubr.f32.mxu0 0.0
    %2658 = vmatmul.mubr.f32.gmra.mxu0 %v2571
    %v2659 = vpop.f32.mrf.mxu0
    %v2660 = vadd.f32 %v184, %v2659
    %v2661 = vpop.f32.mrf.mxu0
    %2662 = vmatprep.mubr.f32.mxu0 0.0
    %2663 = vmatmul.mubr.f32.gmra.mxu0 %v2573
    %v2664 = vpop.f32.mrf.mxu0
    %v2665 = vadd.f32 %v184, %v2664
    %v2666 = vpop.f32.mrf.mxu0
    %2667 = vdwg.mxu0
    %v2668 = vsel %vm206, %v2650, -inf
    %2669 = vmax.xlane.f32.xlu0 %v2668
    %v2670 = vpop.xlane.xlu0 %2669
    %v2671 = vsel %vm206, %v2655, -inf
    %2672 = vmax.xlane.f32.xlu0 %v2671
    %v2673 = vpop.xlane.xlu0 %2672
    %v2674 = vsel %vm206, %v2660, -inf
    %2675 = vmax.xlane.f32.xlu0 %v2674
    %v2676 = vpop.xlane.xlu0 %2675
    %v2677 = vsel %vm206, %v2665, -inf
    %2678 = vmax.xlane.f32.xlu0 %v2677
    %v2679 = vpop.xlane.xlu0 %2678
    %v2680 = vsub.f32 %v2650, %v2670
    %v2681 = vsub.f32 %v2655, %v2673
    %v2682 = vsub.f32 %v2660, %v2676
    %v2683 = vsub.f32 %v2665, %v2679
    %v2684 = vmul.f32 %v2680, 1.442695
    %v2685 = vpow.pop %v2684
    %v2686 = vmul.f32 %v2681, 1.442695
    %v2687 = vpow.pop %v2686
    %v2688 = vmul.f32 %v2682, 1.442695
    %v2689 = vpow.pop %v2688
    %v2690 = vmul.f32 %v2683, 1.442695
    %v2691 = vpow.pop %v2690
    %v2692 = vsel %vm206, %v2685, 0.0
    %2693 = vadd.xlane.f32.xlu0 %v2692
    %v2694 = vpop.xlane.xlu0 %2693
    %v2695 = vsel %vm206, %v2687, 0.0
    %2696 = vadd.xlane.f32.xlu0 %v2695
    %v2697 = vpop.xlane.xlu0 %2696
    %v2698 = vsel %vm206, %v2689, 0.0
    %2699 = vadd.xlane.f32.xlu0 %v2698
    %v2700 = vpop.xlane.xlu0 %2699
    %v2701 = vsel %vm206, %v2691, 0.0
    %2702 = vadd.xlane.f32.xlu0 %v2701
    %v2703 = vpop.xlane.xlu0 %2702
    %2704 = vrot.lane.b32.xlu0 %v2517, 64
    %v2705 = vpop.permute.xlu0 %2704
    %2706 = vrot.lane.b32.xlu0 %v2522, 64
    %v2707 = vpop.permute.xlu0 %2706
    %2708 = vrot.lane.b32.xlu0 %v2527, 64
    %v2709 = vpop.permute.xlu0 %2708
    %2710 = vrot.lane.b32.xlu0 %v2532, 64
    %v2711 = vpop.permute.xlu0 %2710
    %v2717 = vsel %vm206, %v2685, 0
    %v2720 = vsel %vm206, %v2687, 0
    %v2723 = vsel %vm206, %v2689, 0
    %v2726 = vsel %vm206, %v2691, 0
    %2728 = vmatprep.subr.mxu0 0.0
    %2729 = vmatpush1.msra.mxu0 0.0
    %2730 = vmatprep.subr.mxu0 0.0
    %2731 = vmatpush1.msra.mxu0 0.0
    %2732 = vmatprep.subr.mxu0 0.0
    %2733 = vmatpush1.msra.mxu0 0.0
    %2734 = vmatprep.subr.mxu0 0.0
    %2735 = vmatpush1.msra.mxu0 0.0
    %2736 = vmatprep.subr.mxu0 0.0
    %2737 = vmatpush1.msra.mxu0 0.0
    %2738 = vmatprep.subr.mxu0 0.0
    %2739 = vmatpush1.msra.mxu0 0.0
    %2740 = vmatprep.subr.mxu0 0.0
    %2741 = vmatpush1.msra.mxu0 0.0
    %2742 = vmatprep.subr.mxu0 0.0
    %2743 = vmatpush1.msra.mxu0 0.0
    %2744 = vmatprep.subr.mxu0 0.0
    %2745 = vmatpush1.msra.mxu0 0.0
    %2746 = vmatprep.subr.mxu0 0.0
    %2747 = vmatpush1.msra.mxu0 0.0
    %2748 = vmatprep.subr.mxu0 0.0
    %2749 = vmatpush1.msra.mxu0 0.0
    %2750 = vmatprep.subr.mxu0 0.0
    %2751 = vmatpush1.msra.mxu0 0.0
    %2752 = vmatprep.subr.mxu0 0.0
    %2753 = vmatpush1.msra.mxu0 %v2711
    %2754 = vmatprep.subr.mxu0 0.0
    %2755 = vmatpush1.msra.mxu0 %v2709
    %2756 = vmatprep.subr.mxu0 0.0
    %2757 = vmatpush1.msra.mxu0 %v2707
    %2758 = vmatprep.subr.mxu0 0.0
    %2759 = vmatpush1.msra.mxu0 %v2705
    %2760 = vmatprep.subr.mxu0 0.0
    %2761 = vmatpush2.msra.mxu0 0.0
    %2762 = vmatprep.subr.mxu0 0.0
    %2763 = vmatpush2.msra.mxu0 0.0
    %2764 = vmatprep.subr.mxu0 0.0
    %2765 = vmatpush2.msra.mxu0 0.0
    %2766 = vmatprep.subr.mxu0 0.0
    %2767 = vmatpush2.msra.mxu0 0.0
    %2768 = vmatprep.subr.mxu0 0.0
    %2769 = vmatpush2.msra.mxu0 0.0
    %2770 = vmatprep.subr.mxu0 0.0
    %2771 = vmatpush2.msra.mxu0 0.0
    %2772 = vmatprep.subr.mxu0 0.0
    %2773 = vmatpush2.msra.mxu0 0.0
    %2774 = vmatprep.subr.mxu0 0.0
    %2775 = vmatpush2.msra.mxu0 0.0
    %2776 = vmatprep.subr.mxu0 0.0
    %2777 = vmatpush2.msra.mxu0 0.0
    %2778 = vmatprep.subr.mxu0 0.0
    %2779 = vmatpush2.msra.mxu0 0.0
    %2780 = vmatprep.subr.mxu0 0.0
    %2781 = vmatpush2.msra.mxu0 0.0
    %2782 = vmatprep.subr.mxu0 0.0
    %2783 = vmatpush2.msra.mxu0 0.0
    %2784 = vmatprep.subr.mxu0 0.0
    %2785 = vmatpush2.msra.mxu0 0.0
    %2786 = vmatprep.subr.mxu0 0.0
    %2787 = vmatpush2.msra.mxu0 0.0
    %2788 = vmatprep.subr.mxu0 0.0
    %2789 = vmatpush2.msra.mxu0 0.0
    %2790 = vmatprep.subr.mxu0 0.0
    %2791 = vmatpush2.msra.mxu0 0.0
    %2792 = vmatprep.mubr.f32.mxu0 0.0
    %2793 = vmatmul.mubr.f32.gmra.mxu0 %v2717
    %v2794 = vpop.f32.mrf.mxu0
    %v2795 = vadd.f32 0.0, %v2794
    %v2796 = vpop.f32.mrf.mxu0
    %2797 = vmatprep.mubr.f32.mxu0 0.0
    %2798 = vmatmul.mubr.f32.gmra.mxu0 %v2720
    %v2799 = vpop.f32.mrf.mxu0
    %v2800 = vadd.f32 0.0, %v2799
    %v2801 = vpop.f32.mrf.mxu0
    %2802 = vmatprep.mubr.f32.mxu0 0.0
    %2803 = vmatmul.mubr.f32.gmra.mxu0 %v2723
    %v2804 = vpop.f32.mrf.mxu0
    %v2805 = vadd.f32 0.0, %v2804
    %v2806 = vpop.f32.mrf.mxu0
    %2807 = vmatprep.mubr.f32.mxu0 0.0
    %2808 = vmatmul.mubr.f32.gmra.mxu0 %v2726
    %v2809 = vpop.f32.mrf.mxu0
    %v2810 = vadd.f32 0.0, %v2809
    %v2811 = vpop.f32.mrf.mxu0
    %2812 = vdwg.mxu0
    %v2813 = vrcp.pop %v2694
    %v2814 = vrcp.pop %v2697
    %v2815 = vrcp.pop %v2700
    %v2816 = vrcp.pop %v2703
    %v2817 = vmul.f32 %v2795, %v2813
    %v2818 = vmul.f32 %v2800, %v2814
    %v2819 = vmul.f32 %v2805, %v2815
    %v2820 = vmul.f32 %v2810, %v2816
    %2825 = vrot.lane.b32.xlu0 %v2537, 96
    %v2826 = vpop.permute.xlu0 %2825
    %2827 = vrot.lane.b32.xlu0 %v2542, 96
    %v2828 = vpop.permute.xlu0 %2827
    %2829 = vrot.lane.b32.xlu0 %v2547, 96
    %v2830 = vpop.permute.xlu0 %2829
    %2831 = vrot.lane.b32.xlu0 %v2552, 96
    %v2832 = vpop.permute.xlu0 %2831
    %v2833 = vsel %vm481, %v2537, 0
    %v2835 = vsel %vm481, %v2542, 0
    %v2837 = vsel %vm481, %v2547, 0
    %v2839 = vsel %vm481, %v2552, 0
    %v2841 = vsel %vm481, %v2826, 0
    %v2843 = vsel %vm481, %v2828, 0
    %v2845 = vsel %vm481, %v2830, 0
    %v2847 = vsel %vm481, %v2832, 0
    %2849 = vmatprep.subr.mxu0 0.0
    %2850 = vmatpush1.xpose.msra.mxu0 0.0
    %2851 = vmatprep.subr.mxu0 0.0
    %2852 = vmatpush1.xpose.msra.mxu0 0.0
    %2853 = vmatprep.subr.mxu0 0.0
    %2854 = vmatpush1.xpose.msra.mxu0 0.0
    %2855 = vmatprep.subr.mxu0 0.0
    %2856 = vmatpush1.xpose.msra.mxu0 0.0
    %2857 = vmatprep.subr.mxu0 0.0
    %2858 = vmatpush1.xpose.msra.mxu0 0.0
    %2859 = vmatprep.subr.mxu0 0.0
    %2860 = vmatpush1.xpose.msra.mxu0 0.0
    %2861 = vmatprep.subr.mxu0 0.0
    %2862 = vmatpush1.xpose.msra.mxu0 0.0
    %2863 = vmatprep.subr.mxu0 0.0
    %2864 = vmatpush1.xpose.msra.mxu0 0.0
    %2865 = vmatprep.subr.mxu0 0.0
    %2866 = vmatpush1.xpose.msra.mxu0 0.0
    %2867 = vmatprep.subr.mxu0 0.0
    %2868 = vmatpush1.xpose.msra.mxu0 0.0
    %2869 = vmatprep.subr.mxu0 0.0
    %2870 = vmatpush1.xpose.msra.mxu0 0.0
    %2871 = vmatprep.subr.mxu0 0.0
    %2872 = vmatpush1.xpose.msra.mxu0 0.0
    %2873 = vmatprep.subr.mxu0 0.0
    %2874 = vmatpush1.xpose.msra.mxu0 %v2847
    %2875 = vmatprep.subr.mxu0 0.0
    %2876 = vmatpush1.xpose.msra.mxu0 %v2845
    %2877 = vmatprep.subr.mxu0 0.0
    %2878 = vmatpush1.xpose.msra.mxu0 %v2843
    %2879 = vmatprep.subr.mxu0 0.0
    %2880 = vmatpush1.xpose.msra.mxu0 %v2841
    %2881 = vmatprep.subr.mxu0 0.0
    %2882 = vmatpush2.xpose.msra.mxu0 0.0
    %2883 = vmatprep.subr.mxu0 0.0
    %2884 = vmatpush2.xpose.msra.mxu0 0.0
    %2885 = vmatprep.subr.mxu0 0.0
    %2886 = vmatpush2.xpose.msra.mxu0 0.0
    %2887 = vmatprep.subr.mxu0 0.0
    %2888 = vmatpush2.xpose.msra.mxu0 0.0
    %2889 = vmatprep.subr.mxu0 0.0
    %2890 = vmatpush2.xpose.msra.mxu0 0.0
    %2891 = vmatprep.subr.mxu0 0.0
    %2892 = vmatpush2.xpose.msra.mxu0 0.0
    %2893 = vmatprep.subr.mxu0 0.0
    %2894 = vmatpush2.xpose.msra.mxu0 0.0
    %2895 = vmatprep.subr.mxu0 0.0
    %2896 = vmatpush2.xpose.msra.mxu0 0.0
    %2897 = vmatprep.subr.mxu0 0.0
    %2898 = vmatpush2.xpose.msra.mxu0 0.0
    %2899 = vmatprep.subr.mxu0 0.0
    %2900 = vmatpush2.xpose.msra.mxu0 0.0
    %2901 = vmatprep.subr.mxu0 0.0
    %2902 = vmatpush2.xpose.msra.mxu0 0.0
    %2903 = vmatprep.subr.mxu0 0.0
    %2904 = vmatpush2.xpose.msra.mxu0 0.0
    %2905 = vmatprep.subr.mxu0 0.0
    %2906 = vmatpush2.xpose.msra.mxu0 0.0
    %2907 = vmatprep.subr.mxu0 0.0
    %2908 = vmatpush2.xpose.msra.mxu0 0.0
    %2909 = vmatprep.subr.mxu0 0.0
    %2910 = vmatpush2.xpose.msra.mxu0 0.0
    %2911 = vmatprep.subr.mxu0 0.0
    %2912 = vmatpush2.xpose.msra.mxu0 0.0
    %2913 = vmatprep.mubr.f32.mxu0 0.0
    %2914 = vmatmul.mubr.f32.gmra.mxu0 %v2833
    %v2915 = vpop.f32.mrf.mxu0
    %v2916 = vadd.f32 %v184, %v2915
    %v2917 = vpop.f32.mrf.mxu0
    %2918 = vmatprep.mubr.f32.mxu0 0.0
    %2919 = vmatmul.mubr.f32.gmra.mxu0 %v2835
    %v2920 = vpop.f32.mrf.mxu0
    %v2921 = vadd.f32 %v184, %v2920
    %v2922 = vpop.f32.mrf.mxu0
    %2923 = vmatprep.mubr.f32.mxu0 0.0
    %2924 = vmatmul.mubr.f32.gmra.mxu0 %v2837
    %v2925 = vpop.f32.mrf.mxu0
    %v2926 = vadd.f32 %v184, %v2925
    %v2927 = vpop.f32.mrf.mxu0
    %2928 = vmatprep.mubr.f32.mxu0 0.0
    %2929 = vmatmul.mubr.f32.gmra.mxu0 %v2839
    %v2930 = vpop.f32.mrf.mxu0
    %v2931 = vadd.f32 %v184, %v2930
    %v2932 = vpop.f32.mrf.mxu0
    %2933 = vdwg.mxu0
    %v2934 = vsel %vm206, %v2916, -inf
    %2935 = vmax.xlane.f32.xlu0 %v2934
    %v2936 = vpop.xlane.xlu0 %2935
    %v2937 = vsel %vm206, %v2921, -inf
    %2938 = vmax.xlane.f32.xlu0 %v2937
    %v2939 = vpop.xlane.xlu0 %2938
    %v2940 = vsel %vm206, %v2926, -inf
    %2941 = vmax.xlane.f32.xlu0 %v2940
    %v2942 = vpop.xlane.xlu0 %2941
    %v2943 = vsel %vm206, %v2931, -inf
    %2944 = vmax.xlane.f32.xlu0 %v2943
    %v2945 = vpop.xlane.xlu0 %2944
    %v2946 = vsub.f32 %v2916, %v2936
    %v2947 = vsub.f32 %v2921, %v2939
    %v2948 = vsub.f32 %v2926, %v2942
    %v2949 = vsub.f32 %v2931, %v2945
    %v2950 = vmul.f32 %v2946, 1.442695
    %v2951 = vpow.pop %v2950
    %v2952 = vmul.f32 %v2947, 1.442695
    %v2953 = vpow.pop %v2952
    %v2954 = vmul.f32 %v2948, 1.442695
    %v2955 = vpow.pop %v2954
    %v2956 = vmul.f32 %v2949, 1.442695
    %v2957 = vpow.pop %v2956
    %v2958 = vsel %vm206, %v2951, 0.0
    %2959 = vadd.xlane.f32.xlu0 %v2958
    %v2960 = vpop.xlane.xlu0 %2959
    %v2961 = vsel %vm206, %v2953, 0.0
    %2962 = vadd.xlane.f32.xlu0 %v2961
    %v2963 = vpop.xlane.xlu0 %2962
    %v2964 = vsel %vm206, %v2955, 0.0
    %2965 = vadd.xlane.f32.xlu0 %v2964
    %v2966 = vpop.xlane.xlu0 %2965
    %v2967 = vsel %vm206, %v2957, 0.0
    %2968 = vadd.xlane.f32.xlu0 %v2967
    %v2969 = vpop.xlane.xlu0 %2968
    %2970 = vrot.lane.b32.xlu0 %v2537, 64
    %v2971 = vpop.permute.xlu0 %2970
    %2972 = vrot.lane.b32.xlu0 %v2542, 64
    %v2973 = vpop.permute.xlu0 %2972
    %2974 = vrot.lane.b32.xlu0 %v2547, 64
    %v2975 = vpop.permute.xlu0 %2974
    %2976 = vrot.lane.b32.xlu0 %v2552, 64
    %v2977 = vpop.permute.xlu0 %2976
    %v2983 = vsel %vm206, %v2951, 0
    %v2986 = vsel %vm206, %v2953, 0
    %v2989 = vsel %vm206, %v2955, 0
    %v2992 = vsel %vm206, %v2957, 0
    %2994 = vmatprep.subr.mxu0 0.0
    %2995 = vmatpush1.msra.mxu0 0.0
    %2996 = vmatprep.subr.mxu0 0.0
    %2997 = vmatpush1.msra.mxu0 0.0
    %2998 = vmatprep.subr.mxu0 0.0
    %2999 = vmatpush1.msra.mxu0 0.0
    %3000 = vmatprep.subr.mxu0 0.0
    %3001 = vmatpush1.msra.mxu0 0.0
    %3002 = vmatprep.subr.mxu0 0.0
    %3003 = vmatpush1.msra.mxu0 0.0
    %3004 = vmatprep.subr.mxu0 0.0
    %3005 = vmatpush1.msra.mxu0 0.0
    %3006 = vmatprep.subr.mxu0 0.0
    %3007 = vmatpush1.msra.mxu0 0.0
    %3008 = vmatprep.subr.mxu0 0.0
    %3009 = vmatpush1.msra.mxu0 0.0
    %3010 = vmatprep.subr.mxu0 0.0
    %3011 = vmatpush1.msra.mxu0 0.0
    %3012 = vmatprep.subr.mxu0 0.0
    %3013 = vmatpush1.msra.mxu0 0.0
    %3014 = vmatprep.subr.mxu0 0.0
    %3015 = vmatpush1.msra.mxu0 0.0
    %3016 = vmatprep.subr.mxu0 0.0
    %3017 = vmatpush1.msra.mxu0 0.0
    %3018 = vmatprep.subr.mxu0 0.0
    %3019 = vmatpush1.msra.mxu0 %v2977
    %3020 = vmatprep.subr.mxu0 0.0
    %3021 = vmatpush1.msra.mxu0 %v2975
    %3022 = vmatprep.subr.mxu0 0.0
    %3023 = vmatpush1.msra.mxu0 %v2973
    %3024 = vmatprep.subr.mxu0 0.0
    %3025 = vmatpush1.msra.mxu0 %v2971
    %3026 = vmatprep.subr.mxu0 0.0
    %3027 = vmatpush2.msra.mxu0 0.0
    %3028 = vmatprep.subr.mxu0 0.0
    %3029 = vmatpush2.msra.mxu0 0.0
    %3030 = vmatprep.subr.mxu0 0.0
    %3031 = vmatpush2.msra.mxu0 0.0
    %3032 = vmatprep.subr.mxu0 0.0
    %3033 = vmatpush2.msra.mxu0 0.0
    %3034 = vmatprep.subr.mxu0 0.0
    %3035 = vmatpush2.msra.mxu0 0.0
    %3036 = vmatprep.subr.mxu0 0.0
    %3037 = vmatpush2.msra.mxu0 0.0
    %3038 = vmatprep.subr.mxu0 0.0
    %3039 = vmatpush2.msra.mxu0 0.0
    %3040 = vmatprep.subr.mxu0 0.0
    %3041 = vmatpush2.msra.mxu0 0.0
    %3042 = vmatprep.subr.mxu0 0.0
    %3043 = vmatpush2.msra.mxu0 0.0
    %3044 = vmatprep.subr.mxu0 0.0
    %3045 = vmatpush2.msra.mxu0 0.0
    %3046 = vmatprep.subr.mxu0 0.0
    %3047 = vmatpush2.msra.mxu0 0.0
    %3048 = vmatprep.subr.mxu0 0.0
    %3049 = vmatpush2.msra.mxu0 0.0
    %3050 = vmatprep.subr.mxu0 0.0
    %3051 = vmatpush2.msra.mxu0 0.0
    %3052 = vmatprep.subr.mxu0 0.0
    %3053 = vmatpush2.msra.mxu0 0.0
    %3054 = vmatprep.subr.mxu0 0.0
    %3055 = vmatpush2.msra.mxu0 0.0
    %3056 = vmatprep.subr.mxu0 0.0
    %3057 = vmatpush2.msra.mxu0 0.0
    %3058 = vmatprep.mubr.f32.mxu0 0.0
    %3059 = vmatmul.mubr.f32.gmra.mxu0 %v2983
    %v3060 = vpop.f32.mrf.mxu0
    %v3061 = vadd.f32 0.0, %v3060
    %v3062 = vpop.f32.mrf.mxu0
    %3063 = vmatprep.mubr.f32.mxu0 0.0
    %3064 = vmatmul.mubr.f32.gmra.mxu0 %v2986
    %v3065 = vpop.f32.mrf.mxu0
    %v3066 = vadd.f32 0.0, %v3065
    %v3067 = vpop.f32.mrf.mxu0
    %3068 = vmatprep.mubr.f32.mxu0 0.0
    %3069 = vmatmul.mubr.f32.gmra.mxu0 %v2989
    %v3070 = vpop.f32.mrf.mxu0
    %v3071 = vadd.f32 0.0, %v3070
    %v3072 = vpop.f32.mrf.mxu0
    %3073 = vmatprep.mubr.f32.mxu0 0.0
    %3074 = vmatmul.mubr.f32.gmra.mxu0 %v2992
    %v3075 = vpop.f32.mrf.mxu0
    %v3076 = vadd.f32 0.0, %v3075
    %v3077 = vpop.f32.mrf.mxu0
    %3078 = vdwg.mxu0
    %v3079 = vrcp.pop %v2960
    %v3080 = vrcp.pop %v2963
    %v3081 = vrcp.pop %v2966
    %v3082 = vrcp.pop %v2969
    %v3083 = vmul.f32 %v3061, %v3079
    %v3084 = vmul.f32 %v3066, %v3080
    %v3085 = vmul.f32 %v3071, %v3081
    %v3086 = vmul.f32 %v3076, %v3082
    %3087 = vrot.lane.b32.xlu0 %v2517, 112
    %v3088 = vpop.permute.xlu0 %3087
    %3089 = vrot.lane.b32.xlu0 %v2522, 112
    %v3090 = vpop.permute.xlu0 %3089
    %3091 = vrot.lane.b32.xlu0 %v2527, 112
    %v3092 = vpop.permute.xlu0 %3091
    %3093 = vrot.lane.b32.xlu0 %v2532, 112
    %v3094 = vpop.permute.xlu0 %3093
    %3095 = vrot.lane.b32.xlu0 %v2517, 80
    %v3096 = vpop.permute.xlu0 %3095
    %3097 = vrot.lane.b32.xlu0 %v2522, 80
    %v3098 = vpop.permute.xlu0 %3097
    %3099 = vrot.lane.b32.xlu0 %v2527, 80
    %v3100 = vpop.permute.xlu0 %3099
    %3101 = vrot.lane.b32.xlu0 %v2532, 80
    %v3102 = vpop.permute.xlu0 %3101
    %v3103 = vsel %vm481, %v3088, 0
    %v3105 = vsel %vm481, %v3090, 0
    %v3107 = vsel %vm481, %v3092, 0
    %v3109 = vsel %vm481, %v3094, 0
    %v3111 = vsel %vm481, %v3096, 0
    %v3113 = vsel %vm481, %v3098, 0
    %v3115 = vsel %vm481, %v3100, 0
    %v3117 = vsel %vm481, %v3102, 0
    %3119 = vmatprep.subr.mxu0 0.0
    %3120 = vmatpush1.xpose.msra.mxu0 0.0
    %3121 = vmatprep.subr.mxu0 0.0
    %3122 = vmatpush1.xpose.msra.mxu0 0.0
    %3123 = vmatprep.subr.mxu0 0.0
    %3124 = vmatpush1.xpose.msra.mxu0 0.0
    %3125 = vmatprep.subr.mxu0 0.0
    %3126 = vmatpush1.xpose.msra.mxu0 0.0
    %3127 = vmatprep.subr.mxu0 0.0
    %3128 = vmatpush1.xpose.msra.mxu0 0.0
    %3129 = vmatprep.subr.mxu0 0.0
    %3130 = vmatpush1.xpose.msra.mxu0 0.0
    %3131 = vmatprep.subr.mxu0 0.0
    %3132 = vmatpush1.xpose.msra.mxu0 0.0
    %3133 = vmatprep.subr.mxu0 0.0
    %3134 = vmatpush1.xpose.msra.mxu0 0.0
    %3135 = vmatprep.subr.mxu0 0.0
    %3136 = vmatpush1.xpose.msra.mxu0 0.0
    %3137 = vmatprep.subr.mxu0 0.0
    %3138 = vmatpush1.xpose.msra.mxu0 0.0
    %3139 = vmatprep.subr.mxu0 0.0
    %3140 = vmatpush1.xpose.msra.mxu0 0.0
    %3141 = vmatprep.subr.mxu0 0.0
    %3142 = vmatpush1.xpose.msra.mxu0 0.0
    %3143 = vmatprep.subr.mxu0 0.0
    %3144 = vmatpush1.xpose.msra.mxu0 %v3117
    %3145 = vmatprep.subr.mxu0 0.0
    %3146 = vmatpush1.xpose.msra.mxu0 %v3115
    %3147 = vmatprep.subr.mxu0 0.0
    %3148 = vmatpush1.xpose.msra.mxu0 %v3113
    %3149 = vmatprep.subr.mxu0 0.0
    %3150 = vmatpush1.xpose.msra.mxu0 %v3111
    %3151 = vmatprep.subr.mxu0 0.0
    %3152 = vmatpush2.xpose.msra.mxu0 0.0
    %3153 = vmatprep.subr.mxu0 0.0
    %3154 = vmatpush2.xpose.msra.mxu0 0.0
    %3155 = vmatprep.subr.mxu0 0.0
    %3156 = vmatpush2.xpose.msra.mxu0 0.0
    %3157 = vmatprep.subr.mxu0 0.0
    %3158 = vmatpush2.xpose.msra.mxu0 0.0
    %3159 = vmatprep.subr.mxu0 0.0
    %3160 = vmatpush2.xpose.msra.mxu0 0.0
    %3161 = vmatprep.subr.mxu0 0.0
    %3162 = vmatpush2.xpose.msra.mxu0 0.0
    %3163 = vmatprep.subr.mxu0 0.0
    %3164 = vmatpush2.xpose.msra.mxu0 0.0
    %3165 = vmatprep.subr.mxu0 0.0
    %3166 = vmatpush2.xpose.msra.mxu0 0.0
    %3167 = vmatprep.subr.mxu0 0.0
    %3168 = vmatpush2.xpose.msra.mxu0 0.0
    %3169 = vmatprep.subr.mxu0 0.0
    %3170 = vmatpush2.xpose.msra.mxu0 0.0
    %3171 = vmatprep.subr.mxu0 0.0
    %3172 = vmatpush2.xpose.msra.mxu0 0.0
    %3173 = vmatprep.subr.mxu0 0.0
    %3174 = vmatpush2.xpose.msra.mxu0 0.0
    %3175 = vmatprep.subr.mxu0 0.0
    %3176 = vmatpush2.xpose.msra.mxu0 0.0
    %3177 = vmatprep.subr.mxu0 0.0
    %3178 = vmatpush2.xpose.msra.mxu0 0.0
    %3179 = vmatprep.subr.mxu0 0.0
    %3180 = vmatpush2.xpose.msra.mxu0 0.0
    %3181 = vmatprep.subr.mxu0 0.0
    %3182 = vmatpush2.xpose.msra.mxu0 0.0
    %3183 = vmatprep.mubr.f32.mxu0 0.0
    %3184 = vmatmul.mubr.f32.gmra.mxu0 %v3103
    %v3185 = vpop.f32.mrf.mxu0
    %v3186 = vadd.f32 %v184, %v3185
    %v3187 = vpop.f32.mrf.mxu0
    %3188 = vmatprep.mubr.f32.mxu0 0.0
    %3189 = vmatmul.mubr.f32.gmra.mxu0 %v3105
    %v3190 = vpop.f32.mrf.mxu0
    %v3191 = vadd.f32 %v184, %v3190
    %v3192 = vpop.f32.mrf.mxu0
    %3193 = vmatprep.mubr.f32.mxu0 0.0
    %3194 = vmatmul.mubr.f32.gmra.mxu0 %v3107
    %v3195 = vpop.f32.mrf.mxu0
    %v3196 = vadd.f32 %v184, %v3195
    %v3197 = vpop.f32.mrf.mxu0
    %3198 = vmatprep.mubr.f32.mxu0 0.0
    %3199 = vmatmul.mubr.f32.gmra.mxu0 %v3109
    %v3200 = vpop.f32.mrf.mxu0
    %v3201 = vadd.f32 %v184, %v3200
    %v3202 = vpop.f32.mrf.mxu0
    %3203 = vdwg.mxu0
    %v3204 = vsel %vm206, %v3186, -inf
    %3205 = vmax.xlane.f32.xlu0 %v3204
    %v3206 = vpop.xlane.xlu0 %3205
    %v3207 = vsel %vm206, %v3191, -inf
    %3208 = vmax.xlane.f32.xlu0 %v3207
    %v3209 = vpop.xlane.xlu0 %3208
    %v3210 = vsel %vm206, %v3196, -inf
    %3211 = vmax.xlane.f32.xlu0 %v3210
    %v3212 = vpop.xlane.xlu0 %3211
    %v3213 = vsel %vm206, %v3201, -inf
    %3214 = vmax.xlane.f32.xlu0 %v3213
    %v3215 = vpop.xlane.xlu0 %3214
    %v3216 = vsub.f32 %v3186, %v3206
    %v3217 = vsub.f32 %v3191, %v3209
    %v3218 = vsub.f32 %v3196, %v3212
    %v3219 = vsub.f32 %v3201, %v3215
    %v3220 = vmul.f32 %v3216, 1.442695
    %v3221 = vpow.pop %v3220
    %v3222 = vmul.f32 %v3217, 1.442695
    %v3223 = vpow.pop %v3222
    %v3224 = vmul.f32 %v3218, 1.442695
    %v3225 = vpow.pop %v3224
    %v3226 = vmul.f32 %v3219, 1.442695
    %v3227 = vpow.pop %v3226
    %v3228 = vsel %vm206, %v3221, 0.0
    %3229 = vadd.xlane.f32.xlu0 %v3228
    %v3230 = vpop.xlane.xlu0 %3229
    %v3231 = vsel %vm206, %v3223, 0.0
    %3232 = vadd.xlane.f32.xlu0 %v3231
    %v3233 = vpop.xlane.xlu0 %3232
    %v3234 = vsel %vm206, %v3225, 0.0
    %3235 = vadd.xlane.f32.xlu0 %v3234
    %v3236 = vpop.xlane.xlu0 %3235
    %v3237 = vsel %vm206, %v3227, 0.0
    %3238 = vadd.xlane.f32.xlu0 %v3237
    %v3239 = vpop.xlane.xlu0 %3238
    %3240 = vrot.lane.b32.xlu0 %v2517, 48
    %v3241 = vpop.permute.xlu0 %3240
    %3242 = vrot.lane.b32.xlu0 %v2522, 48
    %v3243 = vpop.permute.xlu0 %3242
    %3244 = vrot.lane.b32.xlu0 %v2527, 48
    %v3245 = vpop.permute.xlu0 %3244
    %3246 = vrot.lane.b32.xlu0 %v2532, 48
    %v3247 = vpop.permute.xlu0 %3246
    %v3253 = vsel %vm206, %v3221, 0
    %v3256 = vsel %vm206, %v3223, 0
    %v3259 = vsel %vm206, %v3225, 0
    %v3262 = vsel %vm206, %v3227, 0
    %3264 = vmatprep.subr.mxu0 0.0
    %3265 = vmatpush1.msra.mxu0 0.0
    %3266 = vmatprep.subr.mxu0 0.0
    %3267 = vmatpush1.msra.mxu0 0.0
    %3268 = vmatprep.subr.mxu0 0.0
    %3269 = vmatpush1.msra.mxu0 0.0
    %3270 = vmatprep.subr.mxu0 0.0
    %3271 = vmatpush1.msra.mxu0 0.0
    %3272 = vmatprep.subr.mxu0 0.0
    %3273 = vmatpush1.msra.mxu0 0.0
    %3274 = vmatprep.subr.mxu0 0.0
    %3275 = vmatpush1.msra.mxu0 0.0
    %3276 = vmatprep.subr.mxu0 0.0
    %3277 = vmatpush1.msra.mxu0 0.0
    %3278 = vmatprep.subr.mxu0 0.0
    %3279 = vmatpush1.msra.mxu0 0.0
    %3280 = vmatprep.subr.mxu0 0.0
    %3281 = vmatpush1.msra.mxu0 0.0
    %3282 = vmatprep.subr.mxu0 0.0
    %3283 = vmatpush1.msra.mxu0 0.0
    %3284 = vmatprep.subr.mxu0 0.0
    %3285 = vmatpush1.msra.mxu0 0.0
    %3286 = vmatprep.subr.mxu0 0.0
    %3287 = vmatpush1.msra.mxu0 0.0
    %3288 = vmatprep.subr.mxu0 0.0
    %3289 = vmatpush1.msra.mxu0 %v3247
    %3290 = vmatprep.subr.mxu0 0.0
    %3291 = vmatpush1.msra.mxu0 %v3245
    %3292 = vmatprep.subr.mxu0 0.0
    %3293 = vmatpush1.msra.mxu0 %v3243
    %3294 = vmatprep.subr.mxu0 0.0
    %3295 = vmatpush1.msra.mxu0 %v3241
    %3296 = vmatprep.subr.mxu0 0.0
    %3297 = vmatpush2.msra.mxu0 0.0
    %3298 = vmatprep.subr.mxu0 0.0
    %3299 = vmatpush2.msra.mxu0 0.0
    %3300 = vmatprep.subr.mxu0 0.0
    %3301 = vmatpush2.msra.mxu0 0.0
    %3302 = vmatprep.subr.mxu0 0.0
    %3303 = vmatpush2.msra.mxu0 0.0
    %3304 = vmatprep.subr.mxu0 0.0
    %3305 = vmatpush2.msra.mxu0 0.0
    %3306 = vmatprep.subr.mxu0 0.0
    %3307 = vmatpush2.msra.mxu0 0.0
    %3308 = vmatprep.subr.mxu0 0.0
    %3309 = vmatpush2.msra.mxu0 0.0
    %3310 = vmatprep.subr.mxu0 0.0
    %3311 = vmatpush2.msra.mxu0 0.0
    %3312 = vmatprep.subr.mxu0 0.0
    %3313 = vmatpush2.msra.mxu0 0.0
    %3314 = vmatprep.subr.mxu0 0.0
    %3315 = vmatpush2.msra.mxu0 0.0
    %3316 = vmatprep.subr.mxu0 0.0
    %3317 = vmatpush2.msra.mxu0 0.0
    %3318 = vmatprep.subr.mxu0 0.0
    %3319 = vmatpush2.msra.mxu0 0.0
    %3320 = vmatprep.subr.mxu0 0.0
    %3321 = vmatpush2.msra.mxu0 0.0
    %3322 = vmatprep.subr.mxu0 0.0
    %3323 = vmatpush2.msra.mxu0 0.0
    %3324 = vmatprep.subr.mxu0 0.0
    %3325 = vmatpush2.msra.mxu0 0.0
    %3326 = vmatprep.subr.mxu0 0.0
    %3327 = vmatpush2.msra.mxu0 0.0
    %3328 = vmatprep.mubr.f32.mxu0 0.0
    %3329 = vmatmul.mubr.f32.gmra.mxu0 %v3253
    %v3330 = vpop.f32.mrf.mxu0
    %v3331 = vadd.f32 0.0, %v3330
    %v3332 = vpop.f32.mrf.mxu0
    %3333 = vmatprep.mubr.f32.mxu0 0.0
    %3334 = vmatmul.mubr.f32.gmra.mxu0 %v3256
    %v3335 = vpop.f32.mrf.mxu0
    %v3336 = vadd.f32 0.0, %v3335
    %v3337 = vpop.f32.mrf.mxu0
    %3338 = vmatprep.mubr.f32.mxu0 0.0
    %3339 = vmatmul.mubr.f32.gmra.mxu0 %v3259
    %v3340 = vpop.f32.mrf.mxu0
    %v3341 = vadd.f32 0.0, %v3340
    %v3342 = vpop.f32.mrf.mxu0
    %3343 = vmatprep.mubr.f32.mxu0 0.0
    %3344 = vmatmul.mubr.f32.gmra.mxu0 %v3262
    %v3345 = vpop.f32.mrf.mxu0
    %v3346 = vadd.f32 0.0, %v3345
    %v3347 = vpop.f32.mrf.mxu0
    %3348 = vdwg.mxu0
    %v3349 = vrcp.pop %v3230
    %v3350 = vrcp.pop %v3233
    %v3351 = vrcp.pop %v3236
    %v3352 = vrcp.pop %v3239
    %v3353 = vmul.f32 %v3331, %v3349
    %v3354 = vmul.f32 %v3336, %v3350
    %v3355 = vmul.f32 %v3341, %v3351
    %v3356 = vmul.f32 %v3346, %v3352
    %3357 = vrot.lane.b32.xlu0 %v2537, 112
    %v3358 = vpop.permute.xlu0 %3357
    %3359 = vrot.lane.b32.xlu0 %v2542, 112
    %v3360 = vpop.permute.xlu0 %3359
    %3361 = vrot.lane.b32.xlu0 %v2547, 112
    %v3362 = vpop.permute.xlu0 %3361
    %3363 = vrot.lane.b32.xlu0 %v2552, 112
    %v3364 = vpop.permute.xlu0 %3363
    %3365 = vrot.lane.b32.xlu0 %v2537, 80
    %v3366 = vpop.permute.xlu0 %3365
    %3367 = vrot.lane.b32.xlu0 %v2542, 80
    %v3368 = vpop.permute.xlu0 %3367
    %3369 = vrot.lane.b32.xlu0 %v2547, 80
    %v3370 = vpop.permute.xlu0 %3369
    %3371 = vrot.lane.b32.xlu0 %v2552, 80
    %v3372 = vpop.permute.xlu0 %3371
    %v3373 = vsel %vm481, %v3358, 0
    %v3375 = vsel %vm481, %v3360, 0
    %v3377 = vsel %vm481, %v3362, 0
    %v3379 = vsel %vm481, %v3364, 0
    %v3381 = vsel %vm481, %v3366, 0
    %v3383 = vsel %vm481, %v3368, 0
    %v3385 = vsel %vm481, %v3370, 0
    %v3387 = vsel %vm481, %v3372, 0
    %3389 = vmatprep.subr.mxu0 0.0
    %3390 = vmatpush1.xpose.msra.mxu0 0.0
    %3391 = vmatprep.subr.mxu0 0.0
    %3392 = vmatpush1.xpose.msra.mxu0 0.0
    %3393 = vmatprep.subr.mxu0 0.0
    %3394 = vmatpush1.xpose.msra.mxu0 0.0
    %3395 = vmatprep.subr.mxu0 0.0
    %3396 = vmatpush1.xpose.msra.mxu0 0.0
    %3397 = vmatprep.subr.mxu0 0.0
    %3398 = vmatpush1.xpose.msra.mxu0 0.0
    %3399 = vmatprep.subr.mxu0 0.0
    %3400 = vmatpush1.xpose.msra.mxu0 0.0
    %3401 = vmatprep.subr.mxu0 0.0
    %3402 = vmatpush1.xpose.msra.mxu0 0.0
    %3403 = vmatprep.subr.mxu0 0.0
    %3404 = vmatpush1.xpose.msra.mxu0 0.0
    %3405 = vmatprep.subr.mxu0 0.0
    %3406 = vmatpush1.xpose.msra.mxu0 0.0
    %3407 = vmatprep.subr.mxu0 0.0
    %3408 = vmatpush1.xpose.msra.mxu0 0.0
    %3409 = vmatprep.subr.mxu0 0.0
    %3410 = vmatpush1.xpose.msra.mxu0 0.0
    %3411 = vmatprep.subr.mxu0 0.0
    %3412 = vmatpush1.xpose.msra.mxu0 0.0
    %3413 = vmatprep.subr.mxu0 0.0
    %3414 = vmatpush1.xpose.msra.mxu0 %v3387
    %3415 = vmatprep.subr.mxu0 0.0
    %3416 = vmatpush1.xpose.msra.mxu0 %v3385
    %3417 = vmatprep.subr.mxu0 0.0
    %3418 = vmatpush1.xpose.msra.mxu0 %v3383
    %3419 = vmatprep.subr.mxu0 0.0
    %3420 = vmatpush1.xpose.msra.mxu0 %v3381
    %3421 = vmatprep.subr.mxu0 0.0
    %3422 = vmatpush2.xpose.msra.mxu0 0.0
    %3423 = vmatprep.subr.mxu0 0.0
    %3424 = vmatpush2.xpose.msra.mxu0 0.0
    %3425 = vmatprep.subr.mxu0 0.0
    %3426 = vmatpush2.xpose.msra.mxu0 0.0
    %3427 = vmatprep.subr.mxu0 0.0
    %3428 = vmatpush2.xpose.msra.mxu0 0.0
    %3429 = vmatprep.subr.mxu0 0.0
    %3430 = vmatpush2.xpose.msra.mxu0 0.0
    %3431 = vmatprep.subr.mxu0 0.0
    %3432 = vmatpush2.xpose.msra.mxu0 0.0
    %3433 = vmatprep.subr.mxu0 0.0
    %3434 = vmatpush2.xpose.msra.mxu0 0.0
    %3435 = vmatprep.subr.mxu0 0.0
    %3436 = vmatpush2.xpose.msra.mxu0 0.0
    %3437 = vmatprep.subr.mxu0 0.0
    %3438 = vmatpush2.xpose.msra.mxu0 0.0
    %3439 = vmatprep.subr.mxu0 0.0
    %3440 = vmatpush2.xpose.msra.mxu0 0.0
    %3441 = vmatprep.subr.mxu0 0.0
    %3442 = vmatpush2.xpose.msra.mxu0 0.0
    %3443 = vmatprep.subr.mxu0 0.0
    %3444 = vmatpush2.xpose.msra.mxu0 0.0
    %3445 = vmatprep.subr.mxu0 0.0
    %3446 = vmatpush2.xpose.msra.mxu0 0.0
    %3447 = vmatprep.subr.mxu0 0.0
    %3448 = vmatpush2.xpose.msra.mxu0 0.0
    %3449 = vmatprep.subr.mxu0 0.0
    %3450 = vmatpush2.xpose.msra.mxu0 0.0
    %3451 = vmatprep.subr.mxu0 0.0
    %3452 = vmatpush2.xpose.msra.mxu0 0.0
    %3453 = vmatprep.mubr.f32.mxu0 0.0
    %3454 = vmatmul.mubr.f32.gmra.mxu0 %v3373
    %v3455 = vpop.f32.mrf.mxu0
    %v3456 = vadd.f32 %v184, %v3455
    %v3457 = vpop.f32.mrf.mxu0
    %3458 = vmatprep.mubr.f32.mxu0 0.0
    %3459 = vmatmul.mubr.f32.gmra.mxu0 %v3375
    %v3460 = vpop.f32.mrf.mxu0
    %v3461 = vadd.f32 %v184, %v3460
    %v3462 = vpop.f32.mrf.mxu0
    %3463 = vmatprep.mubr.f32.mxu0 0.0
    %3464 = vmatmul.mubr.f32.gmra.mxu0 %v3377
    %v3465 = vpop.f32.mrf.mxu0
    %v3466 = vadd.f32 %v184, %v3465
    %v3467 = vpop.f32.mrf.mxu0
    %3468 = vmatprep.mubr.f32.mxu0 0.0
    %3469 = vmatmul.mubr.f32.gmra.mxu0 %v3379
    %v3470 = vpop.f32.mrf.mxu0
    %v3471 = vadd.f32 %v184, %v3470
    %v3472 = vpop.f32.mrf.mxu0
    %3473 = vdwg.mxu0
    %v3474 = vsel %vm206, %v3456, -inf
    %3475 = vmax.xlane.f32.xlu0 %v3474
    %v3476 = vpop.xlane.xlu0 %3475
    %v3477 = vsel %vm206, %v3461, -inf
    %3478 = vmax.xlane.f32.xlu0 %v3477
    %v3479 = vpop.xlane.xlu0 %3478
    %v3480 = vsel %vm206, %v3466, -inf
    %3481 = vmax.xlane.f32.xlu0 %v3480
    %v3482 = vpop.xlane.xlu0 %3481
    %v3483 = vsel %vm206, %v3471, -inf
    %3484 = vmax.xlane.f32.xlu0 %v3483
    %v3485 = vpop.xlane.xlu0 %3484
    %v3486 = vsub.f32 %v3456, %v3476
    %v3487 = vsub.f32 %v3461, %v3479
    %v3488 = vsub.f32 %v3466, %v3482
    %v3489 = vsub.f32 %v3471, %v3485
    %v3490 = vmul.f32 %v3486, 1.442695
    %v3491 = vpow.pop %v3490
    %v3492 = vmul.f32 %v3487, 1.442695
    %v3493 = vpow.pop %v3492
    %v3494 = vmul.f32 %v3488, 1.442695
    %v3495 = vpow.pop %v3494
    %v3496 = vmul.f32 %v3489, 1.442695
    %v3497 = vpow.pop %v3496
    %v3498 = vsel %vm206, %v3491, 0.0
    %3499 = vadd.xlane.f32.xlu0 %v3498
    %v3500 = vpop.xlane.xlu0 %3499
    %v3501 = vsel %vm206, %v3493, 0.0
    %3502 = vadd.xlane.f32.xlu0 %v3501
    %v3503 = vpop.xlane.xlu0 %3502
    %v3504 = vsel %vm206, %v3495, 0.0
    %3505 = vadd.xlane.f32.xlu0 %v3504
    %v3506 = vpop.xlane.xlu0 %3505
    %v3507 = vsel %vm206, %v3497, 0.0
    %3508 = vadd.xlane.f32.xlu0 %v3507
    %v3509 = vpop.xlane.xlu0 %3508
    %3510 = vrot.lane.b32.xlu0 %v2537, 48
    %v3511 = vpop.permute.xlu0 %3510
    %3512 = vrot.lane.b32.xlu0 %v2542, 48
    %v3513 = vpop.permute.xlu0 %3512
    %3514 = vrot.lane.b32.xlu0 %v2547, 48
    %v3515 = vpop.permute.xlu0 %3514
    %3516 = vrot.lane.b32.xlu0 %v2552, 48
    %v3517 = vpop.permute.xlu0 %3516
    %v3523 = vsel %vm206, %v3491, 0
    %v3526 = vsel %vm206, %v3493, 0
    %v3529 = vsel %vm206, %v3495, 0
    %v3532 = vsel %vm206, %v3497, 0
    %3534 = vmatprep.subr.mxu0 0.0
    %3535 = vmatpush1.msra.mxu0 0.0
    %3536 = vmatprep.subr.mxu0 0.0
    %3537 = vmatpush1.msra.mxu0 0.0
    %3538 = vmatprep.subr.mxu0 0.0
    %3539 = vmatpush1.msra.mxu0 0.0
    %3540 = vmatprep.subr.mxu0 0.0
    %3541 = vmatpush1.msra.mxu0 0.0
    %3542 = vmatprep.subr.mxu0 0.0
    %3543 = vmatpush1.msra.mxu0 0.0
    %3544 = vmatprep.subr.mxu0 0.0
    %3545 = vmatpush1.msra.mxu0 0.0
    %3546 = vmatprep.subr.mxu0 0.0
    %3547 = vmatpush1.msra.mxu0 0.0
    %3548 = vmatprep.subr.mxu0 0.0
    %3549 = vmatpush1.msra.mxu0 0.0
    %3550 = vmatprep.subr.mxu0 0.0
    %3551 = vmatpush1.msra.mxu0 0.0
    %3552 = vmatprep.subr.mxu0 0.0
    %3553 = vmatpush1.msra.mxu0 0.0
    %3554 = vmatprep.subr.mxu0 0.0
    %3555 = vmatpush1.msra.mxu0 0.0
    %3556 = vmatprep.subr.mxu0 0.0
    %3557 = vmatpush1.msra.mxu0 0.0
    %3558 = vmatprep.subr.mxu0 0.0
    %3559 = vmatpush1.msra.mxu0 %v3517
    %3560 = vmatprep.subr.mxu0 0.0
    %3561 = vmatpush1.msra.mxu0 %v3515
    %3562 = vmatprep.subr.mxu0 0.0
    %3563 = vmatpush1.msra.mxu0 %v3513
    %3564 = vmatprep.subr.mxu0 0.0
    %3565 = vmatpush1.msra.mxu0 %v3511
    %3566 = vmatprep.subr.mxu0 0.0
    %3567 = vmatpush2.msra.mxu0 0.0
    %3568 = vmatprep.subr.mxu0 0.0
    %3569 = vmatpush2.msra.mxu0 0.0
    %3570 = vmatprep.subr.mxu0 0.0
    %3571 = vmatpush2.msra.mxu0 0.0
    %3572 = vmatprep.subr.mxu0 0.0
    %3573 = vmatpush2.msra.mxu0 0.0
    %3574 = vmatprep.subr.mxu0 0.0
    %3575 = vmatpush2.msra.mxu0 0.0
    %3576 = vmatprep.subr.mxu0 0.0
    %3577 = vmatpush2.msra.mxu0 0.0
    %3578 = vmatprep.subr.mxu0 0.0
    %3579 = vmatpush2.msra.mxu0 0.0
    %3580 = vmatprep.subr.mxu0 0.0
    %3581 = vmatpush2.msra.mxu0 0.0
    %3582 = vmatprep.subr.mxu0 0.0
    %3583 = vmatpush2.msra.mxu0 0.0
    %3584 = vmatprep.subr.mxu0 0.0
    %3585 = vmatpush2.msra.mxu0 0.0
    %3586 = vmatprep.subr.mxu0 0.0
    %3587 = vmatpush2.msra.mxu0 0.0
    %3588 = vmatprep.subr.mxu0 0.0
    %3589 = vmatpush2.msra.mxu0 0.0
    %3590 = vmatprep.subr.mxu0 0.0
    %3591 = vmatpush2.msra.mxu0 0.0
    %3592 = vmatprep.subr.mxu0 0.0
    %3593 = vmatpush2.msra.mxu0 0.0
    %3594 = vmatprep.subr.mxu0 0.0
    %3595 = vmatpush2.msra.mxu0 0.0
    %3596 = vmatprep.subr.mxu0 0.0
    %3597 = vmatpush2.msra.mxu0 0.0
    %3598 = vmatprep.mubr.f32.mxu0 0.0
    %3599 = vmatmul.mubr.f32.gmra.mxu0 %v3523
    %v3600 = vpop.f32.mrf.mxu0
    %v3601 = vadd.f32 0.0, %v3600
    %v3602 = vpop.f32.mrf.mxu0
    %3603 = vmatprep.mubr.f32.mxu0 0.0
    %3604 = vmatmul.mubr.f32.gmra.mxu0 %v3526
    %v3605 = vpop.f32.mrf.mxu0
    %v3606 = vadd.f32 0.0, %v3605
    %v3607 = vpop.f32.mrf.mxu0
    %3608 = vmatprep.mubr.f32.mxu0 0.0
    %3609 = vmatmul.mubr.f32.gmra.mxu0 %v3529
    %v3610 = vpop.f32.mrf.mxu0
    %v3611 = vadd.f32 0.0, %v3610
    %v3612 = vpop.f32.mrf.mxu0
    %3613 = vmatprep.mubr.f32.mxu0 0.0
    %3614 = vmatmul.mubr.f32.gmra.mxu0 %v3532
    %v3615 = vpop.f32.mrf.mxu0
    %v3616 = vadd.f32 0.0, %v3615
    %v3617 = vpop.f32.mrf.mxu0
    %3618 = vdwg.mxu0
    %v3619 = vrcp.pop %v3500
    %v3620 = vrcp.pop %v3503
    %v3621 = vrcp.pop %v3506
    %v3622 = vrcp.pop %v3509
    %v3623 = vmul.f32 %v3601, %v3619
    %v3624 = vmul.f32 %v3606, %v3620
    %v3625 = vmul.f32 %v3611, %v3621
    %v3626 = vmul.f32 %v3616, %v3622
    %v3628 = vsel %vm481, %v3353, 0
    %v3631 = vsel %vm481, %v3354, 0
    %v3634 = vsel %vm481, %v3355, 0
    %v3637 = vsel %vm481, %v3356, 0
    %v3640 = vsel %vm481, %v3623, 0
    %v3643 = vsel %vm481, %v3624, 0
    %v3646 = vsel %vm481, %v3625, 0
    %v3649 = vsel %vm481, %v3626, 0
    %3651 = vmatprep.subr.mxu0 0.0
    %3652 = vmatpush1.msra.mxu0 0.0
    %3653 = vmatprep.subr.mxu0 0.0
    %3654 = vmatpush1.msra.mxu0 0.0
    %3655 = vmatprep.subr.mxu0 0.0
    %3656 = vmatpush1.msra.mxu0 0.0
    %3657 = vmatprep.subr.mxu0 0.0
    %3658 = vmatpush1.msra.mxu0 0.0
    %3659 = vmatprep.subr.mxu0 0.0
    %3660 = vmatpush1.msra.mxu0 0.0
    %3661 = vmatprep.subr.mxu0 0.0
    %3662 = vmatpush1.msra.mxu0 0.0
    %3663 = vmatprep.subr.mxu0 0.0
    %3664 = vmatpush1.msra.mxu0 0.0
    %3665 = vmatprep.subr.mxu0 0.0
    %3666 = vmatpush1.msra.mxu0 0.0
    %3667 = vmatprep.subr.mxu0 0.0
    %3668 = vmatpush1.msra.mxu0 0.0
    %3669 = vmatprep.subr.mxu0 0.0
    %3670 = vmatpush1.msra.mxu0 0.0
    %3671 = vmatprep.subr.mxu0 0.0
    %3672 = vmatpush1.msra.mxu0 0.0
    %3673 = vmatprep.subr.mxu0 0.0
    %3674 = vmatpush1.msra.mxu0 0.0
    %3675 = vmatprep.subr.mxu0 0.0
    %3676 = vmatpush1.msra.mxu0 0.0
    %3677 = vmatprep.subr.mxu0 0.0
    %3678 = vmatpush1.msra.mxu0 0.0
    %3679 = vmatprep.subr.mxu0 0.0
    %3680 = vmatpush1.msra.mxu0 %v2282
    %3681 = vmatprep.subr.mxu0 0.0
    %3682 = vmatpush1.msra.mxu0 %v2281
    %3683 = vmatprep.subr.mxu0 0.0
    %3684 = vmatpush2.msra.mxu0 0.0
    %3685 = vmatprep.subr.mxu0 0.0
    %3686 = vmatpush2.msra.mxu0 0.0
    %3687 = vmatprep.subr.mxu0 0.0
    %3688 = vmatpush2.msra.mxu0 0.0
    %3689 = vmatprep.subr.mxu0 0.0
    %3690 = vmatpush2.msra.mxu0 0.0
    %3691 = vmatprep.subr.mxu0 0.0
    %3692 = vmatpush2.msra.mxu0 0.0
    %3693 = vmatprep.subr.mxu0 0.0
    %3694 = vmatpush2.msra.mxu0 0.0
    %3695 = vmatprep.subr.mxu0 0.0
    %3696 = vmatpush2.msra.mxu0 0.0
    %3697 = vmatprep.subr.mxu0 0.0
    %3698 = vmatpush2.msra.mxu0 0.0
    %3699 = vmatprep.subr.mxu0 0.0
    %3700 = vmatpush2.msra.mxu0 0.0
    %3701 = vmatprep.subr.mxu0 0.0
    %3702 = vmatpush2.msra.mxu0 0.0
    %3703 = vmatprep.subr.mxu0 0.0
    %3704 = vmatpush2.msra.mxu0 0.0
    %3705 = vmatprep.subr.mxu0 0.0
    %3706 = vmatpush2.msra.mxu0 0.0
    %3707 = vmatprep.subr.mxu0 0.0
    %3708 = vmatpush2.msra.mxu0 0.0
    %3709 = vmatprep.subr.mxu0 0.0
    %3710 = vmatpush2.msra.mxu0 0.0
    %3711 = vmatprep.subr.mxu0 0.0
    %3712 = vmatpush2.msra.mxu0 0.0
    %3713 = vmatprep.subr.mxu0 0.0
    %3714 = vmatpush2.msra.mxu0 0.0
    %3715 = vmatprep.mubr.f32.mxu0 0.0
    %3716 = vmatmul.mubr.f32.gmra.mxu0 %v3628
    %v3717 = vpop.f32.mrf.mxu0
    %v3718 = vadd.f32 0.0, %v3717
    %v3719 = vpop.f32.mrf.mxu0
    %3720 = vmatprep.mubr.f32.mxu0 0.0
    %3721 = vmatmul.mubr.f32.gmra.mxu0 %v3631
    %v3722 = vpop.f32.mrf.mxu0
    %v3723 = vadd.f32 0.0, %v3722
    %v3724 = vpop.f32.mrf.mxu0
    %3725 = vmatprep.mubr.f32.mxu0 0.0
    %3726 = vmatmul.mubr.f32.gmra.mxu0 %v3634
    %v3727 = vpop.f32.mrf.mxu0
    %v3728 = vadd.f32 0.0, %v3727
    %v3729 = vpop.f32.mrf.mxu0
    %3730 = vmatprep.mubr.f32.mxu0 0.0
    %3731 = vmatmul.mubr.f32.gmra.mxu0 %v3637
    %v3732 = vpop.f32.mrf.mxu0
    %v3733 = vadd.f32 0.0, %v3732
    %v3734 = vpop.f32.mrf.mxu0
    %3735 = vmatprep.mubr.f32.mxu0 0.0
    %3736 = vmatmul.mubr.f32.gmra.mxu0 %v3640
    %v3737 = vpop.f32.mrf.mxu0
    %v3738 = vadd.f32 0.0, %v3737
    %v3739 = vpop.f32.mrf.mxu0
    %3740 = vmatprep.mubr.f32.mxu0 0.0
    %3741 = vmatmul.mubr.f32.gmra.mxu0 %v3643
    %v3742 = vpop.f32.mrf.mxu0
    %v3743 = vadd.f32 0.0, %v3742
    %v3744 = vpop.f32.mrf.mxu0
    %3745 = vmatprep.mubr.f32.mxu0 0.0
    %3746 = vmatmul.mubr.f32.gmra.mxu0 %v3646
    %v3747 = vpop.f32.mrf.mxu0
    %v3748 = vadd.f32 0.0, %v3747
    %v3749 = vpop.f32.mrf.mxu0
    %3750 = vmatprep.mubr.f32.mxu0 0.0
    %3751 = vmatmul.mubr.f32.gmra.mxu0 %v3649
    %v3752 = vpop.f32.mrf.mxu0
    %v3753 = vadd.f32 0.0, %v3752
    %v3754 = vpop.f32.mrf.mxu0
    %3755 = vdwg.mxu0
    %v3757 = vsel %vm481, %v2817, 0
    %v3760 = vsel %vm481, %v2818, 0
    %v3763 = vsel %vm481, %v2819, 0
    %v3766 = vsel %vm481, %v2820, 0
    %v3769 = vsel %vm481, %v3083, 0
    %v3772 = vsel %vm481, %v3084, 0
    %v3775 = vsel %vm481, %v3085, 0
    %v3778 = vsel %vm481, %v3086, 0
    %3780 = vmatprep.subr.mxu0 0.0
    %3781 = vmatpush1.msra.mxu0 0.0
    %3782 = vmatprep.subr.mxu0 0.0
    %3783 = vmatpush1.msra.mxu0 0.0
    %3784 = vmatprep.subr.mxu0 0.0
    %3785 = vmatpush1.msra.mxu0 0.0
    %3786 = vmatprep.subr.mxu0 0.0
    %3787 = vmatpush1.msra.mxu0 0.0
    %3788 = vmatprep.subr.mxu0 0.0
    %3789 = vmatpush1.msra.mxu0 0.0
    %3790 = vmatprep.subr.mxu0 0.0
    %3791 = vmatpush1.msra.mxu0 0.0
    %3792 = vmatprep.subr.mxu0 0.0
    %3793 = vmatpush1.msra.mxu0 0.0
    %3794 = vmatprep.subr.mxu0 0.0
    %3795 = vmatpush1.msra.mxu0 0.0
    %3796 = vmatprep.subr.mxu0 0.0
    %3797 = vmatpush1.msra.mxu0 0.0
    %3798 = vmatprep.subr.mxu0 0.0
    %3799 = vmatpush1.msra.mxu0 0.0
    %3800 = vmatprep.subr.mxu0 0.0
    %3801 = vmatpush1.msra.mxu0 0.0
    %3802 = vmatprep.subr.mxu0 0.0
    %3803 = vmatpush1.msra.mxu0 0.0
    %3804 = vmatprep.subr.mxu0 0.0
    %3805 = vmatpush1.msra.mxu0 0.0
    %3806 = vmatprep.subr.mxu0 0.0
    %3807 = vmatpush1.msra.mxu0 0.0
    %3808 = vmatprep.subr.mxu0 0.0
    %3809 = vmatpush1.msra.mxu0 %v2280
    %3810 = vmatprep.subr.mxu0 0.0
    %3811 = vmatpush1.msra.mxu0 %v2279
    %3812 = vmatprep.subr.mxu0 0.0
    %3813 = vmatpush2.msra.mxu0 0.0
    %3814 = vmatprep.subr.mxu0 0.0
    %3815 = vmatpush2.msra.mxu0 0.0
    %3816 = vmatprep.subr.mxu0 0.0
    %3817 = vmatpush2.msra.mxu0 0.0
    %3818 = vmatprep.subr.mxu0 0.0
    %3819 = vmatpush2.msra.mxu0 0.0
    %3820 = vmatprep.subr.mxu0 0.0
    %3821 = vmatpush2.msra.mxu0 0.0
    %3822 = vmatprep.subr.mxu0 0.0
    %3823 = vmatpush2.msra.mxu0 0.0
    %3824 = vmatprep.subr.mxu0 0.0
    %3825 = vmatpush2.msra.mxu0 0.0
    %3826 = vmatprep.subr.mxu0 0.0
    %3827 = vmatpush2.msra.mxu0 0.0
    %3828 = vmatprep.subr.mxu0 0.0
    %3829 = vmatpush2.msra.mxu0 0.0
    %3830 = vmatprep.subr.mxu0 0.0
    %3831 = vmatpush2.msra.mxu0 0.0
    %3832 = vmatprep.subr.mxu0 0.0
    %3833 = vmatpush2.msra.mxu0 0.0
    %3834 = vmatprep.subr.mxu0 0.0
    %3835 = vmatpush2.msra.mxu0 0.0
    %3836 = vmatprep.subr.mxu0 0.0
    %3837 = vmatpush2.msra.mxu0 0.0
    %3838 = vmatprep.subr.mxu0 0.0
    %3839 = vmatpush2.msra.mxu0 0.0
    %3840 = vmatprep.subr.mxu0 0.0
    %3841 = vmatpush2.msra.mxu0 0.0
    %3842 = vmatprep.subr.mxu0 0.0
    %3843 = vmatpush2.msra.mxu0 0.0
    %3844 = vmatprep.mubr.f32.mxu0 0.0
    %3845 = vmatmul.mubr.f32.gmra.mxu0 %v3757
    %v3846 = vpop.f32.mrf.mxu0
    %v3847 = vadd.f32 %v3718, %v3846
    %v3848 = vpop.f32.mrf.mxu0
    %3849 = vmatprep.mubr.f32.mxu0 0.0
    %3850 = vmatmul.mubr.f32.gmra.mxu0 %v3760
    %v3851 = vpop.f32.mrf.mxu0
    %v3852 = vadd.f32 %v3723, %v3851
    %v3853 = vpop.f32.mrf.mxu0
    %3854 = vmatprep.mubr.f32.mxu0 0.0
    %3855 = vmatmul.mubr.f32.gmra.mxu0 %v3763
    %v3856 = vpop.f32.mrf.mxu0
    %v3857 = vadd.f32 %v3728, %v3856
    %v3858 = vpop.f32.mrf.mxu0
    %3859 = vmatprep.mubr.f32.mxu0 0.0
    %3860 = vmatmul.mubr.f32.gmra.mxu0 %v3766
    %v3861 = vpop.f32.mrf.mxu0
    %v3862 = vadd.f32 %v3733, %v3861
    %v3863 = vpop.f32.mrf.mxu0
    %3864 = vmatprep.mubr.f32.mxu0 0.0
    %3865 = vmatmul.mubr.f32.gmra.mxu0 %v3769
    %v3866 = vpop.f32.mrf.mxu0
    %v3867 = vadd.f32 %v3738, %v3866
    %v3868 = vpop.f32.mrf.mxu0
    %3869 = vmatprep.mubr.f32.mxu0 0.0
    %3870 = vmatmul.mubr.f32.gmra.mxu0 %v3772
    %v3871 = vpop.f32.mrf.mxu0
    %v3872 = vadd.f32 %v3743, %v3871
    %v3873 = vpop.f32.mrf.mxu0
    %3874 = vmatprep.mubr.f32.mxu0 0.0
    %3875 = vmatmul.mubr.f32.gmra.mxu0 %v3775
    %v3876 = vpop.f32.mrf.mxu0
    %v3877 = vadd.f32 %v3748, %v3876
    %v3878 = vpop.f32.mrf.mxu0
    %3879 = vmatprep.mubr.f32.mxu0 0.0
    %3880 = vmatmul.mubr.f32.gmra.mxu0 %v3778
    %v3881 = vpop.f32.mrf.mxu0
    %v3882 = vadd.f32 %v3753, %v3881
    %v3883 = vpop.f32.mrf.mxu0
    %3884 = vdwg.mxu0
    %v3885 = vadd.f32 %v2262, %v3847
    %v3886 = vadd.f32 %v2263, %v3852
    %v3887 = vadd.f32 %v2264, %v3857
    %v3888 = vadd.f32 %v2265, %v3862
    %v3889 = vadd.f32 %v2266, %v3867
    %v3890 = vadd.f32 %v2267, %v3872
    %v3891 = vadd.f32 %v2268, %v3877
    %v3892 = vadd.f32 %v2269, %v3882
    %v3893 = vlaneseq
    %v3894 = vshrl.u32 %v3893, 7
    %v3895 = vsub.s32 3, %v3894
    %v3896 = vrot.slane %v2293, %v3895
    %v3897 = vadd.f32 %v3885, %v3896
    %v3898 = vadd.f32 %v3886, %v3896
    %v3899 = vadd.f32 %v3887, %v3896
    %v3900 = vadd.f32 %v3888, %v3896
    %v3901 = vadd.f32 %v3889, %v3896
    %v3902 = vadd.f32 %v3890, %v3896
    %v3903 = vadd.f32 %v3891, %v3896
    %v3904 = vadd.f32 %v3892, %v3896
    %v3905 = vsel %vm206, %v3897, 0.0
    %3906 = vadd.xlane.f32.xlu0 %v3905
    %v3907 = vpop.xlane.xlu0 %3906
    %v3908 = vsel %vm206, %v3898, 0.0
    %3909 = vadd.xlane.f32.xlu0 %v3908
    %v3910 = vpop.xlane.xlu0 %3909
    %v3911 = vsel %vm206, %v3899, 0.0
    %3912 = vadd.xlane.f32.xlu0 %v3911
    %v3913 = vpop.xlane.xlu0 %3912
    %v3914 = vsel %vm206, %v3900, 0.0
    %3915 = vadd.xlane.f32.xlu0 %v3914
    %v3916 = vpop.xlane.xlu0 %3915
    %v3917 = vsel %vm206, %v3901, 0.0
    %3918 = vadd.xlane.f32.xlu0 %v3917
    %v3919 = vpop.xlane.xlu0 %3918
    %v3920 = vsel %vm206, %v3902, 0.0
    %3921 = vadd.xlane.f32.xlu0 %v3920
    %v3922 = vpop.xlane.xlu0 %3921
    %v3923 = vsel %vm206, %v3903, 0.0
    %3924 = vadd.xlane.f32.xlu0 %v3923
    %v3925 = vpop.xlane.xlu0 %3924
    %v3926 = vsel %vm206, %v3904, 0.0
    %3927 = vadd.xlane.f32.xlu0 %v3926
    %v3928 = vpop.xlane.xlu0 %3927
    %v3929 = vmul.f32 %v3907, %v231
    %v3930 = vmul.f32 %v3910, %v231
    %v3931 = vmul.f32 %v3913, %v231
    %v3932 = vmul.f32 %v3916, %v231
    %v3933 = vmul.f32 %v3919, %v231
    %v3934 = vmul.f32 %v3922, %v231
    %v3935 = vmul.f32 %v3925, %v231
    %v3936 = vmul.f32 %v3928, %v231
    %v3937 = vsub.f32 %v3897, %v3929
    %v3938 = vsub.f32 %v3898, %v3930
    %v3939 = vsub.f32 %v3899, %v3931
    %v3940 = vsub.f32 %v3900, %v3932
    %v3941 = vsub.f32 %v3901, %v3933
    %v3942 = vsub.f32 %v3902, %v3934
    %v3943 = vsub.f32 %v3903, %v3935
    %v3944 = vsub.f32 %v3904, %v3936
    %v3945 = vmul.f32 %v3937, %v3937
    %v3946 = vmul.f32 %v3938, %v3938
    %v3947 = vmul.f32 %v3939, %v3939
    %v3948 = vmul.f32 %v3940, %v3940
    %v3949 = vmul.f32 %v3941, %v3941
    %v3950 = vmul.f32 %v3942, %v3942
    %v3951 = vmul.f32 %v3943, %v3943
    %v3952 = vmul.f32 %v3944, %v3944
    %v3953 = vsel %vm206, %v3945, 0.0
    %3954 = vadd.xlane.f32.xlu0 %v3953
    %v3955 = vpop.xlane.xlu0 %3954
    %v3956 = vsel %vm206, %v3946, 0.0
    %3957 = vadd.xlane.f32.xlu0 %v3956
    %v3958 = vpop.xlane.xlu0 %3957
    %v3959 = vsel %vm206, %v3947, 0.0
    %3960 = vadd.xlane.f32.xlu0 %v3959
    %v3961 = vpop.xlane.xlu0 %3960
    %v3962 = vsel %vm206, %v3948, 0.0
    %3963 = vadd.xlane.f32.xlu0 %v3962
    %v3964 = vpop.xlane.xlu0 %3963
    %v3965 = vsel %vm206, %v3949, 0.0
    %3966 = vadd.xlane.f32.xlu0 %v3965
    %v3967 = vpop.xlane.xlu0 %3966
    %v3968 = vsel %vm206, %v3950, 0.0
    %3969 = vadd.xlane.f32.xlu0 %v3968
    %v3970 = vpop.xlane.xlu0 %3969
    %v3971 = vsel %vm206, %v3951, 0.0
    %3972 = vadd.xlane.f32.xlu0 %v3971
    %v3973 = vpop.xlane.xlu0 %3972
    %v3974 = vsel %vm206, %v3952, 0.0
    %3975 = vadd.xlane.f32.xlu0 %v3974
    %v3976 = vpop.xlane.xlu0 %3975
    %v3977 = vmul.f32 %v3955, %v231
    %v3978 = vmul.f32 %v3958, %v231
    %v3979 = vmul.f32 %v3961, %v231
    %v3980 = vmul.f32 %v3964, %v231
    %v3981 = vmul.f32 %v3967, %v231
    %v3982 = vmul.f32 %v3970, %v231
    %v3983 = vmul.f32 %v3973, %v231
    %v3984 = vmul.f32 %v3976, %v231
    %v3985 = vadd.f32 %v3977, 1e-12
    %v3986 = vadd.f32 %v3978, 1e-12
    %v3987 = vadd.f32 %v3979, 1e-12
    %v3988 = vadd.f32 %v3980, 1e-12
    %v3989 = vadd.f32 %v3981, 1e-12
    %v3990 = vadd.f32 %v3982, 1e-12
    %v3991 = vadd.f32 %v3983, 1e-12
    %v3992 = vadd.f32 %v3984, 1e-12
    %v3993 = vrsqrt.pop %v3985
    %v3994 = vrsqrt.pop %v3986
    %v3995 = vrsqrt.pop %v3987
    %v3996 = vrsqrt.pop %v3988
    %v3997 = vrsqrt.pop %v3989
    %v3998 = vrsqrt.pop %v3990
    %v3999 = vrsqrt.pop %v3991
    %v4000 = vrsqrt.pop %v3992
    %v4001 = vmul.f32 %v3937, %v3993
    %v4002 = vmul.f32 %v3938, %v3994
    %v4003 = vmul.f32 %v3939, %v3995
    %v4004 = vmul.f32 %v3940, %v3996
    %v4005 = vmul.f32 %v3941, %v3997
    %v4006 = vmul.f32 %v3942, %v3998
    %v4007 = vmul.f32 %v3943, %v3999
    %v4008 = vmul.f32 %v3944, %v4000
    %v4009 = vlaneseq
    %v4010 = vshrl.u32 %v4009, 7
    %v4011 = vsub.s32 4, %v4010
    %v4012 = vrot.slane %v2293, %v4011
    %v4013 = vmul.f32 %v4001, %v4012
    %v4014 = vmul.f32 %v4002, %v4012
    %v4015 = vmul.f32 %v4003, %v4012
    %v4016 = vmul.f32 %v4004, %v4012
    %v4017 = vmul.f32 %v4005, %v4012
    %v4018 = vmul.f32 %v4006, %v4012
    %v4019 = vmul.f32 %v4007, %v4012
    %v4020 = vmul.f32 %v4008, %v4012
    %v4021 = vlaneseq
    %v4022 = vshrl.u32 %v4021, 7
    %v4023 = vsub.s32 5, %v4022
    %v4024 = vrot.slane %v2293, %v4023
    %v4025 = vadd.f32 %v4013, %v4024
    %v4026 = vadd.f32 %v4014, %v4024
    %v4027 = vadd.f32 %v4015, %v4024
    %v4028 = vadd.f32 %v4016, %v4024
    %v4029 = vadd.f32 %v4017, %v4024
    %v4030 = vadd.f32 %v4018, %v4024
    %v4031 = vadd.f32 %v4019, %v4024
    %v4032 = vadd.f32 %v4020, %v4024
    %v4033 = vlaneseq
    %v4034 = vshrl.u32 %v4033, 7
    %v4035 = vsub.s32 6, %v4034
    %v4036 = vrot.slane %v2293, %v4035
    %v4038 = vsel %vm206, %v4025, 0
    %v4041 = vsel %vm206, %v4026, 0
    %v4044 = vsel %vm206, %v4027, 0
    %v4047 = vsel %vm206, %v4028, 0
    %v4050 = vsel %vm206, %v4029, 0
    %v4053 = vsel %vm206, %v4030, 0
    %v4056 = vsel %vm206, %v4031, 0
    %v4059 = vsel %vm206, %v4032, 0
    %4061 = vmatprep.subr.mxu0 0.0
    %4062 = vmatpush1.msra.mxu0 0.0
    %4063 = vmatprep.subr.mxu0 0.0
    %4064 = vmatpush1.msra.mxu0 0.0
    %4065 = vmatprep.subr.mxu0 0.0
    %4066 = vmatpush1.msra.mxu0 0.0
    %4067 = vmatprep.subr.mxu0 0.0
    %4068 = vmatpush1.msra.mxu0 0.0
    %4069 = vmatprep.subr.mxu0 0.0
    %4070 = vmatpush1.msra.mxu0 0.0
    %4071 = vmatprep.subr.mxu0 0.0
    %4072 = vmatpush1.msra.mxu0 0.0
    %4073 = vmatprep.subr.mxu0 0.0
    %4074 = vmatpush1.msra.mxu0 0.0
    %4075 = vmatprep.subr.mxu0 0.0
    %4076 = vmatpush1.msra.mxu0 0.0
    %4077 = vmatprep.subr.mxu0 0.0
    %4078 = vmatpush1.msra.mxu0 0.0
    %4079 = vmatprep.subr.mxu0 0.0
    %4080 = vmatpush1.msra.mxu0 0.0
    %4081 = vmatprep.subr.mxu0 0.0
    %4082 = vmatpush1.msra.mxu0 0.0
    %4083 = vmatprep.subr.mxu0 0.0
    %4084 = vmatpush1.msra.mxu0 0.0
    %4085 = vmatprep.subr.mxu0 0.0
    %4086 = vmatpush1.msra.mxu0 %v2278
    %4087 = vmatprep.subr.mxu0 0.0
    %4088 = vmatpush1.msra.mxu0 %v2277
    %4089 = vmatprep.subr.mxu0 0.0
    %4090 = vmatpush1.msra.mxu0 %v2276
    %4091 = vmatprep.subr.mxu0 0.0
    %4092 = vmatpush1.msra.mxu0 %v2275
    %4093 = vmatprep.subr.mxu0 0.0
    %4094 = vmatpush2.msra.mxu0 0.0
    %4095 = vmatprep.subr.mxu0 0.0
    %4096 = vmatpush2.msra.mxu0 0.0
    %4097 = vmatprep.subr.mxu0 0.0
    %4098 = vmatpush2.msra.mxu0 0.0
    %4099 = vmatprep.subr.mxu0 0.0
    %4100 = vmatpush2.msra.mxu0 0.0
    %4101 = vmatprep.subr.mxu0 0.0
    %4102 = vmatpush2.msra.mxu0 0.0
    %4103 = vmatprep.subr.mxu0 0.0
    %4104 = vmatpush2.msra.mxu0 0.0
    %4105 = vmatprep.subr.mxu0 0.0
    %4106 = vmatpush2.msra.mxu0 0.0
    %4107 = vmatprep.subr.mxu0 0.0
    %4108 = vmatpush2.msra.mxu0 0.0
    %4109 = vmatprep.subr.mxu0 0.0
    %4110 = vmatpush2.msra.mxu0 0.0
    %4111 = vmatprep.subr.mxu0 0.0
    %4112 = vmatpush2.msra.mxu0 0.0
    %4113 = vmatprep.subr.mxu0 0.0
    %4114 = vmatpush2.msra.mxu0 0.0
    %4115 = vmatprep.subr.mxu0 0.0
    %4116 = vmatpush2.msra.mxu0 0.0
    %4117 = vmatprep.subr.mxu0 0.0
    %4118 = vmatpush2.msra.mxu0 0.0
    %4119 = vmatprep.subr.mxu0 0.0
    %4120 = vmatpush2.msra.mxu0 0.0
    %4121 = vmatprep.subr.mxu0 0.0
    %4122 = vmatpush2.msra.mxu0 0.0
    %4123 = vmatprep.subr.mxu0 0.0
    %4124 = vmatpush2.msra.mxu0 0.0
    %4125 = vmatprep.mubr.f32.mxu0 0.0
    %4126 = vmatmul.mubr.f32.gmra.mxu0 %v4038
    %v4127 = vpop.f32.mrf.mxu0
    %v4128 = vadd.f32 %v4036, %v4127
    %v4129 = vpop.f32.mrf.mxu0
    %4130 = vmatprep.mubr.f32.mxu0 0.0
    %4131 = vmatmul.mubr.f32.gmra.mxu0 %v4041
    %v4132 = vpop.f32.mrf.mxu0
    %v4133 = vadd.f32 %v4036, %v4132
    %v4134 = vpop.f32.mrf.mxu0
    %4135 = vmatprep.mubr.f32.mxu0 0.0
    %4136 = vmatmul.mubr.f32.gmra.mxu0 %v4044
    %v4137 = vpop.f32.mrf.mxu0
    %v4138 = vadd.f32 %v4036, %v4137
    %v4139 = vpop.f32.mrf.mxu0
    %4140 = vmatprep.mubr.f32.mxu0 0.0
    %4141 = vmatmul.mubr.f32.gmra.mxu0 %v4047
    %v4142 = vpop.f32.mrf.mxu0
    %v4143 = vadd.f32 %v4036, %v4142
    %v4144 = vpop.f32.mrf.mxu0
    %4145 = vmatprep.mubr.f32.mxu0 0.0
    %4146 = vmatmul.mubr.f32.gmra.mxu0 %v4050
    %v4147 = vpop.f32.mrf.mxu0
    %v4148 = vadd.f32 %v4036, %v4147
    %v4149 = vpop.f32.mrf.mxu0
    %4150 = vmatprep.mubr.f32.mxu0 0.0
    %4151 = vmatmul.mubr.f32.gmra.mxu0 %v4053
    %v4152 = vpop.f32.mrf.mxu0
    %v4153 = vadd.f32 %v4036, %v4152
    %v4154 = vpop.f32.mrf.mxu0
    %4155 = vmatprep.mubr.f32.mxu0 0.0
    %4156 = vmatmul.mubr.f32.gmra.mxu0 %v4056
    %v4157 = vpop.f32.mrf.mxu0
    %v4158 = vadd.f32 %v4036, %v4157
    %v4159 = vpop.f32.mrf.mxu0
    %4160 = vmatprep.mubr.f32.mxu0 0.0
    %4161 = vmatmul.mubr.f32.gmra.mxu0 %v4059
    %v4162 = vpop.f32.mrf.mxu0
    %v4163 = vadd.f32 %v4036, %v4162
    %v4164 = vpop.f32.mrf.mxu0
    %4165 = vdwg.mxu0
    %v4166 = vmul.f32 %v4128, 0.5
    %v4167 = vmul.f32 %v4133, 0.5
    %v4168 = vmul.f32 %v4138, 0.5
    %v4169 = vmul.f32 %v4143, 0.5
    %v4170 = vmul.f32 %v4148, 0.5
    %v4171 = vmul.f32 %v4153, 0.5
    %v4172 = vmul.f32 %v4158, 0.5
    %v4173 = vmul.f32 %v4163, 0.5
    %v4174 = vmul.f32 %v4128, 0.70710677
    %v4175 = vmul.f32 %v4133, 0.70710677
    %v4176 = vmul.f32 %v4138, 0.70710677
    %v4177 = vmul.f32 %v4143, 0.70710677
    %v4178 = vmul.f32 %v4148, 0.70710677
    %v4179 = vmul.f32 %v4153, 0.70710677
    %v4180 = vmul.f32 %v4158, 0.70710677
    %v4181 = vmul.f32 %v4163, 0.70710677
    %v4182 = verf.f32.pop %v4174
    %v4183 = verf.f32.pop %v4175
    %v4184 = verf.f32.pop %v4176
    %v4185 = verf.f32.pop %v4177
    %v4186 = verf.f32.pop %v4178
    %v4187 = verf.f32.pop %v4179
    %v4188 = verf.f32.pop %v4180
    %v4189 = verf.f32.pop %v4181
    %v4190 = vadd.f32 %v4182, 1.0
    %v4191 = vadd.f32 %v4183, 1.0
    %v4192 = vadd.f32 %v4184, 1.0
    %v4193 = vadd.f32 %v4185, 1.0
    %v4194 = vadd.f32 %v4186, 1.0
    %v4195 = vadd.f32 %v4187, 1.0
    %v4196 = vadd.f32 %v4188, 1.0
    %v4197 = vadd.f32 %v4189, 1.0
    %v4198 = vmul.f32 %v4166, %v4190
    %v4199 = vmul.f32 %v4167, %v4191
    %v4200 = vmul.f32 %v4168, %v4192
    %v4201 = vmul.f32 %v4169, %v4193
    %v4202 = vmul.f32 %v4170, %v4194
    %v4203 = vmul.f32 %v4171, %v4195
    %v4204 = vmul.f32 %v4172, %v4196
    %v4205 = vmul.f32 %v4173, %v4197
    %v4207 = vsel %vm51, %v4198, 0
    %v4210 = vsel %vm51, %v4199, 0
    %v4213 = vsel %vm51, %v4200, 0
    %v4216 = vsel %vm51, %v4201, 0
    %v4219 = vsel %vm51, %v4202, 0
    %v4222 = vsel %vm51, %v4203, 0
    %v4225 = vsel %vm51, %v4204, 0
    %v4228 = vsel %vm51, %v4205, 0
    %4230 = vmatprep.subr.mxu0 0.0
    %4231 = vmatpush1.msra.mxu0 0.0
    %4232 = vmatprep.subr.mxu0 0.0
    %4233 = vmatpush1.msra.mxu0 0.0
    %4234 = vmatprep.subr.mxu0 0.0
    %4235 = vmatpush1.msra.mxu0 0.0
    %4236 = vmatprep.subr.mxu0 0.0
    %4237 = vmatpush1.msra.mxu0 0.0
    %4238 = vmatprep.subr.mxu0 0.0
    %4239 = vmatpush1.msra.mxu0 0.0
    %4240 = vmatprep.subr.mxu0 0.0
    %4241 = vmatpush1.msra.mxu0 0.0
    %4242 = vmatprep.subr.mxu0 0.0
    %4243 = vmatpush1.msra.mxu0 0.0
    %4244 = vmatprep.subr.mxu0 0.0
    %4245 = vmatpush1.msra.mxu0 0.0
    %4246 = vmatprep.subr.mxu0 0.0
    %4247 = vmatpush1.msra.mxu0 %v2291
    %4248 = vmatprep.subr.mxu0 0.0
    %4249 = vmatpush1.msra.mxu0 %v2290
    %4250 = vmatprep.subr.mxu0 0.0
    %4251 = vmatpush1.msra.mxu0 %v2289
    %4252 = vmatprep.subr.mxu0 0.0
    %4253 = vmatpush1.msra.mxu0 %v2288
    %4254 = vmatprep.subr.mxu0 0.0
    %4255 = vmatpush1.msra.mxu0 %v2287
    %4256 = vmatprep.subr.mxu0 0.0
    %4257 = vmatpush1.msra.mxu0 %v2286
    %4258 = vmatprep.subr.mxu0 0.0
    %4259 = vmatpush1.msra.mxu0 %v2285
    %4260 = vmatprep.subr.mxu0 0.0
    %4261 = vmatpush1.msra.mxu0 %v2284
    %4262 = vmatprep.subr.mxu0 0.0
    %4263 = vmatpush2.msra.mxu0 0.0
    %4264 = vmatprep.subr.mxu0 0.0
    %4265 = vmatpush2.msra.mxu0 0.0
    %4266 = vmatprep.subr.mxu0 0.0
    %4267 = vmatpush2.msra.mxu0 0.0
    %4268 = vmatprep.subr.mxu0 0.0
    %4269 = vmatpush2.msra.mxu0 0.0
    %4270 = vmatprep.subr.mxu0 0.0
    %4271 = vmatpush2.msra.mxu0 0.0
    %4272 = vmatprep.subr.mxu0 0.0
    %4273 = vmatpush2.msra.mxu0 0.0
    %4274 = vmatprep.subr.mxu0 0.0
    %4275 = vmatpush2.msra.mxu0 0.0
    %4276 = vmatprep.subr.mxu0 0.0
    %4277 = vmatpush2.msra.mxu0 0.0
    %4278 = vmatprep.subr.mxu0 0.0
    %4279 = vmatpush2.msra.mxu0 0.0
    %4280 = vmatprep.subr.mxu0 0.0
    %4281 = vmatpush2.msra.mxu0 0.0
    %4282 = vmatprep.subr.mxu0 0.0
    %4283 = vmatpush2.msra.mxu0 0.0
    %4284 = vmatprep.subr.mxu0 0.0
    %4285 = vmatpush2.msra.mxu0 0.0
    %4286 = vmatprep.subr.mxu0 0.0
    %4287 = vmatpush2.msra.mxu0 0.0
    %4288 = vmatprep.subr.mxu0 0.0
    %4289 = vmatpush2.msra.mxu0 0.0
    %4290 = vmatprep.subr.mxu0 0.0
    %4291 = vmatpush2.msra.mxu0 0.0
    %4292 = vmatprep.subr.mxu0 0.0
    %4293 = vmatpush2.msra.mxu0 0.0
    %4294 = vmatprep.mubr.f32.mxu0 0.0
    %4295 = vmatmul.mubr.f32.gmra.mxu0 %v4207
    %v4296 = vpop.f32.mrf.mxu0
    %v4297 = vpop.f32.mrf.mxu0
    %4298 = vmatprep.mubr.f32.mxu0 0.0
    %4299 = vmatmul.mubr.f32.gmra.mxu0 %v4210
    %v4300 = vpop.f32.mrf.mxu0
    %v4301 = vpop.f32.mrf.mxu0
    %4302 = vmatprep.mubr.f32.mxu0 0.0
    %4303 = vmatmul.mubr.f32.gmra.mxu0 %v4213
    %v4304 = vpop.f32.mrf.mxu0
    %v4305 = vadd.f32 0.0, %v4304
    %v4306 = vpop.f32.mrf.mxu0
    %4307 = vmatprep.mubr.f32.mxu0 0.0
    %4308 = vmatmul.mubr.f32.gmra.mxu0 %v4216
    %v4309 = vpop.f32.mrf.mxu0
    %v4310 = vpop.f32.mrf.mxu0
    %4311 = vmatprep.mubr.f32.mxu0 0.0
    %4312 = vmatmul.mubr.f32.gmra.mxu0 %v4219
    %v4313 = vpop.f32.mrf.mxu0
    %v4314 = vpop.f32.mrf.mxu0
    %4315 = vmatprep.mubr.f32.mxu0 0.0
    %4316 = vmatmul.mubr.f32.gmra.mxu0 %v4222
    %v4317 = vpop.f32.mrf.mxu0
    %v4318 = vpop.f32.mrf.mxu0
    %4319 = vmatprep.mubr.f32.mxu0 0.0
    %4320 = vmatmul.mubr.f32.gmra.mxu0 %v4225
    %v4321 = vpop.f32.mrf.mxu0
    %v4322 = vadd.f32 0.0, %v4321
    %v4323 = vpop.f32.mrf.mxu0
    %4324 = vmatprep.mubr.f32.mxu0 0.0
    %4325 = vmatmul.mubr.f32.gmra.mxu0 %v4228
    %v4326 = vpop.f32.mrf.mxu0
    %v4327 = vpop.f32.mrf.mxu0
    %4328 = vdwg.mxu0
    %v4329 = vadd.f32 %v3899, %v4305
    %v4330 = vadd.f32 %v3903, %v4322
    %v4331 = vlaneseq
    %v4332 = vshrl.u32 %v4331, 7
    %v4333 = vsub.s32 7, %v4332
    %v4334 = vrot.slane %v2293, %v4333
    %v4335 = vadd.f32 %v4329, %v4334
    %v4336 = vadd.f32 %v4330, %v4334
    %v4337 = vld [vmem:[%s6] sm:$0xff]
    %v4338 = vld [vmem:[%s6 + $0x8] sm:$0xff]
    %v4339 = vld [vmem:[%s6 + $0x10] sm:$0xff]
    %v4340 = vld [vmem:[%s6 + $0x18] sm:$0xff]
    %v4341 = vld [vmem:[%s6 + $0x20] sm:$0x7]
    %v4343 = vrot.slane %v4336, 7
    %vm4345 = vcmask 1040384
    %v4346 = vsel %vm4345, %v4335, %v4343
    %vm4347 = vcmask 254976
    %v4348 = vsel %vm4347, %v4346, 0.0
    %4349 = vadd.xlane.f32.xlu0 %v4348
    %v4350 = vpop.xlane.xlu0 %4349
    %v4351 = vmul.f32 %v4350, %v231
    %v4352 = vsub.f32 %v4346, %v4351
    %v4353 = vmul.f32 %v4352, %v4352
    %v4354 = vsel %vm4347, %v4353, 0.0
    %4355 = vadd.xlane.f32.xlu0 %v4354
    %v4356 = vpop.xlane.xlu0 %4355
    %v4357 = vmul.f32 %v4356, %v231
    %v4358 = vadd.f32 %v4357, 1e-12
    %v4359 = vrsqrt.pop %v4358
    %v4360 = vmul.f32 %v4352, %v4359
    %v4361 = vlaneseq
    %v4362 = vshrl.u32 %v4361, 7
    %v4363 = vsub.s32 0, %v4362
    %v4364 = vrot.slane %v4341, %v4363
    %v4365 = vmul.f32 %v4360, %v4364
    %v4366 = vlaneseq
    %v4367 = vshrl.u32 %v4366, 7
    %v4368 = vsub.s32 1, %v4367
    %v4369 = vrot.slane %v4341, %v4368
    %v4370 = vadd.f32 %v4365, %v4369
    %v4371 = vlaneseq
    %v4372 = vshrl.u32 %v4371, 7
    %v4373 = vsub.s32 2, %v4372
    %v4374 = vrot.slane %v4341, %v4373
    %v4376 = vsel %vm206, %v4370, 0
    %4378 = vmatprep.subr.mxu0 0.0
    %4379 = vmatpush1.msra.mxu0 0.0
    %4380 = vmatprep.subr.mxu0 0.0
    %4381 = vmatpush1.msra.mxu0 0.0
    %4382 = vmatprep.subr.mxu0 0.0
    %4383 = vmatpush1.msra.mxu0 0.0
    %4384 = vmatprep.subr.mxu0 0.0
    %4385 = vmatpush1.msra.mxu0 0.0
    %4386 = vmatprep.subr.mxu0 0.0
    %4387 = vmatpush1.msra.mxu0 0.0
    %4388 = vmatprep.subr.mxu0 0.0
    %4389 = vmatpush1.msra.mxu0 0.0
    %4390 = vmatprep.subr.mxu0 0.0
    %4391 = vmatpush1.msra.mxu0 0.0
    %4392 = vmatprep.subr.mxu0 0.0
    %4393 = vmatpush1.msra.mxu0 0.0
    %4394 = vmatprep.subr.mxu0 0.0
    %4395 = vmatpush1.msra.mxu0 0.0
    %4396 = vmatprep.subr.mxu0 0.0
    %4397 = vmatpush1.msra.mxu0 0.0
    %4398 = vmatprep.subr.mxu0 0.0
    %4399 = vmatpush1.msra.mxu0 0.0
    %4400 = vmatprep.subr.mxu0 0.0
    %4401 = vmatpush1.msra.mxu0 0.0
    %4402 = vmatprep.subr.mxu0 0.0
    %4403 = vmatpush1.msra.mxu0 %v4340
    %4404 = vmatprep.subr.mxu0 0.0
    %4405 = vmatpush1.msra.mxu0 %v4339
    %4406 = vmatprep.subr.mxu0 0.0
    %4407 = vmatpush1.msra.mxu0 %v4338
    %4408 = vmatprep.subr.mxu0 0.0
    %4409 = vmatpush1.msra.mxu0 %v4337
    %4410 = vmatprep.subr.mxu0 0.0
    %4411 = vmatpush2.msra.mxu0 0.0
    %4412 = vmatprep.subr.mxu0 0.0
    %4413 = vmatpush2.msra.mxu0 0.0
    %4414 = vmatprep.subr.mxu0 0.0
    %4415 = vmatpush2.msra.mxu0 0.0
    %4416 = vmatprep.subr.mxu0 0.0
    %4417 = vmatpush2.msra.mxu0 0.0
    %4418 = vmatprep.subr.mxu0 0.0
    %4419 = vmatpush2.msra.mxu0 0.0
    %4420 = vmatprep.subr.mxu0 0.0
    %4421 = vmatpush2.msra.mxu0 0.0
    %4422 = vmatprep.subr.mxu0 0.0
    %4423 = vmatpush2.msra.mxu0 0.0
    %4424 = vmatprep.subr.mxu0 0.0
    %4425 = vmatpush2.msra.mxu0 0.0
    %4426 = vmatprep.subr.mxu0 0.0
    %4427 = vmatpush2.msra.mxu0 0.0
    %4428 = vmatprep.subr.mxu0 0.0
    %4429 = vmatpush2.msra.mxu0 0.0
    %4430 = vmatprep.subr.mxu0 0.0
    %4431 = vmatpush2.msra.mxu0 0.0
    %4432 = vmatprep.subr.mxu0 0.0
    %4433 = vmatpush2.msra.mxu0 0.0
    %4434 = vmatprep.subr.mxu0 0.0
    %4435 = vmatpush2.msra.mxu0 0.0
    %4436 = vmatprep.subr.mxu0 0.0
    %4437 = vmatpush2.msra.mxu0 0.0
    %4438 = vmatprep.subr.mxu0 0.0
    %4439 = vmatpush2.msra.mxu0 0.0
    %4440 = vmatprep.subr.mxu0 0.0
    %4441 = vmatpush2.msra.mxu0 0.0
    %4442 = vmatprep.mubr.f32.mxu0 0.0
    %4443 = vmatmul.mubr.f32.gmra.mxu0 %v4376
    %v4444 = vpop.f32.mrf.mxu0
    %v4445 = vadd.f32 %v4374, %v4444
    %v4446 = vpop.f32.mrf.mxu0
    %4447 = vdwg.mxu0
    %4448 = vst [vmem:[#allocation2] sm:$0x3] %v4445
    // Predicated region
    $region30: #{vit_forward.1} parent=1 // pred_check
      _
    $region31: #{vit_forward.1} parent=1 // pred_check_branch
      %4450 = sbr.rel (0) target = $region33
    $region32: #{vit_forward.1} parent=1 // pred_region
      %s4452 = ssub.s32 32, 32
      %4453 = vsyncadd [#allocation3], %s4452
      %s4455 = sshll.u32 [#allocation2], 4
      %s4456 = int_to_ptr.vmem [resolvable:$true] %s4455
      %4458 = dma.vmem_to_hbm [thread:$0]  %s4456, 32, %s7, [#allocation3]
    $region33: #{vit_forward.1} parent=1 // pred_fallthru
      _
    // Predicated region
    $region34: #{vit_forward.1} parent=1 // pred_check
      _
    $region35: #{vit_forward.1} parent=1 // pred_check_branch
      %4460 = sbr.rel (0) target = $region37
    $region36: #{vit_forward.1} parent=1 // pred_region
      %4461 = dma.done [#allocation3], 32
    $region37: #{vit_forward.1} parent=1 // pred_fallthru
      _
    %4462 = vsyncpa [#allocation3], 1

</llo_original>
